<compile_context>
chip_gen: v7x
topology: tpu7x:2x2x1
jax: 0.10.0
libtpu: 0.0.40
codegen_flags: <defaults>
</compile_context>

<pallas_src>
import functools

import jax
import jax.numpy as jnp
from jax.experimental import pallas as pl
from jax.experimental.pallas import tpu as pltpu

COMPUTE_DTYPE = jnp.bfloat16   # MXU operand dtype; accumulation always f32
LN_EPS = 1e-6
# fc1+fc2 (bf16) at or below this size stay fully VMEM-resident in the MLP kernel.
_MLP_RESIDENT_WEIGHT_BYTES = 8 * 1024 * 1024


# ----------------------------------------------------------------------------
# Tile pickers (clamp to small demo shapes; real sizes tile at 512)
# ----------------------------------------------------------------------------
def _row_tile(m, target=512):
    """Largest row tile <= target that divides m (multiple of 8), else full m.

    When m > target this always yields >= 2 row tiles, which keeps the leading
    "parallel" grid axis splittable across v7x's two TensorCores.
    """
    if m <= target:
        return m
    for t in range(target, 7, -8):
        if m % t == 0:
            return t
    return m  # TODO(synk): pad ragged row counts instead of whole-extent fallback.


def _col_tile(n, target=512):
    """Largest lane tile <= target that divides n (multiple of 128), else full n."""
    if n <= target:
        return n
    for t in range(target, 127, -128):
        if n % t == 0:
            return t
    return n  # TODO(synk): pad ragged lane counts instead of whole-extent fallback.


def _layernorm_f32(x, gamma, beta):
    mu = jnp.mean(x, axis=-1, keepdims=True)
    var = jnp.mean(jnp.square(x - mu), axis=-1, keepdims=True)
    return (x - mu) * jax.lax.rsqrt(var + LN_EPS) * gamma + beta


# ----------------------------------------------------------------------------
# Plain tiled matmul (+bias), used for the patch embedding
# ----------------------------------------------------------------------------
def _matmul_bias_kernel(x_ref, w_ref, b_ref, o_ref):
    acc = jnp.dot(x_ref[...].astype(COMPUTE_DTYPE), w_ref[...],
                  preferred_element_type=jnp.float32)
    o_ref[...] = (acc + b_ref[...].astype(jnp.float32)).astype(o_ref.dtype)


def matmul_bias(x, w, b, *, out_dtype=None, tm_target=512, tn_target=512):
    """Tiled x:[M,K] @ w:[K,N] + b. Full-K per step (K <= embedding dim)."""
    M, K = x.shape
    _, N = w.shape
    out_dtype = out_dtype or x.dtype
    tm, tn = _row_tile(M, tm_target), _col_tile(N, tn_target)
    cost = pl.CostEstimate(
        flops=int(2 * M * N * K), transcendentals=0,
        bytes_accessed=int(x.size * x.dtype.itemsize + w.size * w.dtype.itemsize
                           + M * N * jnp.dtype(out_dtype).itemsize))
    return pl.pallas_call(
        _matmul_bias_kernel,
        out_shape=jax.ShapeDtypeStruct((M, N), out_dtype),
        grid=(M // tm, N // tn),
        in_specs=[
            pl.BlockSpec((tm, K), lambda i, j: (i, 0)),
            pl.BlockSpec((K, tn), lambda i, j: (0, j)),
            pl.BlockSpec((1, tn), lambda i, j: (0, j)),
        ],
        out_specs=pl.BlockSpec((tm, tn), lambda i, j: (i, j)),
        compiler_params=pltpu.CompilerParams(
            dimension_semantics=("parallel", "parallel")),
        cost_estimate=cost,
    )(x, w, b.reshape(1, N))


# ----------------------------------------------------------------------------
# Fused LayerNorm -> matmul (+bias)   (LN1 -> QKV projection)
# LN is computed once per row tile and cached in VMEM across column tiles.
# ----------------------------------------------------------------------------
def _ln_matmul_kernel(x_ref, g_ref, b_ref, w_ref, bias_ref, o_ref, xn_scr):
    @pl.when(pl.program_id(1) == 0)
    def _():
        xn = _layernorm_f32(x_ref[...].astype(jnp.float32), g_ref[...], b_ref[...])
        xn_scr[...] = xn.astype(xn_scr.dtype)

    acc = jnp.dot(xn_scr[...], w_ref[...], preferred_element_type=jnp.float32)
    o_ref[...] = (acc + bias_ref[...].astype(jnp.float32)).astype(o_ref.dtype)


def ln_matmul(x, gamma, beta, w, b, *, out_dtype=None,
              tm_target=512, tn_target=512):
    """Fused LayerNorm(x) @ w + b."""
    M, D = x.shape
    _, N = w.shape
    out_dtype = out_dtype or x.dtype
    tm, tn = _row_tile(M, tm_target), _col_tile(N, tn_target)
    cost = pl.CostEstimate(
        flops=int(2 * M * N * D),
        transcendentals=int(M),
        bytes_accessed=int(x.size * 4 + w.size * w.dtype.itemsize
                           + M * N * jnp.dtype(out_dtype).itemsize))
    return pl.pallas_call(
        _ln_matmul_kernel,
        out_shape=jax.ShapeDtypeStruct((M, N), out_dtype),
        grid=(M // tm, N // tn),
        in_specs=[
            pl.BlockSpec((tm, D), lambda i, j: (i, 0)),
            pl.BlockSpec((1, D), lambda i, j: (0, 0)),
            pl.BlockSpec((1, D), lambda i, j: (0, 0)),
            pl.BlockSpec((D, tn), lambda i, j: (0, j)),
            pl.BlockSpec((1, tn), lambda i, j: (0, j)),
        ],
        out_specs=pl.BlockSpec((tm, tn), lambda i, j: (i, j)),
        scratch_shapes=[pltpu.VMEM((tm, D), COMPUTE_DTYPE)],
        # Column axis is "arbitrary": the x block (and cached LN result) is reused
        # across all column tiles of the same row tile.
        compiler_params=pltpu.CompilerParams(
            dimension_semantics=("parallel", "arbitrary")),
        cost_estimate=cost,
    )(x, gamma.reshape(1, D), beta.reshape(1, D), w, b.reshape(1, N))


# ----------------------------------------------------------------------------
# Fused matmul + bias + residual add   (attention output projection)
# ----------------------------------------------------------------------------
def _matmul_bias_residual_kernel(a_ref, w_ref, bias_ref, res_ref, o_ref):
    acc = jnp.dot(a_ref[...].astype(COMPUTE_DTYPE), w_ref[...],
                  preferred_element_type=jnp.float32)
    acc = acc + bias_ref[...].astype(jnp.float32) + res_ref[...].astype(jnp.float32)
    o_ref[...] = acc.astype(o_ref.dtype)


def matmul_bias_residual(a, w, b, res, *, tm_target=512, tn_target=512):
    M, K = a.shape
    _, N = w.shape
    tm, tn = _row_tile(M, tm_target), _col_tile(N, tn_target)
    cost = pl.CostEstimate(
        flops=int(2 * M * N * K), transcendentals=0,
        bytes_accessed=int(a.size * a.dtype.itemsize + w.size * w.dtype.itemsize
                           + 2 * M * N * 4))
    return pl.pallas_call(
        _matmul_bias_residual_kernel,
        out_shape=jax.ShapeDtypeStruct((M, N), res.dtype),
        grid=(M // tm, N // tn),
        in_specs=[
            pl.BlockSpec((tm, K), lambda i, j: (i, 0)),
            pl.BlockSpec((K, tn), lambda i, j: (0, j)),
            pl.BlockSpec((1, tn), lambda i, j: (0, j)),
            pl.BlockSpec((tm, tn), lambda i, j: (i, j)),
        ],
        out_specs=pl.BlockSpec((tm, tn), lambda i, j: (i, j)),
        compiler_params=pltpu.CompilerParams(
            dimension_semantics=("parallel", "parallel")),
        cost_estimate=cost,
    )(a, w, b.reshape(1, N), res)


# ----------------------------------------------------------------------------
# Attention: grid over (batch, 128-lane head group), direct per-head o_ref writes
# ----------------------------------------------------------------------------
def _attention_kernel(q_ref, k_ref, v_ref, o_ref, *, heads_per_group, head_dim,
                      scale):
    # q/k/v refs each hold one 128-lane-aligned head group [T, gw] of the QKV slab.
    # Pre-scale q (T*gw multiplies instead of T*T per head on the score matrix).
    q = (q_ref[...] * scale).astype(COMPUTE_DTYPE)
    k = k_ref[...].astype(COMPUTE_DTYPE)
    v = v_ref[...].astype(COMPUTE_DTYPE)
    for j in range(heads_per_group):
        lo, hi = j * head_dim, (j + 1) * head_dim
        s = jax.lax.dot_general(q[:, lo:hi], k[:, lo:hi],
                                (((1,), (1,)), ((), ())),
                                preferred_element_type=jnp.float32)
        m = jnp.max(s, axis=-1, keepdims=True)
        p = jnp.exp(s - m)
        p = p * pl.reciprocal(jnp.sum(p, axis=-1, keepdims=True), approx=True)
        # Write each head's result straight into its output columns; no concat,
        # at most one [T, head_dim] f32 result live at a time.
        o_ref[:, lo:hi] = jnp.dot(p.astype(COMPUTE_DTYPE), v[:, lo:hi],
                                  preferred_element_type=jnp.float32
                                  ).astype(o_ref.dtype)


def attention(qkv, *, batch, seq, heads, head_dim, out_dtype=COMPUTE_DTYPE):
    """qkv: [B*T, 3*D] lane-dense slab -> attention output [B*T, D]."""
    # TODO(synk): for T >~ 512 (v7x 64 MiB VMEM) switch to a flash-style KV-tiled
    # online-softmax loop instead of whole-sequence score matrices.
    D = heads * head_dim
    if head_dim % 128 == 0:
        gw = head_dim                       # one head per group, already aligned
    elif 128 % head_dim == 0 and D % 128 == 0:
        gw = 128                            # pack heads into 128-lane groups
    else:
        gw = head_dim                       # TODO(synk): pad head_dim to 128 lanes.
    hg = gw // head_dim
    n_groups = D // gw
    qkv3 = qkv.reshape(batch, seq, 3 * D)   # free metadata reshape
    blk = (None, seq, gw)
    cost = pl.CostEstimate(
        flops=int(4 * batch * heads * seq * seq * head_dim),
        transcendentals=int(batch * heads * seq * seq),
        bytes_accessed=int(qkv.size * qkv.dtype.itemsize
                           + batch * seq * D * jnp.dtype(out_dtype).itemsize))
    out = pl.pallas_call(
        functools.partial(_attention_kernel, heads_per_group=hg,
                          head_dim=head_dim, scale=1.0 / (head_dim ** 0.5)),
        out_shape=jax.ShapeDtypeStruct((batch, seq, D), out_dtype),
        grid=(batch, n_groups),
        # The same slab is passed three times with different column windows so every
        # q/k/v block starts on a 128-lane boundary (no HBM transpose needed).
        in_specs=[pl.BlockSpec(blk, lambda b, g: (b, 0, g)),
                  pl.BlockSpec(blk, lambda b, g: (b, 0, n_groups + g)),
                  pl.BlockSpec(blk, lambda b, g: (b, 0, 2 * n_groups + g))],
        out_specs=pl.BlockSpec(blk, lambda b, g: (b, 0, g)),
        compiler_params=pltpu.CompilerParams(
            dimension_semantics=("parallel", "parallel")),
        cost_estimate=cost,
    )(qkv3, qkv3, qkv3)
    return out.reshape(batch * seq, D)


# ----------------------------------------------------------------------------
# MLP block: LN2 -> fc1 -> GELU -> fc2 + residual (optionally fused output LN)
# ----------------------------------------------------------------------------
def _mlp_resident_kernel(*refs, with_norm):
    if with_norm:
        (x_ref, g_ref, b_ref, w1_ref, b1_ref, w2_ref, b2_ref,
         ng_ref, nb_ref, o_ref, n_ref) = refs
    else:
        (x_ref, g_ref, b_ref, w1_ref, b1_ref, w2_ref, b2_ref, o_ref) = refs
    xf = x_ref[...].astype(jnp.float32)
    xn = _layernorm_f32(xf, g_ref[...], b_ref[...])
    h = jnp.dot(xn.astype(COMPUTE_DTYPE), w1_ref[...],
                preferred_element_type=jnp.float32)
    # TODO(synk): PyTorch nn.GELU default is exact erf; tanh approximation used here.
    h = jax.nn.gelu(h + b1_ref[...].astype(jnp.float32), approximate=True)
    out = jnp.dot(h.astype(COMPUTE_DTYPE), w2_ref[...],
                  preferred_element_type=jnp.float32)
    out = out + b2_ref[...].astype(jnp.float32) + xf
    o_ref[...] = out.astype(o_ref.dtype)
    if with_norm:
        # Fused final (output) LayerNorm for intermediate-layer extraction:
        # emitted while the residual tile is still in VMEM -> no extra HBM pass.
        n_ref[...] = _layernorm_f32(out, ng_ref[...], nb_ref[...]).astype(n_ref.dtype)


def _mlp_block_resident(x, gamma, beta, w1, b1, w2, b2, *, final_norm, tm):
    M, D = x.shape
    Hdim = w1.shape[1]
    with_norm = final_norm is not None
    row_spec = pl.BlockSpec((tm, D), lambda i: (i, 0))

    def rep(shape):
        return pl.BlockSpec(shape, lambda i: (0, 0))

    in_specs = [row_spec, rep((1, D)), rep((1, D)), rep((D, Hdim)), rep((1, Hdim)),
                rep((Hdim, D)), rep((1, D))]
    inputs = [x, gamma.reshape(1, D), beta.reshape(1, D), w1, b1.reshape(1, Hdim),
              w2, b2.reshape(1, D)]
    out_shape = jax.ShapeDtypeStruct((M, D), x.dtype)
    out_specs = row_spec
    if with_norm:
        in_specs += [rep((1, D)), rep((1, D))]
        inputs += [final_norm[0].reshape(1, D), final_norm[1].reshape(1, D)]
        out_shape = (out_shape, jax.ShapeDtypeStruct((M, D), x.dtype))
        out_specs = (row_spec, row_spec)
    cost = pl.CostEstimate(
        flops=int(4 * M * Hdim * D),
        transcendentals=int(M * Hdim),
        bytes_accessed=int(2 * M * D * 4 + (w1.size + w2.size) * w1.dtype.itemsize))
    return pl.pallas_call(
        functools.partial(_mlp_resident_kernel, with_norm=with_norm),
        out_shape=out_shape,
        grid=(M // tm,),
        in_specs=in_specs,
        out_specs=out_specs,
        compiler_params=pltpu.CompilerParams(dimension_semantics=("parallel",)),
        cost_estimate=cost,
        input_output_aliases={0: 0},   # residual input buffer reused for the output
    )(*inputs)


def _mlp_block_tiled_kernel(x_ref, g_ref, b_ref, w1_ref, b1_ref, w2_ref, b2_ref,
                            o_ref, xn_scr, acc_scr):
    k = pl.program_id(1)

    @pl.when(k == 0)
    def _():
        xn = _layernorm_f32(x_ref[...].astype(jnp.float32), g_ref[...], b_ref[...])
        xn_scr[...] = xn.astype(xn_scr.dtype)
        acc_scr[...] = jnp.zeros_like(acc_scr)

    h = jnp.dot(xn_scr[...], w1_ref[...], preferred_element_type=jnp.float32)
    h = jax.nn.gelu(h + b1_ref[...].astype(jnp.float32), approximate=True)
    acc_scr[...] += jnp.dot(h.astype(COMPUTE_DTYPE), w2_ref[...],
                            preferred_element_type=jnp.float32)

    @pl.when(k == pl.num_programs(1) - 1)
    def _():
        out = acc_scr[...] + b2_ref[...].astype(jnp.float32) \
            + x_ref[...].astype(jnp.float32)
        o_ref[...] = out.astype(o_ref.dtype)


def _mlp_block_tiled(x, gamma, beta, w1, b1, w2, b2, *, tm, th):
    M, D = x.shape
    Hdim = w1.shape[1]
    cost = pl.CostEstimate(
        flops=int(4 * M * Hdim * D),
        transcendentals=int(M * Hdim),
        bytes_accessed=int(2 * M * D * 4
                           + (M // tm) * (w1.size + w2.size) * w1.dtype.itemsize))
    return pl.pallas_call(
        _mlp_block_tiled_kernel,
        out_shape=jax.ShapeDtypeStruct((M, D), x.dtype),
        grid=(M // tm, Hdim // th),
        in_specs=[
            pl.BlockSpec((tm, D), lambda i, k: (i, 0)),   # residual stream
            pl.BlockSpec((1, D), lambda i, k: (0, 0)),    # ln gamma
            pl.BlockSpec((1, D), lambda i, k: (0, 0)),    # ln beta
            pl.BlockSpec((D, th), lambda i, k: (0, k)),   # fc1 w
            pl.BlockSpec((1, th), lambda i, k: (0, k)),   # fc1 b
            pl.BlockSpec((th, D), lambda i, k: (k, 0)),   # fc2 w
            pl.BlockSpec((1, D), lambda i, k: (0, 0)),    # fc2 b
        ],
        out_specs=pl.BlockSpec((tm, D), lambda i, k: (i, 0)),
        scratch_shapes=[pltpu.VMEM((tm, D), COMPUTE_DTYPE),
                        pltpu.VMEM((tm, D), jnp.float32)],
        compiler_params=pltpu.CompilerParams(
            dimension_semantics=("parallel", "arbitrary")),
        cost_estimate=cost,
        input_output_aliases={0: 0},
    )(x, gamma.reshape(1, D), beta.reshape(1, D), w1, b1.reshape(1, Hdim),
      w2, b2.reshape(1, D))


def mlp_block(x, gamma, beta, w1, b1, w2, b2, *, final_norm=None,
              tm_target=512, th_target=512):
    """Fused LN2 -> fc1 -> GELU -> fc2 + residual (+ optional fused output LN)."""
    M, D = x.shape
    Hdim = w1.shape[1]
    tm = _row_tile(M, tm_target)
    w_bytes = (w1.size + w2.size) * w1.dtype.itemsize
    if w_bytes <= _MLP_RESIDENT_WEIGHT_BYTES:
        # Weights stay VMEM-resident: DMA'd once, no hidden-dim accumulator loop.
        return _mlp_block_resident(x, gamma, beta, w1, b1, w2, b2,
                                   final_norm=final_norm, tm=tm)
    # Large-model fallback: hidden dim tiled + f32 accumulator.
    out = _mlp_block_tiled(x, gamma, beta, w1, b1, w2, b2,
                           tm=tm, th=_col_tile(Hdim, th_target))
    if final_norm is None:
        return out
    return out, layernorm(out, final_norm[0], final_norm[1])


# ----------------------------------------------------------------------------
# Standalone LayerNorm (only used by the large-model MLP fallback path)
# ----------------------------------------------------------------------------
def _layernorm_kernel(x_ref, g_ref, b_ref, o_ref):
    y = _layernorm_f32(x_ref[...].astype(jnp.float32), g_ref[...], b_ref[...])
    o_ref[...] = y.astype(o_ref.dtype)


def layernorm(x, gamma, beta, *, tm_target=512):
    M, D = x.shape
    tm = _row_tile(M, tm_target)
    return pl.pallas_call(
        _layernorm_kernel,
        out_shape=jax.ShapeDtypeStruct((M, D), x.dtype),
        grid=(M // tm,),
        in_specs=[pl.BlockSpec((tm, D), lambda i: (i, 0)),
                  pl.BlockSpec((1, D), lambda i: (0, 0)),
                  pl.BlockSpec((1, D), lambda i: (0, 0))],
        out_specs=pl.BlockSpec((tm, D), lambda i: (i, 0)),
        compiler_params=pltpu.CompilerParams(dimension_semantics=("parallel",)),
    )(x, gamma.reshape(1, D), beta.reshape(1, D))


# ----------------------------------------------------------------------------
# Synthetic ViT backbone (deterministic params) built on the kernels above
# ----------------------------------------------------------------------------
def make_params(key, *, C, P, D, depth, heads, mlp_dim, T):
    def nrm(k, shape, scale=0.02, dtype=COMPUTE_DTYPE):
        return (scale * jax.random.normal(k, shape, dtype=jnp.float32)).astype(dtype)

    keys = iter(jax.random.split(key, 8 + depth * 8))
    params = {
        "patch_w": nrm(next(keys), (C * P * P, D)),          # bf16 weights
        "patch_b": jnp.zeros((D,), jnp.float32),
        "cls_token": nrm(next(keys), (1, 1, D), dtype=jnp.float32),
        "pos_embed": nrm(next(keys), (1, T, D), dtype=jnp.float32),
        "norm_g": jnp.ones((D,), jnp.float32),
        "norm_b": jnp.zeros((D,), jnp.float32),
        "blocks": [],
    }
    for _ in range(depth):
        blk = {
            "ln1_g": jnp.ones((D,), jnp.float32),
            "ln1_b": jnp.zeros((D,), jnp.float32),
            "qkv_w": nrm(next(keys), (D, 3 * D)),
            "qkv_b": jnp.zeros((3 * D,), jnp.float32),
            "proj_w": nrm(next(keys), (D, D)),
            "proj_b": jnp.zeros((D,), jnp.float32),
            "ln2_g": jnp.ones((D,), jnp.float32),
            "ln2_b": jnp.zeros((D,), jnp.float32),
            "fc1_w": nrm(next(keys), (D, mlp_dim)),
            "fc1_b": jnp.zeros((mlp_dim,), jnp.float32),
            "fc2_w": nrm(next(keys), (mlp_dim, D)),
            "fc2_b": jnp.zeros((D,), jnp.float32),
        }
        params["blocks"].append(blk)
    return params


def patch_embed(x, w, b, P):
    # x: [B, C, H, W] (NCHW) -> patches [B*Np, C*P*P] -> tiled linear -> [B, Np, D]
    B, C, H, W = x.shape
    gh, gw = H // P, W // P
    patches = (
        x.reshape(B, C, gh, P, gw, P)
        .transpose(0, 2, 4, 1, 3, 5)                 # [B, gh, gw, C, P, P]
        .reshape(B * gh * gw, C * P * P)
    )
    out = matmul_bias(patches, w, b, out_dtype=jnp.float32)
    return out.reshape(B, gh * gw, w.shape[1])


def block_forward(x2, p, *, batch, seq, heads, final_norm=None):
    """One transformer block on the flat [B*T, D] f32 residual stream.

    Returns x_out, or (x_out, final_norm(x_out)) when final_norm is given.
    """
    M, D = x2.shape
    hd = D // heads
    # LN1 -> QKV, kept as a lane-dense [B*T, 3D] bf16 slab (no HBM transposes).
    qkv = ln_matmul(x2, p["ln1_g"], p["ln1_b"], p["qkv_w"], p["qkv_b"],
                    out_dtype=COMPUTE_DTYPE)
    a = attention(qkv, batch=batch, seq=seq, heads=heads, head_dim=hd)
    # attention-out projection fused with the residual add.
    x2 = matmul_bias_residual(a, p["proj_w"], p["proj_b"], x2)
    # LN2 -> fc1 -> GELU -> fc2 fused with the residual add (+ optional output LN).
    return mlp_block(x2, p["ln2_g"], p["ln2_b"], p["fc1_w"], p["fc1_b"],
                     p["fc2_w"], p["fc2_b"], final_norm=final_norm)


def get_intermediate_layers(x, params, *, P, heads, n=4):
    """Mirrors DINOv2 get_intermediate_layers(x, n, return_class_token=True)."""
    B = x.shape[0]
    D = params["patch_w"].shape[1]
    tokens = patch_embed(x, params["patch_w"], params["patch_b"], P)   # [B, Np, D]
    cls = jnp.broadcast_to(params["cls_token"], (B, 1, D))
    tokens = jnp.concatenate([cls, tokens], axis=1) + params["pos_embed"]
    B_, T, _ = tokens.shape
    h = tokens.reshape(B_ * T, D)                                       # flat stream

    depth = len(params["blocks"])
    take = set(range(depth - n, depth))
    outputs = []
    for i, blk in enumerate(params["blocks"]):
        fn = (params["norm_g"], params["norm_b"]) if i in take else None
        res = block_forward(h, blk, batch=B_, seq=T, heads=heads, final_norm=fn)
        if fn is not None:
            h, normed = res                    # output LN fused into the MLP kernel
            outputs.append(normed.reshape(B_, T, D))
        else:
            h = res
    return tuple((o[:, 1:], o[:, 0]) for o in outputs)


def encoder_forward(x, params, *, P, heads, use_clstoken=True, get_joints=False):
    """Pallas/JAX equivalent of Encoder.forward."""
    features = get_intermediate_layers(x, params, P=P, heads=heads, n=4)
    flat_features, joints, dims = [], [], []
    for patch_tokens, cls_token in features:
        if use_clstoken:
            t = cls_token.reshape(-1)               # torch.flatten(cls_token)
            flat_features.append(t)
            joints.append(t.shape[0])
            dims.append(list(cls_token.shape))
        t = patch_tokens.reshape(-1)                # torch.flatten(x)
        flat_features.append(t)
        joints.append(t.shape[0])
        dims.append(list(patch_tokens.shape))
    grouped_features = jnp.concatenate(flat_features)
    if get_joints:
        return grouped_features, joints, dims
    return grouped_features


# ----------------------------------------------------------------------------
if __name__ == "__main__":
    # Small deterministic config: B=2, C=3, 32x32 image, patch 8 -> 16 patches,
    # embed dim 256, 4 blocks, 4 heads (hd=64 -> head pairs = 128 lanes),
    # MLP hidden 1024, T = 1 + 16 = 17.
    B, C, H, W = 2, 3, 32, 32
    P, D, DEPTH, HEADS, MLP = 8, 256, 4, 4, 1024
    T = (H // P) * (W // P) + 1

    root = jax.random.PRNGKey(0)
    kx, kp = jax.random.split(root)
    x = jax.random.normal(kx, (B, C, H, W), dtype=jnp.float32)   # NCHW input
    params = make_params(kp, C=C, P=P, D=D, depth=DEPTH, heads=HEADS,
                         mlp_dim=MLP, T=T)

    fwd = jax.jit(functools.partial(encoder_forward, P=P, heads=HEADS,
                                    use_clstoken=True, get_joints=True))
    out, joints, dims = fwd(x, params)
    out = jax.block_until_ready(out)

    expected_len = 4 * (B * D + B * (T - 1) * D)
    assert out.shape == (expected_len,), (out.shape, expected_len)
    assert int(sum(int(j) for j in joints)) == expected_len
    assert bool(jnp.all(jnp.isfinite(out)))
    print("KERNEL_OK")
</pallas_src>

<mosaic_0001>
module attributes {stable_mosaic.version = 11 : i64} {
  func.func @_matmul_bias_kernel(%arg0: i32, %arg1: i32, %arg2: memref<32x192xf32, #tpu.memory_space<vmem>>, %arg3: memref<192x256xbf16, #tpu.memory_space<vmem>>, %arg4: memref<1x256xf32, #tpu.memory_space<vmem>>, %arg5: memref<32x256xf32, #tpu.memory_space<vmem>>) attributes {dimension_semantics = [#tpu.dimension_semantics<parallel>, #tpu.dimension_semantics<parallel>], iteration_bounds = array<i64: 1, 1>, scalar_prefetch = 0 : i64, scratch_operands = 0 : i64, tpu.core_type = #tpu.core_type<tc>, window_params = [{transform_indices = @transform_0, window_bounds = array<i64: 32, 192>}, {transform_indices = @transform_1, window_bounds = array<i64: 192, 256>}, {transform_indices = @transform_2, window_bounds = array<i64: 1, 256>}, {transform_indices = @transform_3, window_bounds = array<i64: 32, 256>}]} {
    %c0 = arith.constant 0 : index
    %c0_0 = arith.constant 0 : index
    %0 = vector.load %arg2[%c0, %c0_0] : memref<32x192xf32, #tpu.memory_space<vmem>>, vector<32x192xf32>
    %1 = arith.truncf %0 : vector<32x192xf32> to vector<32x192xbf16>
    %c0_1 = arith.constant 0 : index
    %c0_2 = arith.constant 0 : index
    %2 = vector.load %arg3[%c0_1, %c0_2] : memref<192x256xbf16, #tpu.memory_space<vmem>>, vector<192x256xbf16>
    %cst = arith.constant dense<0.000000e+00> : vector<32x256xf32>
    %3 = tpu.matmul %1, %2, %cst {dimension_numbers = #tpu.dot_dimension_numbers<[1], [0], [0], [1], [0, 0, 1, 1], [], []>} : vector<32x192xbf16>, vector<192x256xbf16>, vector<32x256xf32> -> vector<32x256xf32>
    %c0_3 = arith.constant 0 : index
    %c0_4 = arith.constant 0 : index
    %4 = vector.load %arg4[%c0_3, %c0_4] : memref<1x256xf32, #tpu.memory_space<vmem>>, vector<1x256xf32>
    %5 = vector.broadcast %4 : vector<1x256xf32> to vector<32x256xf32>
    %6 = arith.addf %3, %5 : vector<32x256xf32>
    %c0_5 = arith.constant 0 : index
    %c0_6 = arith.constant 0 : index
    %7 = vector.load %arg5[%c0_5, %c0_6] : memref<32x256xf32, #tpu.memory_space<vmem>>, vector<32x256xf32>
    tpu.vector_store %arg5[%c0_5, %c0_6], %6 {strides = array<i32>} : memref<32x256xf32, #tpu.memory_space<vmem>>, vector<32x256xf32>,
    return
  }
  func.func @transform_0(%arg0: i32, %arg1: i32) -> (i32, i32) {
    %c0_i32 = arith.constant 0 : i32
    %c0_i32_0 = arith.constant 0 : i32
    return %arg0, %c0_i32 : i32, i32
  }
  func.func @transform_1(%arg0: i32, %arg1: i32) -> (i32, i32) {
    %c0_i32 = arith.constant 0 : i32
    %c0_i32_0 = arith.constant 0 : i32
    return %c0_i32, %arg1 : i32, i32
  }
  func.func @transform_2(%arg0: i32, %arg1: i32) -> (i32, i32) {
    %c0_i32 = arith.constant 0 : i32
    %c0_i32_0 = arith.constant 0 : i32
    return %c0_i32, %arg1 : i32, i32
  }
  func.func @transform_3(%arg0: i32, %arg1: i32) -> (i32, i32) {
    %c0_i32 = arith.constant 0 : i32
    return %arg0, %arg1 : i32, i32
  }
}

module attributes {stable_mosaic.version = 11 : i64} {
  func.func @_ln_matmul_kernel(%arg0: i32, %arg1: i32, %arg2: memref<34x256xf32, #tpu.memory_space<vmem>>, %arg3: memref<1x256xf32, #tpu.memory_space<vmem>>, %arg4: memref<1x256xf32, #tpu.memory_space<vmem>>, %arg5: memref<256x384xbf16, #tpu.memory_space<vmem>>, %arg6: memref<1x384xf32, #tpu.memory_space<vmem>>, %arg7: memref<34x384xbf16, #tpu.memory_space<vmem>>, %arg8: memref<34x256xbf16, #tpu.memory_space<vmem>>) attributes {dimension_semantics = [#tpu.dimension_semantics<parallel>, #tpu.dimension_semantics<arbitrary>], iteration_bounds = array<i64: 1, 2>, scalar_prefetch = 0 : i64, scratch_operands = 1 : i64, tpu.core_type = #tpu.core_type<tc>, window_params = [{transform_indices = @transform_0, window_bounds = array<i64: 34, 256>}, {pipeline_mode = #tpu.pipeline_mode<synchronous>, transform_indices = @transform_1, window_bounds = array<i64: 1, 256>}, {pipeline_mode = #tpu.pipeline_mode<synchronous>, transform_indices = @transform_2, window_bounds = array<i64: 1, 256>}, {transform_indices = @transform_3, window_bounds = array<i64: 256, 384>}, {transform_indices = @transform_4, window_bounds = array<i64: 1, 384>}, {transform_indices = @transform_5, window_bounds = array<i64: 34, 384>}]} {
    %c0_i32 = arith.constant 0 : i32
    %0 = arith.cmpi eq, %arg1, %c0_i32 : i32
    %1 = arith.extui %0 : i1 to i32
    %c0_i32_0 = arith.constant 0 : i32
    %2 = arith.cmpi ne, %1, %c0_i32_0 : i32
    scf.if %2 {
      %c0_8 = arith.constant 0 : index
      %c0_9 = arith.constant 0 : index
      %11 = vector.load %arg2[%c0_8, %c0_9] : memref<34x256xf32, #tpu.memory_space<vmem>>, vector<34x256xf32>
      %c0_10 = arith.constant 0 : index
      %c0_11 = arith.constant 0 : index
      %12 = vector.load %arg3[%c0_10, %c0_11] : memref<1x256xf32, #tpu.memory_space<vmem>>, vector<1x256xf32>
      %c0_12 = arith.constant 0 : index
      %c0_13 = arith.constant 0 : index
      %13 = vector.load %arg4[%c0_12, %c0_13] : memref<1x256xf32, #tpu.memory_space<vmem>>, vector<1x256xf32>
      %cst_14 = arith.constant dense<0.000000e+00> : vector<34xf32>
      %14 = vector.multi_reduction <add>, %11, %cst_14 [1] : vector<34x256xf32> to vector<34xf32>
      %15 = vector.shape_cast %14 : vector<34xf32> to vector<34x1xf32>
      %cst_15 = arith.constant 2.560000e+02 : f32
      %16 = vector.broadcast %cst_15 : f32 to vector<34x1xf32>
      %17 = arith.divf %15, %16 : vector<34x1xf32>
      %18 = vector.broadcast %17 : vector<34x1xf32> to vector<34x256xf32>
      %19 = arith.subf %11, %18 : vector<34x256xf32>
      %20 = arith.mulf %19, %19 : vector<34x256xf32>
      %cst_16 = arith.constant dense<0.000000e+00> : vector<34xf32>
      %21 = vector.multi_reduction <add>, %20, %cst_16 [1] : vector<34x256xf32> to vector<34xf32>
      %22 = vector.shape_cast %21 : vector<34xf32> to vector<34x1xf32>
      %cst_17 = arith.constant 2.560000e+02 : f32
      %23 = vector.broadcast %cst_17 : f32 to vector<34x1xf32>
      %24 = arith.divf %22, %23 : vector<34x1xf32>
      %25 = vector.broadcast %17 : vector<34x1xf32> to vector<34x256xf32>
      %26 = arith.subf %11, %25 : vector<34x256xf32>
      %cst_18 = arith.constant 9.99999997E-7 : f32
      %27 = vector.broadcast %cst_18 : f32 to vector<34x1xf32>
      %28 = arith.addf %24, %27 : vector<34x1xf32>
      %29 = math.rsqrt %28 : vector<34x1xf32>
      %30 = vector.broadcast %29 : vector<34x1xf32> to vector<34x256xf32>
      %31 = arith.mulf %26, %30 : vector<34x256xf32>
      %32 = vector.broadcast %12 : vector<1x256xf32> to vector<34x256xf32>
      %33 = arith.mulf %31, %32 : vector<34x256xf32>
      %34 = vector.broadcast %13 : vector<1x256xf32> to vector<34x256xf32>
      %35 = arith.addf %33, %34 : vector<34x256xf32>
      %36 = arith.truncf %35 : vector<34x256xf32> to vector<34x256xbf16>
      %c0_19 = arith.constant 0 : index
      %c0_20 = arith.constant 0 : index
      %37 = vector.load %arg8[%c0_19, %c0_20] : memref<34x256xbf16, #tpu.memory_space<vmem>>, vector<34x256xbf16>
      tpu.vector_store %arg8[%c0_19, %c0_20], %36 {strides = array<i32>} : memref<34x256xbf16, #tpu.memory_space<vmem>>, vector<34x256xbf16>,
    } else {
    }
    %c0 = arith.constant 0 : index
    %c0_1 = arith.constant 0 : index
    %3 = vector.load %arg8[%c0, %c0_1] : memref<34x256xbf16, #tpu.memory_space<vmem>>, vector<34x256xbf16>
    %c0_2 = arith.constant 0 : index
    %c0_3 = arith.constant 0 : index
    %4 = vector.load %arg5[%c0_2, %c0_3] : memref<256x384xbf16, #tpu.memory_space<vmem>>, vector<256x384xbf16>
    %cst = arith.constant dense<0.000000e+00> : vector<34x384xf32>
    %5 = tpu.matmul %3, %4, %cst {dimension_numbers = #tpu.dot_dimension_numbers<[1], [0], [0], [1], [0, 0, 1, 1], [], []>} : vector<34x256xbf16>, vector<256x384xbf16>, vector<34x384xf32> -> vector<34x384xf32>
    %c0_4 = arith.constant 0 : index
    %c0_5 = arith.constant 0 : index
    %6 = vector.load %arg6[%c0_4, %c0_5] : memref<1x384xf32, #tpu.memory_space<vmem>>, vector<1x384xf32>
    %7 = vector.broadcast %6 : vector<1x384xf32> to vector<34x384xf32>
    %8 = arith.addf %5, %7 : vector<34x384xf32>
    %9 = arith.truncf %8 : vector<34x384xf32> to vector<34x384xbf16>
    %c0_6 = arith.constant 0 : index
    %c0_7 = arith.constant 0 : index
    %10 = vector.load %arg7[%c0_6, %c0_7] : memref<34x384xbf16, #tpu.memory_space<vmem>>, vector<34x384xbf16>
    tpu.vector_store %arg7[%c0_6, %c0_7], %9 {strides = array<i32>} : memref<34x384xbf16, #tpu.memory_space<vmem>>, vector<34x384xbf16>,
    return
  }
  func.func @transform_0(%arg0: i32, %arg1: i32) -> (i32, i32) {
    %c0_i32 = arith.constant 0 : i32
    %c0_i32_0 = arith.constant 0 : i32
    return %arg0, %c0_i32 : i32, i32
  }
  func.func @transform_1(%arg0: i32, %arg1: i32) -> (i32, i32) {
    %c0_i32 = arith.constant 0 : i32
    %c0_i32_0 = arith.constant 0 : i32
    %c0_i32_1 = arith.constant 0 : i32
    return %c0_i32, %c0_i32_0 : i32, i32
  }
  func.func @transform_2(%arg0: i32, %arg1: i32) -> (i32, i32) {
    %c0_i32 = arith.constant 0 : i32
    %c0_i32_0 = arith.constant 0 : i32
    %c0_i32_1 = arith.constant 0 : i32
    return %c0_i32, %c0_i32_0 : i32, i32
  }
  func.func @transform_3(%arg0: i32, %arg1: i32) -> (i32, i32) {
    %c0_i32 = arith.constant 0 : i32
    %c0_i32_0 = arith.constant 0 : i32
    return %c0_i32, %arg1 : i32, i32
  }
  func.func @transform_4(%arg0: i32, %arg1: i32) -> (i32, i32) {
    %c0_i32 = arith.constant 0 : i32
    %c0_i32_0 = arith.constant 0 : i32
    return %c0_i32, %arg1 : i32, i32
  }
  func.func @transform_5(%arg0: i32, %arg1: i32) -> (i32, i32) {
    %c0_i32 = arith.constant 0 : i32
    return %arg0, %arg1 : i32, i32
  }
}

module attributes {stable_mosaic.version = 11 : i64} {
  func.func @_attention_kernel(%arg0: i32, %arg1: i32, %arg2: memref<1x17x128xbf16, #tpu.memory_space<vmem>>, %arg3: memref<1x17x128xbf16, #tpu.memory_space<vmem>>, %arg4: memref<1x17x128xbf16, #tpu.memory_space<vmem>>, %arg5: memref<1x17x128xbf16, #tpu.memory_space<vmem>>) attributes {dimension_semantics = [#tpu.dimension_semantics<parallel>, #tpu.dimension_semantics<parallel>], iteration_bounds = array<i64: 2, 2>, scalar_prefetch = 0 : i64, scratch_operands = 0 : i64, tpu.core_type = #tpu.core_type<tc>, window_params = [{transform_indices = @transform_0, window_bounds = array<i64: 1, 17, 128>}, {transform_indices = @transform_1, window_bounds = array<i64: 1, 17, 128>}, {transform_indices = @transform_2, window_bounds = array<i64: 1, 17, 128>}, {transform_indices = @transform_3, window_bounds = array<i64: 1, 17, 128>}]} {
    %c0 = arith.constant 0 : index
    %c0_0 = arith.constant 0 : index
    %c0_1 = arith.constant 0 : index
    %0 = vector.load %arg2[%c0, %c0_0, %c0_1] : memref<1x17x128xbf16, #tpu.memory_space<vmem>>, vector<1x17x128xbf16>
    %1 = vector.shape_cast %0 : vector<1x17x128xbf16> to vector<17x128xbf16>
    %cst = arith.constant 1.250000e-01 : bf16
    %2 = vector.broadcast %cst : bf16 to vector<17x128xbf16>
    %3 = arith.mulf %1, %2 : vector<17x128xbf16>
    %c0_2 = arith.constant 0 : index
    %c0_3 = arith.constant 0 : index
    %c0_4 = arith.constant 0 : index
    %4 = vector.load %arg3[%c0_2, %c0_3, %c0_4] : memref<1x17x128xbf16, #tpu.memory_space<vmem>>, vector<1x17x128xbf16>
    %5 = vector.shape_cast %4 : vector<1x17x128xbf16> to vector<17x128xbf16>
    %c0_5 = arith.constant 0 : index
    %c0_6 = arith.constant 0 : index
    %c0_7 = arith.constant 0 : index
    %6 = vector.load %arg4[%c0_5, %c0_6, %c0_7] : memref<1x17x128xbf16, #tpu.memory_space<vmem>>, vector<1x17x128xbf16>
    %7 = vector.shape_cast %6 : vector<1x17x128xbf16> to vector<17x128xbf16>
    %8 = vector.extract_strided_slice %3 {offsets = [0, 0], sizes = [17, 64], strides = [1, 1]} : vector<17x128xbf16> to vector<17x64xbf16>
    %9 = vector.extract_strided_slice %5 {offsets = [0, 0], sizes = [17, 64], strides = [1, 1]} : vector<17x128xbf16> to vector<17x64xbf16>
    %cst_8 = arith.constant dense<0.000000e+00> : vector<17x17xf32>
    %10 = tpu.matmul %8, %9, %cst_8 {dimension_numbers = #tpu.dot_dimension_numbers<[1], [1], [0], [0], [0, 0, 1, 0], [], []>} : vector<17x64xbf16>, vector<17x64xbf16>, vector<17x17xf32> -> vector<17x17xf32>
    %cst_9 = arith.constant dense<0xFF800000> : vector<17xf32>
    %11 = vector.multi_reduction <maximumf>, %10, %cst_9 [1] : vector<17x17xf32> to vector<17xf32>
    %12 = vector.shape_cast %11 : vector<17xf32> to vector<17x1xf32>
    %13 = vector.broadcast %12 : vector<17x1xf32> to vector<17x17xf32>
    %14 = arith.subf %10, %13 : vector<17x17xf32>
    %15 = math.exp %14 : vector<17x17xf32>
    %cst_10 = arith.constant dense<0.000000e+00> : vector<17xf32>
    %16 = vector.multi_reduction <add>, %15, %cst_10 [1] : vector<17x17xf32> to vector<17xf32>
    %17 = vector.shape_cast %16 : vector<17xf32> to vector<17x1xf32>
    %18 = tpu.reciprocal %17 {approx = true} : vector<17x1xf32> -> vector<17x1xf32>
    %19 = vector.broadcast %18 : vector<17x1xf32> to vector<17x17xf32>
    %20 = arith.mulf %15, %19 : vector<17x17xf32>
    %21 = arith.truncf %20 : vector<17x17xf32> to vector<17x17xbf16>
    %22 = vector.extract_strided_slice %7 {offsets = [0, 0], sizes = [17, 64], strides = [1, 1]} : vector<17x128xbf16> to vector<17x64xbf16>
    %cst_11 = arith.constant dense<0.000000e+00> : vector<17x64xf32>
    %23 = tpu.matmul %21, %22, %cst_11 {dimension_numbers = #tpu.dot_dimension_numbers<[1], [0], [0], [1], [0, 0, 1, 1], [], []>} : vector<17x17xbf16>, vector<17x64xbf16>, vector<17x64xf32> -> vector<17x64xf32>
    %24 = arith.truncf %23 : vector<17x64xf32> to vector<17x64xbf16>
    %c0_12 = arith.constant 0 : index
    %c0_13 = arith.constant 0 : index
    %c0_14 = arith.constant 0 : index
    %25 = vector.load %arg5[%c0_12, %c0_13, %c0_14] : memref<1x17x128xbf16, #tpu.memory_space<vmem>>, vector<1x17x64xbf16>
    %26 = vector.shape_cast %25 : vector<1x17x64xbf16> to vector<17x64xbf16>
    %27 = vector.shape_cast %24 : vector<17x64xbf16> to vector<1x17x64xbf16>
    tpu.vector_store %arg5[%c0_12, %c0_13, %c0_14], %27 {strides = array<i32>} : memref<1x17x128xbf16, #tpu.memory_space<vmem>>, vector<1x17x64xbf16>,
    %28 = vector.extract_strided_slice %3 {offsets = [0, 64], sizes = [17, 64], strides = [1, 1]} : vector<17x128xbf16> to vector<17x64xbf16>
    %29 = vector.extract_strided_slice %5 {offsets = [0, 64], sizes = [17, 64], strides = [1, 1]} : vector<17x128xbf16> to vector<17x64xbf16>
    %cst_15 = arith.constant dense<0.000000e+00> : vector<17x17xf32>
    %30 = tpu.matmul %28, %29, %cst_15 {dimension_numbers = #tpu.dot_dimension_numbers<[1], [1], [0], [0], [0, 0, 1, 0], [], []>} : vector<17x64xbf16>, vector<17x64xbf16>, vector<17x17xf32> -> vector<17x17xf32>
    %cst_16 = arith.constant dense<0xFF800000> : vector<17xf32>
    %31 = vector.multi_reduction <maximumf>, %30, %cst_16 [1] : vector<17x17xf32> to vector<17xf32>
    %32 = vector.shape_cast %31 : vector<17xf32> to vector<17x1xf32>
    %33 = vector.broadcast %32 : vector<17x1xf32> to vector<17x17xf32>
    %34 = arith.subf %30, %33 : vector<17x17xf32>
    %35 = math.exp %34 : vector<17x17xf32>
    %cst_17 = arith.constant dense<0.000000e+00> : vector<17xf32>
    %36 = vector.multi_reduction <add>, %35, %cst_17 [1] : vector<17x17xf32> to vector<17xf32>
    %37 = vector.shape_cast %36 : vector<17xf32> to vector<17x1xf32>
    %38 = tpu.reciprocal %37 {approx = true} : vector<17x1xf32> -> vector<17x1xf32>
    %39 = vector.broadcast %38 : vector<17x1xf32> to vector<17x17xf32>
    %40 = arith.mulf %35, %39 : vector<17x17xf32>
    %41 = arith.truncf %40 : vector<17x17xf32> to vector<17x17xbf16>
    %42 = vector.extract_strided_slice %7 {offsets = [0, 64], sizes = [17, 64], strides = [1, 1]} : vector<17x128xbf16> to vector<17x64xbf16>
    %cst_18 = arith.constant dense<0.000000e+00> : vector<17x64xf32>
    %43 = tpu.matmul %41, %42, %cst_18 {dimension_numbers = #tpu.dot_dimension_numbers<[1], [0], [0], [1], [0, 0, 1, 1], [], []>} : vector<17x17xbf16>, vector<17x64xbf16>, vector<17x64xf32> -> vector<17x64xf32>
    %44 = arith.truncf %43 : vector<17x64xf32> to vector<17x64xbf16>
    %c0_19 = arith.constant 0 : index
    %c0_20 = arith.constant 0 : index
    %c64 = arith.constant 64 : index
    %45 = vector.load %arg5[%c0_19, %c0_20, %c64] : memref<1x17x128xbf16, #tpu.memory_space<vmem>>, vector<1x17x64xbf16>
    %46 = vector.shape_cast %45 : vector<1x17x64xbf16> to vector<17x64xbf16>
    %47 = vector.shape_cast %44 : vector<17x64xbf16> to vector<1x17x64xbf16>
    tpu.vector_store %arg5[%c0_19, %c0_20, %c64], %47 {strides = array<i32>} : memref<1x17x128xbf16, #tpu.memory_space<vmem>>, vector<1x17x64xbf16>,
    return
  }
  func.func @transform_0(%arg0: i32, %arg1: i32) -> (i32, i32, i32) {
    %c0_i32 = arith.constant 0 : i32
    %c0_i32_0 = arith.constant 0 : i32
    return %arg0, %c0_i32, %arg1 : i32, i32, i32
  }
  func.func @transform_1(%arg0: i32, %arg1: i32) -> (i32, i32, i32) {
    %c2_i32 = arith.constant 2 : i32
    %0 = arith.addi %c2_i32, %arg1 : i32
    %c0_i32 = arith.constant 0 : i32
    %c0_i32_0 = arith.constant 0 : i32
    return %arg0, %c0_i32, %0 : i32, i32, i32
  }
  func.func @transform_2(%arg0: i32, %arg1: i32) -> (i32, i32, i32) {
    %c4_i32 = arith.constant 4 : i32
    %0 = arith.addi %c4_i32, %arg1 : i32
    %c0_i32 = arith.constant 0 : i32
    %c0_i32_0 = arith.constant 0 : i32
    return %arg0, %c0_i32, %0 : i32, i32, i32
  }
  func.func @transform_3(%arg0: i32, %arg1: i32) -> (i32, i32, i32) {
    %c0_i32 = arith.constant 0 : i32
    %c0_i32_0 = arith.constant 0 : i32
    return %arg0, %c0_i32, %arg1 : i32, i32, i32
  }
}

module attributes {stable_mosaic.version = 11 : i64} {
  func.func @_matmul_bias_residual_kernel(%arg0: i32, %arg1: i32, %arg2: memref<34x256xbf16, #tpu.memory_space<vmem>>, %arg3: memref<256x256xbf16, #tpu.memory_space<vmem>>, %arg4: memref<1x256xf32, #tpu.memory_space<vmem>>, %arg5: memref<34x256xf32, #tpu.memory_space<vmem>>, %arg6: memref<34x256xf32, #tpu.memory_space<vmem>>) attributes {dimension_semantics = [#tpu.dimension_semantics<parallel>, #tpu.dimension_semantics<parallel>], iteration_bounds = array<i64: 1, 1>, scalar_prefetch = 0 : i64, scratch_operands = 0 : i64, tpu.core_type = #tpu.core_type<tc>, window_params = [{transform_indices = @transform_0, window_bounds = array<i64: 34, 256>}, {transform_indices = @transform_1, window_bounds = array<i64: 256, 256>}, {transform_indices = @transform_2, window_bounds = array<i64: 1, 256>}, {transform_indices = @transform_3, window_bounds = array<i64: 34, 256>}, {transform_indices = @transform_4, window_bounds = array<i64: 34, 256>}]} {
    %c0 = arith.constant 0 : index
    %c0_0 = arith.constant 0 : index
    %0 = vector.load %arg2[%c0, %c0_0] : memref<34x256xbf16, #tpu.memory_space<vmem>>, vector<34x256xbf16>
    %c0_1 = arith.constant 0 : index
    %c0_2 = arith.constant 0 : index
    %1 = vector.load %arg3[%c0_1, %c0_2] : memref<256x256xbf16, #tpu.memory_space<vmem>>, vector<256x256xbf16>
    %cst = arith.constant dense<0.000000e+00> : vector<34x256xf32>
    %2 = tpu.matmul %0, %1, %cst {dimension_numbers = #tpu.dot_dimension_numbers<[1], [0], [0], [1], [0, 0, 1, 1], [], []>} : vector<34x256xbf16>, vector<256x256xbf16>, vector<34x256xf32> -> vector<34x256xf32>
    %c0_3 = arith.constant 0 : index
    %c0_4 = arith.constant 0 : index
    %3 = vector.load %arg4[%c0_3, %c0_4] : memref<1x256xf32, #tpu.memory_space<vmem>>, vector<1x256xf32>
    %4 = vector.broadcast %3 : vector<1x256xf32> to vector<34x256xf32>
    %5 = arith.addf %2, %4 : vector<34x256xf32>
    %c0_5 = arith.constant 0 : index
    %c0_6 = arith.constant 0 : index
    %6 = vector.load %arg5[%c0_5, %c0_6] : memref<34x256xf32, #tpu.memory_space<vmem>>, vector<34x256xf32>
    %7 = arith.addf %5, %6 : vector<34x256xf32>
    %c0_7 = arith.constant 0 : index
    %c0_8 = arith.constant 0 : index
    %8 = vector.load %arg6[%c0_7, %c0_8] : memref<34x256xf32, #tpu.memory_space<vmem>>, vector<34x256xf32>
    tpu.vector_store %arg6[%c0_7, %c0_8], %7 {strides = array<i32>} : memref<34x256xf32, #tpu.memory_space<vmem>>, vector<34x256xf32>,
    return
  }
  func.func @transform_0(%arg0: i32, %arg1: i32) -> (i32, i32) {
    %c0_i32 = arith.constant 0 : i32
    %c0_i32_0 = arith.constant 0 : i32
    return %arg0, %c0_i32 : i32, i32
  }
  func.func @transform_1(%arg0: i32, %arg1: i32) -> (i32, i32) {
    %c0_i32 = arith.constant 0 : i32
    %c0_i32_0 = arith.constant 0 : i32
    return %c0_i32, %arg1 : i32, i32
  }
  func.func @transform_2(%arg0: i32, %arg1: i32) -> (i32, i32) {
    %c0_i32 = arith.constant 0 : i32
    %c0_i32_0 = arith.constant 0 : i32
    return %c0_i32, %arg1 : i32, i32
  }
  func.func @transform_3(%arg0: i32, %arg1: i32) -> (i32, i32) {
    %c0_i32 = arith.constant 0 : i32
    return %arg0, %arg1 : i32, i32
  }
  func.func @transform_4(%arg0: i32, %arg1: i32) -> (i32, i32) {
    %c0_i32 = arith.constant 0 : i32
    return %arg0, %arg1 : i32, i32
  }
}

module attributes {stable_mosaic.version = 11 : i64} {
  func.func @_mlp_resident_kernel(%arg0: i32, %arg1: memref<34x256xf32, #tpu.memory_space<vmem>>, %arg2: memref<1x256xf32, #tpu.memory_space<vmem>>, %arg3: memref<1x256xf32, #tpu.memory_space<vmem>>, %arg4: memref<256x1024xbf16, #tpu.memory_space<vmem>>, %arg5: memref<1x1024xf32, #tpu.memory_space<vmem>>, %arg6: memref<1024x256xbf16, #tpu.memory_space<vmem>>, %arg7: memref<1x256xf32, #tpu.memory_space<vmem>>, %arg8: memref<1x256xf32, #tpu.memory_space<vmem>>, %arg9: memref<1x256xf32, #tpu.memory_space<vmem>>, %arg10: memref<34x256xf32, #tpu.memory_space<vmem>>, %arg11: memref<34x256xf32, #tpu.memory_space<vmem>>) attributes {dimension_semantics = [#tpu.dimension_semantics<parallel>], iteration_bounds = array<i64: 1>, scalar_prefetch = 0 : i64, scratch_operands = 0 : i64, tpu.core_type = #tpu.core_type<tc>, window_params = [{transform_indices = @transform_0, window_bounds = array<i64: 34, 256>}, {pipeline_mode = #tpu.pipeline_mode<synchronous>, transform_indices = @transform_1, window_bounds = array<i64: 1, 256>}, {pipeline_mode = #tpu.pipeline_mode<synchronous>, transform_indices = @transform_2, window_bounds = array<i64: 1, 256>}, {pipeline_mode = #tpu.pipeline_mode<synchronous>, transform_indices = @transform_3, window_bounds = array<i64: 256, 1024>}, {pipeline_mode = #tpu.pipeline_mode<synchronous>, transform_indices = @transform_4, window_bounds = array<i64: 1, 1024>}, {pipeline_mode = #tpu.pipeline_mode<synchronous>, transform_indices = @transform_5, window_bounds = array<i64: 1024, 256>}, {pipeline_mode = #tpu.pipeline_mode<synchronous>, transform_indices = @transform_6, window_bounds = array<i64: 1, 256>}, {pipeline_mode = #tpu.pipeline_mode<synchronous>, transform_indices = @transform_7, window_bounds = array<i64: 1, 256>}, {pipeline_mode = #tpu.pipeline_mode<synchronous>, transform_indices = @transform_8, window_bounds = array<i64: 1, 256>}, {transform_indices = @transform_9, window_bounds = array<i64: 34, 256>}, {transform_indices = @transform_10, window_bounds = array<i64: 34, 256>}]} {
    %c0 = arith.constant 0 : index
    %c0_0 = arith.constant 0 : index
    %0 = vector.load %arg1[%c0, %c0_0] : memref<34x256xf32, #tpu.memory_space<vmem>>, vector<34x256xf32>
    %c0_1 = arith.constant 0 : index
    %c0_2 = arith.constant 0 : index
    %1 = vector.load %arg2[%c0_1, %c0_2] : memref<1x256xf32, #tpu.memory_space<vmem>>, vector<1x256xf32>
    %c0_3 = arith.constant 0 : index
    %c0_4 = arith.constant 0 : index
    %2 = vector.load %arg3[%c0_3, %c0_4] : memref<1x256xf32, #tpu.memory_space<vmem>>, vector<1x256xf32>
    %cst = arith.constant dense<0.000000e+00> : vector<34xf32>
    %3 = vector.multi_reduction <add>, %0, %cst [1] : vector<34x256xf32> to vector<34xf32>
    %4 = vector.shape_cast %3 : vector<34xf32> to vector<34x1xf32>
    %cst_5 = arith.constant 2.560000e+02 : f32
    %5 = vector.broadcast %cst_5 : f32 to vector<34x1xf32>
    %6 = arith.divf %4, %5 : vector<34x1xf32>
    %7 = vector.broadcast %6 : vector<34x1xf32> to vector<34x256xf32>
    %8 = arith.subf %0, %7 : vector<34x256xf32>
    %9 = arith.mulf %8, %8 : vector<34x256xf32>
    %cst_6 = arith.constant dense<0.000000e+00> : vector<34xf32>
    %10 = vector.multi_reduction <add>, %9, %cst_6 [1] : vector<34x256xf32> to vector<34xf32>
    %11 = vector.shape_cast %10 : vector<34xf32> to vector<34x1xf32>
    %cst_7 = arith.constant 2.560000e+02 : f32
    %12 = vector.broadcast %cst_7 : f32 to vector<34x1xf32>
    %13 = arith.divf %11, %12 : vector<34x1xf32>
    %14 = vector.broadcast %6 : vector<34x1xf32> to vector<34x256xf32>
    %15 = arith.subf %0, %14 : vector<34x256xf32>
    %cst_8 = arith.constant 9.99999997E-7 : f32
    %16 = vector.broadcast %cst_8 : f32 to vector<34x1xf32>
    %17 = arith.addf %13, %16 : vector<34x1xf32>
    %18 = math.rsqrt %17 : vector<34x1xf32>
    %19 = vector.broadcast %18 : vector<34x1xf32> to vector<34x256xf32>
    %20 = arith.mulf %15, %19 : vector<34x256xf32>
    %21 = vector.broadcast %1 : vector<1x256xf32> to vector<34x256xf32>
    %22 = arith.mulf %20, %21 : vector<34x256xf32>
    %23 = vector.broadcast %2 : vector<1x256xf32> to vector<34x256xf32>
    %24 = arith.addf %22, %23 : vector<34x256xf32>
    %25 = arith.truncf %24 : vector<34x256xf32> to vector<34x256xbf16>
    %c0_9 = arith.constant 0 : index
    %c0_10 = arith.constant 0 : index
    %26 = vector.load %arg4[%c0_9, %c0_10] : memref<256x1024xbf16, #tpu.memory_space<vmem>>, vector<256x1024xbf16>
    %cst_11 = arith.constant dense<0.000000e+00> : vector<34x1024xf32>
    %27 = tpu.matmul %25, %26, %cst_11 {dimension_numbers = #tpu.dot_dimension_numbers<[1], [0], [0], [1], [0, 0, 1, 1], [], []>} : vector<34x256xbf16>, vector<256x1024xbf16>, vector<34x1024xf32> -> vector<34x1024xf32>
    %c0_12 = arith.constant 0 : index
    %c0_13 = arith.constant 0 : index
    %28 = vector.load %arg5[%c0_12, %c0_13] : memref<1x1024xf32, #tpu.memory_space<vmem>>, vector<1x1024xf32>
    %29 = vector.broadcast %28 : vector<1x1024xf32> to vector<34x1024xf32>
    %30 = arith.addf %27, %29 : vector<34x1024xf32>
    %31 = arith.mulf %30, %30 : vector<34x1024xf32>
    %32 = arith.mulf %30, %31 : vector<34x1024xf32>
    %cst_14 = arith.constant 4.471500e-02 : f32
    %33 = vector.broadcast %cst_14 : f32 to vector<34x1024xf32>
    %34 = arith.mulf %33, %32 : vector<34x1024xf32>
    %35 = arith.addf %30, %34 : vector<34x1024xf32>
    %cst_15 = arith.constant 0.797884583 : f32
    %36 = vector.broadcast %cst_15 : f32 to vector<34x1024xf32>
    %37 = arith.mulf %36, %35 : vector<34x1024xf32>
    %38 = math.tanh %37 : vector<34x1024xf32>
    %cst_16 = arith.constant 1.000000e+00 : f32
    %39 = vector.broadcast %cst_16 : f32 to vector<34x1024xf32>
    %40 = arith.addf %39, %38 : vector<34x1024xf32>
    %cst_17 = arith.constant 5.000000e-01 : f32
    %41 = vector.broadcast %cst_17 : f32 to vector<34x1024xf32>
    %42 = arith.mulf %41, %40 : vector<34x1024xf32>
    %43 = arith.mulf %30, %42 : vector<34x1024xf32>
    %44 = arith.truncf %43 : vector<34x1024xf32> to vector<34x1024xbf16>
    %c0_18 = arith.constant 0 : index
    %c0_19 = arith.constant 0 : index
    %45 = vector.load %arg6[%c0_18, %c0_19] : memref<1024x256xbf16, #tpu.memory_space<vmem>>, vector<1024x256xbf16>
    %cst_20 = arith.constant dense<0.000000e+00> : vector<34x256xf32>
    %46 = tpu.matmul %44, %45, %cst_20 {dimension_numbers = #tpu.dot_dimension_numbers<[1], [0], [0], [1], [0, 0, 1, 1], [], []>} : vector<34x1024xbf16>, vector<1024x256xbf16>, vector<34x256xf32> -> vector<34x256xf32>
    %c0_21 = arith.constant 0 : index
    %c0_22 = arith.constant 0 : index
    %47 = vector.load %arg7[%c0_21, %c0_22] : memref<1x256xf32, #tpu.memory_space<vmem>>, vector<1x256xf32>
    %48 = vector.broadcast %47 : vector<1x256xf32> to vector<34x256xf32>
    %49 = arith.addf %46, %48 : vector<34x256xf32>
    %50 = arith.addf %49, %0 : vector<34x256xf32>
    %c0_23 = arith.constant 0 : index
    %c0_24 = arith.constant 0 : index
    %51 = vector.load %arg10[%c0_23, %c0_24] : memref<34x256xf32, #tpu.memory_space<vmem>>, vector<34x256xf32>
    tpu.vector_store %arg10[%c0_23, %c0_24], %50 {strides = array<i32>} : memref<34x256xf32, #tpu.memory_space<vmem>>, vector<34x256xf32>,
    %c0_25 = arith.constant 0 : index
    %c0_26 = arith.constant 0 : index
    %52 = vector.load %arg8[%c0_25, %c0_26] : memref<1x256xf32, #tpu.memory_space<vmem>>, vector<1x256xf32>
    %c0_27 = arith.constant 0 : index
    %c0_28 = arith.constant 0 : index
    %53 = vector.load %arg9[%c0_27, %c0_28] : memref<1x256xf32, #tpu.memory_space<vmem>>, vector<1x256xf32>
    %cst_29 = arith.constant dense<0.000000e+00> : vector<34xf32>
    %54 = vector.multi_reduction <add>, %50, %cst_29 [1] : vector<34x256xf32> to vector<34xf32>
    %55 = vector.shape_cast %54 : vector<34xf32> to vector<34x1xf32>
    %cst_30 = arith.constant 2.560000e+02 : f32
    %56 = vector.broadcast %cst_30 : f32 to vector<34x1xf32>
    %57 = arith.divf %55, %56 : vector<34x1xf32>
    %58 = vector.broadcast %57 : vector<34x1xf32> to vector<34x256xf32>
    %59 = arith.subf %50, %58 : vector<34x256xf32>
    %60 = arith.mulf %59, %59 : vector<34x256xf32>
    %cst_31 = arith.constant dense<0.000000e+00> : vector<34xf32>
    %61 = vector.multi_reduction <add>, %60, %cst_31 [1] : vector<34x256xf32> to vector<34xf32>
    %62 = vector.shape_cast %61 : vector<34xf32> to vector<34x1xf32>
    %cst_32 = arith.constant 2.560000e+02 : f32
    %63 = vector.broadcast %cst_32 : f32 to vector<34x1xf32>
    %64 = arith.divf %62, %63 : vector<34x1xf32>
    %65 = vector.broadcast %57 : vector<34x1xf32> to vector<34x256xf32>
    %66 = arith.subf %50, %65 : vector<34x256xf32>
    %cst_33 = arith.constant 9.99999997E-7 : f32
    %67 = vector.broadcast %cst_33 : f32 to vector<34x1xf32>
    %68 = arith.addf %64, %67 : vector<34x1xf32>
    %69 = math.rsqrt %68 : vector<34x1xf32>
    %70 = vector.broadcast %69 : vector<34x1xf32> to vector<34x256xf32>
    %71 = arith.mulf %66, %70 : vector<34x256xf32>
    %72 = vector.broadcast %52 : vector<1x256xf32> to vector<34x256xf32>
    %73 = arith.mulf %71, %72 : vector<34x256xf32>
    %74 = vector.broadcast %53 : vector<1x256xf32> to vector<34x256xf32>
    %75 = arith.addf %73, %74 : vector<34x256xf32>
    %c0_34 = arith.constant 0 : index
    %c0_35 = arith.constant 0 : index
    %76 = vector.load %arg11[%c0_34, %c0_35] : memref<34x256xf32, #tpu.memory_space<vmem>>, vector<34x256xf32>
    tpu.vector_store %arg11[%c0_34, %c0_35], %75 {strides = array<i32>} : memref<34x256xf32, #tpu.memory_space<vmem>>, vector<34x256xf32>,
    return
  }
  func.func @transform_0(%arg0: i32) -> (i32, i32) {
    %c0_i32 = arith.constant 0 : i32
    %c0_i32_0 = arith.constant 0 : i32
    return %arg0, %c0_i32 : i32, i32
  }
  func.func @transform_1(%arg0: i32) -> (i32, i32) {
    %c0_i32 = arith.constant 0 : i32
    %c0_i32_0 = arith.constant 0 : i32
    %c0_i32_1 = arith.constant 0 : i32
    return %c0_i32, %c0_i32_0 : i32, i32
  }
  func.func @transform_2(%arg0: i32) -> (i32, i32) {
    %c0_i32 = arith.constant 0 : i32
    %c0_i32_0 = arith.constant 0 : i32
    %c0_i32_1 = arith.constant 0 : i32
    return %c0_i32, %c0_i32_0 : i32, i32
  }
  func.func @transform_3(%arg0: i32) -> (i32, i32) {
    %c0_i32 = arith.constant 0 : i32
    %c0_i32_0 = arith.constant 0 : i32
    %c0_i32_1 = arith.constant 0 : i32
    return %c0_i32, %c0_i32_0 : i32, i32
  }
  func.func @transform_4(%arg0: i32) -> (i32, i32) {
    %c0_i32 = arith.constant 0 : i32
    %c0_i32_0 = arith.constant 0 : i32
    %c0_i32_1 = arith.constant 0 : i32
    return %c0_i32, %c0_i32_0 : i32, i32
  }
  func.func @transform_5(%arg0: i32) -> (i32, i32) {
    %c0_i32 = arith.constant 0 : i32
    %c0_i32_0 = arith.constant 0 : i32
    %c0_i32_1 = arith.constant 0 : i32
    return %c0_i32, %c0_i32_0 : i32, i32
  }
  func.func @transform_6(%arg0: i32) -> (i32, i32) {
    %c0_i32 = arith.constant 0 : i32
    %c0_i32_0 = arith.constant 0 : i32
    %c0_i32_1 = arith.constant 0 : i32
    return %c0_i32, %c0_i32_0 : i32, i32
  }
  func.func @transform_7(%arg0: i32) -> (i32, i32) {
    %c0_i32 = arith.constant 0 : i32
    %c0_i32_0 = arith.constant 0 : i32
    %c0_i32_1 = arith.constant 0 : i32
    return %c0_i32, %c0_i32_0 : i32, i32
  }
  func.func @transform_8(%arg0: i32) -> (i32, i32) {
    %c0_i32 = arith.constant 0 : i32
    %c0_i32_0 = arith.constant 0 : i32
    %c0_i32_1 = arith.constant 0 : i32
    return %c0_i32, %c0_i32_0 : i32, i32
  }
  func.func @transform_9(%arg0: i32) -> (i32, i32) {
    %c0_i32 = arith.constant 0 : i32
    %c0_i32_0 = arith.constant 0 : i32
    return %arg0, %c0_i32 : i32, i32
  }
  func.func @transform_10(%arg0: i32) -> (i32, i32) {
    %c0_i32 = arith.constant 0 : i32
    %c0_i32_0 = arith.constant 0 : i32
    return %arg0, %c0_i32 : i32, i32
  }
}

</mosaic_0001>

<llo_original>
// kernel: encoder_forward.17
$region0: #{encoder_forward.17}
  #allocation0 [shape = 'u32[]', space=smem, size = 0x4, offset = 0x4, fixed_abs, tag = 'smem constant byte address 0x4 - core index']
  #allocation1 [shape = 'u32[144,128]{1,0:T(1,128)}', space=vmem, size = 0x12000, scoped, tag = 'internal scratch']
  %s0 = inlined_call_operand.vmem [shape: f32[32,192], index: 0, kind: input, shape index: {}]
  %s1 = inlined_call_operand.vmem [shape: bf16[192,256], index: 1, kind: input, shape index: {}]
  %s2 = inlined_call_operand.vmem [shape: f32[1,256], index: 2, kind: input, shape index: {}]
  %s3 = inlined_call_operand.vmem [shape: f32[32,256], index: 3, kind: output, shape index: {}]
  %s4 = sld [smem:[#allocation0]]
  $region22: #{encoder_forward.17} parent=0
    _
  %s6 = ssub.s32 1, %s4
  %s7 = scalar_select 0, %s6, %s4
  // Predicated region
  $region2: #{encoder_forward.17} parent=0 // pred_check
    _
  $region3: #{encoder_forward.17} parent=0 // pred_check_branch
    %9 = sbr.rel (0) target = $region5
  $region4: #{encoder_forward.17} parent=0 // pred_region
    _
  $region5: #{encoder_forward.17} parent=0 // pred_fallthru
    _
  // Predicated region
  $region6: #{encoder_forward.17} parent=0 // pred_check
    _
  $region7: #{encoder_forward.17} parent=0 // pred_check_branch
    %11 = sbr.rel (0) target = $region9
  $region8: #{encoder_forward.17} parent=0 // pred_region
    _
  $region9: #{encoder_forward.17} parent=0 // pred_fallthru
    _
  // Predicated region
  $region10: #{encoder_forward.17} parent=0 // pred_check
    _
  $region11: #{encoder_forward.17} parent=0 // pred_check_branch
    %13 = sbr.rel (0) target = $region13
  $region12: #{encoder_forward.17} parent=0 // pred_region
    _
  $region13: #{encoder_forward.17} parent=0 // pred_fallthru
    _
  %v15 = vld [vmem:[%s0] sm:$0xff]
  %v16 = vld [vmem:[%s0 + $0x8] sm:$0xff]
  %v17 = vld [vmem:[%s0 + $0x10] sm:$0xff]
  %v18 = vld [vmem:[%s0 + $0x18] sm:$0xff]
  %v19 = vld [vmem:[%s0 + $0x20] sm:$0xff]
  %v20 = vld [vmem:[%s0 + $0x28] sm:$0xff]
  %v21 = vld [vmem:[%s0 + $0x30] sm:$0xff]
  %v22 = vld [vmem:[%s0 + $0x38] sm:$0xff]
  %v23 = vpack.c.bf16 %v17, %v15
  %v24 = vpack.c.bf16 %v18, %v16
  %v25 = vpack.c.bf16 %v21, %v19
  %v26 = vpack.c.bf16 %v22, %v20
  %v27 = vld [vmem:[%s1] sm:$0xff]
  %v28 = vld [vmem:[%s1 + $0x8] sm:$0xff]
  %v29 = vld [vmem:[%s1 + $0x10] sm:$0xff]
  %v30 = vld [vmem:[%s1 + $0x18] sm:$0xff]
  %v31 = vld [vmem:[%s1 + $0x20] sm:$0xff]
  %v32 = vld [vmem:[%s1 + $0x28] sm:$0xff]
  %v33 = vld [vmem:[%s1 + $0x30] sm:$0xff]
  %v34 = vld [vmem:[%s1 + $0x38] sm:$0xff]
  %v35 = vld [vmem:[%s1 + $0x40] sm:$0xff]
  %v36 = vld [vmem:[%s1 + $0x48] sm:$0xff]
  %v37 = vld [vmem:[%s1 + $0x50] sm:$0xff]
  %v38 = vld [vmem:[%s1 + $0x58] sm:$0xff]
  %v39 = vld [vmem:[%s1 + $0x60] sm:$0xff]
  %v40 = vld [vmem:[%s1 + $0x68] sm:$0xff]
  %v41 = vld [vmem:[%s1 + $0x70] sm:$0xff]
  %v42 = vld [vmem:[%s1 + $0x78] sm:$0xff]
  %v43 = vld [vmem:[%s1 + $0x80] sm:$0xff]
  %v44 = vld [vmem:[%s1 + $0x88] sm:$0xff]
  %v45 = vld [vmem:[%s1 + $0x90] sm:$0xff]
  %v46 = vld [vmem:[%s1 + $0x98] sm:$0xff]
  %v47 = vld [vmem:[%s1 + $0xa0] sm:$0xff]
  %v48 = vld [vmem:[%s1 + $0xa8] sm:$0xff]
  %v49 = vld [vmem:[%s1 + $0xb0] sm:$0xff]
  %v50 = vld [vmem:[%s1 + $0xb8] sm:$0xff]
  %v51 = vld [vmem:[%s2] sm:$0x3]
  %v53 = vlaneseq
  %v54 = vshrl.u32 %v53, 7
  %v55 = vsub.s32 0, %v54
  %v56 = vrot.slane %v51, %v55
  %v57 = vlaneseq
  %v58 = vshrl.u32 %v57, 7
  %v59 = vsub.s32 1, %v58
  %v60 = vrot.slane %v51, %v59
  %v87 = vunpack.c.l.b16 %v27
  %v88 = vunpack.c.h.b16 %v27
  %v89 = vunpack.c.l.b16 %v28
  %v90 = vunpack.c.h.b16 %v28
  %v91 = vunpack.c.l.b16 %v29
  %v92 = vunpack.c.h.b16 %v29
  %v93 = vunpack.c.l.b16 %v30
  %v94 = vunpack.c.h.b16 %v30
  %v95 = vunpack.c.l.b16 %v31
  %v96 = vunpack.c.h.b16 %v31
  %v97 = vunpack.c.l.b16 %v32
  %v98 = vunpack.c.h.b16 %v32
  %v99 = vunpack.c.l.b16 %v33
  %v100 = vunpack.c.h.b16 %v33
  %v101 = vunpack.c.l.b16 %v34
  %v102 = vunpack.c.h.b16 %v34
  %v103 = vunpack.c.l.b16 %v35
  %v104 = vunpack.c.h.b16 %v35
  %v105 = vunpack.c.l.b16 %v36
  %v106 = vunpack.c.h.b16 %v36
  %v107 = vunpack.c.l.b16 %v37
  %v108 = vunpack.c.h.b16 %v37
  %v109 = vunpack.c.l.b16 %v38
  %v110 = vunpack.c.h.b16 %v38
  %v111 = vunpack.c.l.b16 %v39
  %v112 = vunpack.c.h.b16 %v39
  %v113 = vunpack.c.l.b16 %v40
  %v114 = vunpack.c.h.b16 %v40
  %v115 = vunpack.c.l.b16 %v41
  %v116 = vunpack.c.h.b16 %v41
  %v117 = vunpack.c.l.b16 %v42
  %v118 = vunpack.c.h.b16 %v42
  %v119 = vunpack.c.l.b16 %v43
  %v120 = vunpack.c.h.b16 %v43
  %v121 = vunpack.c.l.b16 %v44
  %v122 = vunpack.c.h.b16 %v44
  %v123 = vunpack.c.l.b16 %v45
  %v124 = vunpack.c.h.b16 %v45
  %v125 = vunpack.c.l.b16 %v46
  %v126 = vunpack.c.h.b16 %v46
  %v127 = vunpack.c.l.b16 %v47
  %v128 = vunpack.c.h.b16 %v47
  %v129 = vunpack.c.l.b16 %v48
  %v130 = vunpack.c.h.b16 %v48
  %v131 = vunpack.c.l.b16 %v49
  %v132 = vunpack.c.h.b16 %v49
  %v133 = vunpack.c.l.b16 %v50
  %v134 = vunpack.c.h.b16 %v50
  %v135 = vpack.c.b16 %v89, %v87
  %v136 = vpack.c.b16 %v90, %v88
  %v137 = vpack.c.b16 %v93, %v91
  %v138 = vpack.c.b16 %v94, %v92
  %v139 = vpack.c.b16 %v97, %v95
  %v140 = vpack.c.b16 %v98, %v96
  %v141 = vpack.c.b16 %v101, %v99
  %v142 = vpack.c.b16 %v102, %v100
  %v143 = vpack.c.b16 %v105, %v103
  %v144 = vpack.c.b16 %v106, %v104
  %v145 = vpack.c.b16 %v109, %v107
  %v146 = vpack.c.b16 %v110, %v108
  %v147 = vpack.c.b16 %v113, %v111
  %v148 = vpack.c.b16 %v114, %v112
  %v149 = vpack.c.b16 %v117, %v115
  %v150 = vpack.c.b16 %v118, %v116
  %v151 = vpack.c.b16 %v121, %v119
  %v152 = vpack.c.b16 %v122, %v120
  %v153 = vpack.c.b16 %v125, %v123
  %v154 = vpack.c.b16 %v126, %v124
  %v155 = vpack.c.b16 %v129, %v127
  %v156 = vpack.c.b16 %v130, %v128
  %v157 = vpack.c.b16 %v133, %v131
  %v158 = vpack.c.b16 %v134, %v132
  %vm183 = vcmask 523264
  %v185 = vsel %vm183, %v24, 0
  %v188 = vsel %vm183, %v26, 0
  %190 = vmatprep.subr.bf16.mxu0 %v136
  %191 = vmatpush1.bf16.msra.mxu0 %v135
  %192 = vmatprep.subr.bf16.mxu0 %v138
  %193 = vmatpush1.bf16.msra.mxu0 %v137
  %194 = vmatprep.subr.bf16.mxu0 %v140
  %195 = vmatpush1.bf16.msra.mxu0 %v139
  %196 = vmatprep.subr.bf16.mxu0 %v142
  %197 = vmatpush1.bf16.msra.mxu0 %v141
  %198 = vmatprep.subr.bf16.mxu0 %v144
  %199 = vmatpush1.bf16.msra.mxu0 %v143
  %200 = vmatprep.subr.bf16.mxu0 %v146
  %201 = vmatpush1.bf16.msra.mxu0 %v145
  %202 = vmatprep.subr.bf16.mxu0 %v148
  %203 = vmatpush1.bf16.msra.mxu0 %v147
  %204 = vmatprep.subr.bf16.mxu0 %v150
  %205 = vmatpush1.bf16.msra.mxu0 %v149
  %206 = vmatprep.subr.bf16.mxu0 %v152
  %207 = vmatpush1.bf16.msra.mxu0 %v151
  %208 = vmatprep.subr.bf16.mxu0 %v154
  %209 = vmatpush1.bf16.msra.mxu0 %v153
  %210 = vmatprep.subr.bf16.mxu0 %v156
  %211 = vmatpush1.bf16.msra.mxu0 %v155
  %212 = vmatprep.subr.bf16.mxu0 %v158
  %213 = vmatpush1.bf16.msra.mxu0 %v157
  %214 = vmatprep.subr.bf16.mxu0 0
  %215 = vmatpush1.bf16.msra.mxu0 0
  %216 = vmatprep.subr.bf16.mxu0 0
  %217 = vmatpush1.bf16.msra.mxu0 0
  %218 = vmatprep.subr.bf16.mxu0 0
  %219 = vmatpush1.bf16.msra.mxu0 0
  %220 = vmatprep.subr.bf16.mxu0 0
  %221 = vmatpush1.bf16.msra.mxu0 0
  %222 = vmatprep.mubr.bf16.mxu0 %v185
  %223 = vmatmul.mubr.bf16.gmra.mrb[0].mxu0 %v23
  %v224 = vpop.f32.mrb[0].mxu0
  %v225 = vadd.f32 %v56, %v224
  %v226 = vpop.f32.mrb[0].mxu0
  %v227 = vadd.f32 %v60, %v226
  %v228 = vpop.f32.mrb[0].mxu0
  %v229 = vadd.f32 %v56, %v228
  %v230 = vpop.f32.mrb[0].mxu0
  %v231 = vadd.f32 %v60, %v230
  %232 = vmatprep.mubr.bf16.mxu0 %v188
  %233 = vmatmul.mubr.bf16.gmra.mrb[0].mxu0 %v25
  %v234 = vpop.f32.mrb[0].mxu0
  %v235 = vadd.f32 %v56, %v234
  %v236 = vpop.f32.mrb[0].mxu0
  %v237 = vadd.f32 %v60, %v236
  %v238 = vpop.f32.mrb[0].mxu0
  %v239 = vadd.f32 %v56, %v238
  %v240 = vpop.f32.mrb[0].mxu0
  %v241 = vadd.f32 %v60, %v240
  %242 = vdwg.mxu0
  %243 = vst [vmem:[%s3] sm:$0xff] %v225
  %244 = vst [vmem:[%s3 + $0x8] sm:$0xff] %v227
  %245 = vst [vmem:[%s3 + $0x10] sm:$0xff] %v229
  %246 = vst [vmem:[%s3 + $0x18] sm:$0xff] %v231
  %247 = vst [vmem:[%s3 + $0x20] sm:$0xff] %v235
  %248 = vst [vmem:[%s3 + $0x28] sm:$0xff] %v237
  %249 = vst [vmem:[%s3 + $0x30] sm:$0xff] %v239
  %250 = vst [vmem:[%s3 + $0x38] sm:$0xff] %v241
  // Predicated region
  $region14: #{encoder_forward.17} parent=0 // pred_check
    _
  $region15: #{encoder_forward.17} parent=0 // pred_check_branch
    %252 = sbr.rel (0) target = $region17
  $region16: #{encoder_forward.17} parent=0 // pred_region
    _
  $region17: #{encoder_forward.17} parent=0 // pred_fallthru
    _
  // Predicated region
  $region18: #{encoder_forward.17} parent=0 // pred_check
    _
  $region19: #{encoder_forward.17} parent=0 // pred_check_branch
    %254 = sbr.rel (0) target = $region21
  $region20: #{encoder_forward.17} parent=0 // pred_region
    _
  $region21: #{encoder_forward.17} parent=0 // pred_fallthru
    _

// kernel: encoder_forward.19
$region0: #{encoder_forward.19}
  #allocation0 [shape = 'u32[]', space=smem, size = 0x4, offset = 0x4, fixed_abs, tag = 'smem constant byte address 0x4 - core index']
  #allocation1 [shape = 'u32[144,128]{1,0:T(1,128)}', space=vmem, size = 0x12000, scoped, tag = 'internal scratch']
  %s0 = inlined_call_operand.vmem [shape: bf16[2,17,768], index: 0, kind: input, shape index: {}, may-alias: {0,1,2}]
  %s1 = inlined_call_operand.vmem [shape: bf16[2,17,768], index: 1, kind: input, shape index: {}, may-alias: {0,1,2}]
  %s2 = inlined_call_operand.vmem [shape: bf16[2,17,768], index: 2, kind: input, shape index: {}, may-alias: {0,1,2}]
  %s3 = inlined_call_operand.vmem [shape: bf16[2,17,256], index: 3, kind: output, shape index: {}]
  %s4 = sld [smem:[#allocation0]]
  $region205: #{encoder_forward.19} parent=0
    _
  %s6 = ssub.s32 1, %s4
  %s7 = scalar_select 0, %s6, %s4
  $region1: #{encoder_forward.19} parent=0
    #allocation2 [shape = 'u8[12288]{0}', space=vmem, size = 0x3000, scoped, tag = 'input window, operand 0']
    #allocation3 [shape = 'u8[12288]{0}', space=vmem, size = 0x3000, scoped, tag = 'input window, operand 1']
    #allocation4 [shape = 'u8[12288]{0}', space=vmem, size = 0x3000, scoped, tag = 'input window, operand 2']
    #allocation5 [shape = 'u8[12288]{0}', space=vmem, size = 0x3000, scoped, tag = 'output window, operand 0']
    loop: start=0, step=1, limit=6
    $region2: #{encoder_forward.19} parent=1 // loop_pre_header
      _
    $region3: #{encoder_forward.19} parent=1 // loop_header
      %s9 = sphi 0, %s13
      %p10 = scmp.ge.s32.totalorder %s9, 6
      %s16 = sphi 0, %s28
      %s17 = sphi 0, %s24
      %s18 = sphi 0, %s16
      %s19 = sphi 0, %s17
      %s20 = sphi 0, %s18
      %s21 = sphi 0, %s19
      %s33 = sphi 0, %s35
      %s36 = sphi 0, %s33
      %s37 = sphi 0, %s36
      %s53 = sphi 0, %s37
      %s63 = sphi 0, %s65
      %s66 = sphi 0, %s63
      %s67 = sphi 0, %s66
      %s83 = sphi 0, %s67
      %s93 = sphi 0, %s95
      %s96 = sphi 0, %s93
      %s97 = sphi 0, %s96
      %s113 = sphi 0, %s97
      %s121 = sphi 0, %s123
      %s124 = sphi 0, %s121
      %s125 = sphi 0, %s124
      %s141 = sphi 0, %s125
    $region4: #{encoder_forward.19} parent=1 // loop_header_branch
      %12 = sbr.rel (%p10) target = $region8
    $region5: #{encoder_forward.19} parent=1 // loop_body
      %s14 = ssub.s32 %s9, 1
      %s15 = ssub.s32 %s9, 2
      %s22 = sadd.s32 1, %s17
      %p23 = scmp.ge.s32.totalorder %s22, 2
      %s24 = scalar_select %p23, 0, %s22
      %s25 = sadd.s32 1, %s16
      %s26 = scalar_select %p23, %s25, %s16
      %p27 = scmp.ge.s32.totalorder %s26, 2
      %s28 = scalar_select %p27, 0, %s26
      %s29 = ssub.s32 %s16, %s28
      %s30 = ssub.s32 %s17, %s24
      %s31 = sor.u32 %s29, %s30
      %p32 = scmp.eq.s32.totalorder %s31, 0
      %s34 = sadd.s32 %s33, 1
      %s35 = scalar_select %p32, %s33, %s34
      %p38 = pneg %p32
      %p39 = scmp.eq.s32.totalorder %s9, 3
      %p40 = por %p38, %p39
      %p41 = scmp.ne.s32.totalorder %s33, %s36
      %p42 = scmp.eq.s32.totalorder %s9, 0
      %p43 = por %p41, %p42
      %p44 = scmp.ne.s32.totalorder %s33, %s36
      %p45 = scmp.eq.s32.totalorder %s14, 3
      %p46 = por %p44, %p45
      %p47 = scmp.ne.s32.totalorder %s36, %s37
      %p48 = scmp.eq.s32.totalorder %s14, 0
      %p49 = por %p47, %p48
      %p50 = scmp.ne.s32.totalorder %s36, %s37
      %p51 = scmp.eq.s32.totalorder %s15, 3
      %p52 = por %p50, %p51
      %p54 = scmp.ne.s32.totalorder %s37, %s53
      %p55 = scmp.eq.s32.totalorder %s15, 0
      %p56 = por %p54, %p55
      %s57 = sadd.s32 %s17, 2
      %s58 = sadd.s32 %s24, 2
      %s59 = ssub.s32 %s16, %s28
      %s60 = ssub.s32 %s57, %s58
      %s61 = sor.u32 %s59, %s60
      %p62 = scmp.eq.s32.totalorder %s61, 0
      %s64 = sadd.s32 %s63, 1
      %s65 = scalar_select %p62, %s63, %s64
      %p68 = pneg %p62
      %p69 = scmp.eq.s32.totalorder %s9, 3
      %p70 = por %p68, %p69
      %p71 = scmp.ne.s32.totalorder %s63, %s66
      %p72 = scmp.eq.s32.totalorder %s9, 0
      %p73 = por %p71, %p72
      %p74 = scmp.ne.s32.totalorder %s63, %s66
      %p75 = scmp.eq.s32.totalorder %s14, 3
      %p76 = por %p74, %p75
      %p77 = scmp.ne.s32.totalorder %s66, %s67
      %p78 = scmp.eq.s32.totalorder %s14, 0
      %p79 = por %p77, %p78
      %p80 = scmp.ne.s32.totalorder %s66, %s67
      %p81 = scmp.eq.s32.totalorder %s15, 3
      %p82 = por %p80, %p81
      %p84 = scmp.ne.s32.totalorder %s67, %s83
      %p85 = scmp.eq.s32.totalorder %s15, 0
      %p86 = por %p84, %p85
      %s87 = sadd.s32 %s17, 4
      %s88 = sadd.s32 %s24, 4
      %s89 = ssub.s32 %s16, %s28
      %s90 = ssub.s32 %s87, %s88
      %s91 = sor.u32 %s89, %s90
      %p92 = scmp.eq.s32.totalorder %s91, 0
      %s94 = sadd.s32 %s93, 1
      %s95 = scalar_select %p92, %s93, %s94
      %p98 = pneg %p92
      %p99 = scmp.eq.s32.totalorder %s9, 3
      %p100 = por %p98, %p99
      %p101 = scmp.ne.s32.totalorder %s93, %s96
      %p102 = scmp.eq.s32.totalorder %s9, 0
      %p103 = por %p101, %p102
      %p104 = scmp.ne.s32.totalorder %s93, %s96
      %p105 = scmp.eq.s32.totalorder %s14, 3
      %p106 = por %p104, %p105
      %p107 = scmp.ne.s32.totalorder %s96, %s97
      %p108 = scmp.eq.s32.totalorder %s14, 0
      %p109 = por %p107, %p108
      %p110 = scmp.ne.s32.totalorder %s96, %s97
      %p111 = scmp.eq.s32.totalorder %s15, 3
      %p112 = por %p110, %p111
      %p114 = scmp.ne.s32.totalorder %s97, %s113
      %p115 = scmp.eq.s32.totalorder %s15, 0
      %p116 = por %p114, %p115
      %s117 = ssub.s32 %s16, %s28
      %s118 = ssub.s32 %s17, %s24
      %s119 = sor.u32 %s117, %s118
      %p120 = scmp.eq.s32.totalorder %s119, 0
      %s122 = sadd.s32 %s121, 1
      %s123 = scalar_select %p120, %s121, %s122
      %p126 = pneg %p120
      %p127 = scmp.eq.s32.totalorder %s9, 3
      %p128 = por %p126, %p127
      %p129 = scmp.ne.s32.totalorder %s121, %s124
      %p130 = scmp.eq.s32.totalorder %s9, 0
      %p131 = por %p129, %p130
      %p132 = scmp.ne.s32.totalorder %s121, %s124
      %p133 = scmp.eq.s32.totalorder %s14, 3
      %p134 = por %p132, %p133
      %p135 = scmp.ne.s32.totalorder %s124, %s125
      %p136 = scmp.eq.s32.totalorder %s14, 0
      %p137 = por %p135, %p136
      %p138 = scmp.ne.s32.totalorder %s124, %s125
      %p139 = scmp.eq.s32.totalorder %s15, 3
      %p140 = por %p138, %p139
      %p142 = scmp.ne.s32.totalorder %s125, %s141
      %p143 = scmp.eq.s32.totalorder %s15, 0
      %p144 = por %p142, %p143
      %p145 = scmp.le.s32.totalorder 1, %s9
      %p146 = scmp.lt.s32.totalorder %s9, 5
      %p147 = pnand %p145, %p146
      %p148 = pneg %p147
      // Predicated region
      $region9: #{encoder_forward.19} parent=5 // pred_check
        _
      $region10: #{encoder_forward.19} parent=5 // pred_check_branch
        %150 = sbr.rel (%p147) target = $region12
      $region11: #{encoder_forward.19} parent=5 // pred_region
        %s151 = ssub.s32 %s9, 1
      $region12: #{encoder_forward.19} parent=5 // pred_fallthru
        _
      %p152 = scmp.lt.s32.totalorder %s9, 4
      // Predicated region
      $region13: #{encoder_forward.19} parent=5 // pred_check
        %p153 = pneg %p152
      $region14: #{encoder_forward.19} parent=5 // pred_check_branch
        %155 = sbr.rel (%p153) target = $region16
      $region15: #{encoder_forward.19} parent=5 // pred_region
        // Predicated region
        $region17: #{encoder_forward.19} parent=15 // pred_check
          %p156 = pneg %p43
        $region18: #{encoder_forward.19} parent=15 // pred_check_branch
          %158 = sbr.rel (%p156) target = $region20
        $region19: #{encoder_forward.19} parent=15 // pred_region
          %s159 = sand.u32 %s33, 1
          %s160 = sand.u32 %s33, 1
          %s161 = smul.addr %s160, 12
          %s162 = scalar_lea.vmem [#allocation2], %s161
          %s163 = smul.addr %s16, 18
          %s164 = sadd.s32 %s17, %s163
          %s165 = smul.addr %s164, 4
          %s166 = scalar_lea.vmem %s0, %s165
          // Predicated region
          $region21: #{encoder_forward.19} parent=19 // pred_check
            _
          $region22: #{encoder_forward.19} parent=19 // pred_check_branch
            %168 = sbr.rel (0) target = $region24
          $region23: #{encoder_forward.19} parent=19 // pred_region
            // Predicated region
            $region25: #{encoder_forward.19} parent=23 // pred_check
              _
            $region26: #{encoder_forward.19} parent=23 // pred_check_branch
              %170 = sbr.rel target = $region28
            $region27: #{encoder_forward.19} parent=23 // pred_region
              // Predicated region
              $region40: #{encoder_forward.19} parent=27 // pred_check
                _
              $region41: #{encoder_forward.19} parent=27 // pred_check_branch
                %189 = sbr.rel (0) target = $region43
              $region42: #{encoder_forward.19} parent=27 // pred_region
                loop: start=0, step=1, limit=1
                $region44: #{encoder_forward.19} parent=42 // loop_pre_header
                  _
                $region45: #{encoder_forward.19} parent=42 // loop_header
                  %s191 = sphi 0, %s195
                  %p192 = scmp.ge.s32.totalorder %s191, 1
                  %s196 = sphi %s166, %s166
                  %s197 = sphi %s162, %s162
                $region46: #{encoder_forward.19} parent=42 // loop_header_branch
                  %194 = sbr.rel (%p192) target = $region50
                $region47: #{encoder_forward.19} parent=42 // loop_body
                  _
                $region48: #{encoder_forward.19} parent=42 // loop_footer
                  %s195 = sadd.s32 1, %s191
                $region49: #{encoder_forward.19} parent=42 // loop_footer_branch
                  %190 = sbr.rel target = $region45
                $region50: #{encoder_forward.19} parent=42 // loop_exit
                  _
                loop: start=0, step=1, limit=1
                $region51: #{encoder_forward.19} parent=42 // loop_pre_header
                  _
                $region52: #{encoder_forward.19} parent=42 // loop_header
                  %s200 = sphi 0, %s204
                  %p201 = scmp.ge.s32.totalorder %s200, 1
                  %s205 = sphi %s166, %s166
                  %s206 = sphi %s162, %s162
                $region53: #{encoder_forward.19} parent=42 // loop_header_branch
                  %203 = sbr.rel (%p201) target = $region57
                $region54: #{encoder_forward.19} parent=42 // loop_body
                  %v207 = vld [vmem:[%s205] sm:$0xf]
                  %208 = vst [vmem:[%s206] sm:$0xf] %v207
                  %v209 = vld [vmem:[%s205 + $0x18] sm:$0xf]
                  %210 = vst [vmem:[%s206 + $0x4] sm:$0xf] %v209
                  %v211 = vld [vmem:[%s205 + $0x30] sm:$0xf]
                  %212 = vst [vmem:[%s206 + $0x8] sm:$0xf] %v211
                $region55: #{encoder_forward.19} parent=42 // loop_footer
                  %s204 = sadd.s32 1, %s200
                $region56: #{encoder_forward.19} parent=42 // loop_footer_branch
                  %199 = sbr.rel target = $region52
                $region57: #{encoder_forward.19} parent=42 // loop_exit
                  _
              $region43: #{encoder_forward.19} parent=27 // pred_fallthru
                _
            $region28: #{encoder_forward.19} parent=23 // pred_fallthru
              _
            // Predicated region
            $region29: #{encoder_forward.19} parent=23 // pred_check
              _
            $region30: #{encoder_forward.19} parent=23 // pred_check_branch
              %172 = sbr.rel (0) target = $region32
            $region31: #{encoder_forward.19} parent=23 // pred_region
              loop: start=0, step=1, limit=1
              $region33: #{encoder_forward.19} parent=31 // loop_pre_header
                _
              $region34: #{encoder_forward.19} parent=31 // loop_header
                %s175 = sphi 0, %s179
                %p176 = scmp.ge.s32.totalorder %s175, 1
                %s180 = sphi %s166, %s166
                %s181 = sphi %s162, %s162
              $region35: #{encoder_forward.19} parent=31 // loop_header_branch
                %178 = sbr.rel (%p176) target = $region39
              $region36: #{encoder_forward.19} parent=31 // loop_body
                %v182 = vld [vmem:[%s180] sm:$0xf]
                %183 = vst [vmem:[%s181] sm:$0xf] %v182
                %v184 = vld [vmem:[%s180 + $0x18] sm:$0xf]
                %185 = vst [vmem:[%s181 + $0x4] sm:$0xf] %v184
                %v186 = vld [vmem:[%s180 + $0x30] sm:$0xf]
                %187 = vst [vmem:[%s181 + $0x8] sm:$0xf] %v186
              $region37: #{encoder_forward.19} parent=31 // loop_footer
                %s179 = sadd.s32 1, %s175
              $region38: #{encoder_forward.19} parent=31 // loop_footer_branch
                %174 = sbr.rel target = $region34
              $region39: #{encoder_forward.19} parent=31 // loop_exit
                _
            $region32: #{encoder_forward.19} parent=23 // pred_fallthru
              _
          $region24: #{encoder_forward.19} parent=19 // pred_fallthru
            _
          %213 = vnop
        $region20: #{encoder_forward.19} parent=15 // pred_fallthru
          _
        // Predicated region
        $region58: #{encoder_forward.19} parent=15 // pred_check
          %p214 = pneg %p73
        $region59: #{encoder_forward.19} parent=15 // pred_check_branch
          %216 = sbr.rel (%p214) target = $region61
        $region60: #{encoder_forward.19} parent=15 // pred_region
          %s217 = sand.u32 %s63, 1
          %s218 = sand.u32 %s63, 1
          %s219 = smul.addr %s218, 12
          %s220 = scalar_lea.vmem [#allocation3], %s219
          %s221 = sadd.s32 %s17, 2
          %s222 = smul.addr %s16, 18
          %s223 = sadd.s32 %s221, %s222
          %s224 = smul.addr %s223, 4
          %s225 = scalar_lea.vmem %s1, %s224
          // Predicated region
          $region62: #{encoder_forward.19} parent=60 // pred_check
            _
          $region63: #{encoder_forward.19} parent=60 // pred_check_branch
            %227 = sbr.rel (0) target = $region65
          $region64: #{encoder_forward.19} parent=60 // pred_region
            // Predicated region
            $region66: #{encoder_forward.19} parent=64 // pred_check
              _
            $region67: #{encoder_forward.19} parent=64 // pred_check_branch
              %229 = sbr.rel target = $region69
            $region68: #{encoder_forward.19} parent=64 // pred_region
              // Predicated region
              $region81: #{encoder_forward.19} parent=68 // pred_check
                _
              $region82: #{encoder_forward.19} parent=68 // pred_check_branch
                %248 = sbr.rel (0) target = $region84
              $region83: #{encoder_forward.19} parent=68 // pred_region
                loop: start=0, step=1, limit=1
                $region85: #{encoder_forward.19} parent=83 // loop_pre_header
                  _
                $region86: #{encoder_forward.19} parent=83 // loop_header
                  %s250 = sphi 0, %s254
                  %p251 = scmp.ge.s32.totalorder %s250, 1
                  %s255 = sphi %s225, %s225
                  %s256 = sphi %s220, %s220
                $region87: #{encoder_forward.19} parent=83 // loop_header_branch
                  %253 = sbr.rel (%p251) target = $region91
                $region88: #{encoder_forward.19} parent=83 // loop_body
                  _
                $region89: #{encoder_forward.19} parent=83 // loop_footer
                  %s254 = sadd.s32 1, %s250
                $region90: #{encoder_forward.19} parent=83 // loop_footer_branch
                  %249 = sbr.rel target = $region86
                $region91: #{encoder_forward.19} parent=83 // loop_exit
                  _
                loop: start=0, step=1, limit=1
                $region92: #{encoder_forward.19} parent=83 // loop_pre_header
                  _
                $region93: #{encoder_forward.19} parent=83 // loop_header
                  %s259 = sphi 0, %s263
                  %p260 = scmp.ge.s32.totalorder %s259, 1
                  %s264 = sphi %s225, %s225
                  %s265 = sphi %s220, %s220
                $region94: #{encoder_forward.19} parent=83 // loop_header_branch
                  %262 = sbr.rel (%p260) target = $region98
                $region95: #{encoder_forward.19} parent=83 // loop_body
                  %v266 = vld [vmem:[%s264] sm:$0xf]
                  %267 = vst [vmem:[%s265] sm:$0xf] %v266
                  %v268 = vld [vmem:[%s264 + $0x18] sm:$0xf]
                  %269 = vst [vmem:[%s265 + $0x4] sm:$0xf] %v268
                  %v270 = vld [vmem:[%s264 + $0x30] sm:$0xf]
                  %271 = vst [vmem:[%s265 + $0x8] sm:$0xf] %v270
                $region96: #{encoder_forward.19} parent=83 // loop_footer
                  %s263 = sadd.s32 1, %s259
                $region97: #{encoder_forward.19} parent=83 // loop_footer_branch
                  %258 = sbr.rel target = $region93
                $region98: #{encoder_forward.19} parent=83 // loop_exit
                  _
              $region84: #{encoder_forward.19} parent=68 // pred_fallthru
                _
            $region69: #{encoder_forward.19} parent=64 // pred_fallthru
              _
            // Predicated region
            $region70: #{encoder_forward.19} parent=64 // pred_check
              _
            $region71: #{encoder_forward.19} parent=64 // pred_check_branch
              %231 = sbr.rel (0) target = $region73
            $region72: #{encoder_forward.19} parent=64 // pred_region
              loop: start=0, step=1, limit=1
              $region74: #{encoder_forward.19} parent=72 // loop_pre_header
                _
              $region75: #{encoder_forward.19} parent=72 // loop_header
                %s234 = sphi 0, %s238
                %p235 = scmp.ge.s32.totalorder %s234, 1
                %s239 = sphi %s225, %s225
                %s240 = sphi %s220, %s220
              $region76: #{encoder_forward.19} parent=72 // loop_header_branch
                %237 = sbr.rel (%p235) target = $region80
              $region77: #{encoder_forward.19} parent=72 // loop_body
                %v241 = vld [vmem:[%s239] sm:$0xf]
                %242 = vst [vmem:[%s240] sm:$0xf] %v241
                %v243 = vld [vmem:[%s239 + $0x18] sm:$0xf]
                %244 = vst [vmem:[%s240 + $0x4] sm:$0xf] %v243
                %v245 = vld [vmem:[%s239 + $0x30] sm:$0xf]
                %246 = vst [vmem:[%s240 + $0x8] sm:$0xf] %v245
              $region78: #{encoder_forward.19} parent=72 // loop_footer
                %s238 = sadd.s32 1, %s234
              $region79: #{encoder_forward.19} parent=72 // loop_footer_branch
                %233 = sbr.rel target = $region75
              $region80: #{encoder_forward.19} parent=72 // loop_exit
                _
            $region73: #{encoder_forward.19} parent=64 // pred_fallthru
              _
          $region65: #{encoder_forward.19} parent=60 // pred_fallthru
            _
          %272 = vnop
        $region61: #{encoder_forward.19} parent=15 // pred_fallthru
          _
        // Predicated region
        $region99: #{encoder_forward.19} parent=15 // pred_check
          %p273 = pneg %p103
        $region100: #{encoder_forward.19} parent=15 // pred_check_branch
          %275 = sbr.rel (%p273) target = $region102
        $region101: #{encoder_forward.19} parent=15 // pred_region
          %s276 = sand.u32 %s93, 1
          %s277 = sand.u32 %s93, 1
          %s278 = smul.addr %s277, 12
          %s279 = scalar_lea.vmem [#allocation4], %s278
          %s280 = sadd.s32 %s17, 4
          %s281 = smul.addr %s16, 18
          %s282 = sadd.s32 %s280, %s281
          %s283 = smul.addr %s282, 4
          %s284 = scalar_lea.vmem %s2, %s283
          // Predicated region
          $region103: #{encoder_forward.19} parent=101 // pred_check
            _
          $region104: #{encoder_forward.19} parent=101 // pred_check_branch
            %286 = sbr.rel (0) target = $region106
          $region105: #{encoder_forward.19} parent=101 // pred_region
            // Predicated region
            $region107: #{encoder_forward.19} parent=105 // pred_check
              _
            $region108: #{encoder_forward.19} parent=105 // pred_check_branch
              %288 = sbr.rel target = $region110
            $region109: #{encoder_forward.19} parent=105 // pred_region
              // Predicated region
              $region122: #{encoder_forward.19} parent=109 // pred_check
                _
              $region123: #{encoder_forward.19} parent=109 // pred_check_branch
                %307 = sbr.rel (0) target = $region125
              $region124: #{encoder_forward.19} parent=109 // pred_region
                loop: start=0, step=1, limit=1
                $region126: #{encoder_forward.19} parent=124 // loop_pre_header
                  _
                $region127: #{encoder_forward.19} parent=124 // loop_header
                  %s309 = sphi 0, %s313
                  %p310 = scmp.ge.s32.totalorder %s309, 1
                  %s314 = sphi %s284, %s284
                  %s315 = sphi %s279, %s279
                $region128: #{encoder_forward.19} parent=124 // loop_header_branch
                  %312 = sbr.rel (%p310) target = $region132
                $region129: #{encoder_forward.19} parent=124 // loop_body
                  _
                $region130: #{encoder_forward.19} parent=124 // loop_footer
                  %s313 = sadd.s32 1, %s309
                $region131: #{encoder_forward.19} parent=124 // loop_footer_branch
                  %308 = sbr.rel target = $region127
                $region132: #{encoder_forward.19} parent=124 // loop_exit
                  _
                loop: start=0, step=1, limit=1
                $region133: #{encoder_forward.19} parent=124 // loop_pre_header
                  _
                $region134: #{encoder_forward.19} parent=124 // loop_header
                  %s318 = sphi 0, %s322
                  %p319 = scmp.ge.s32.totalorder %s318, 1
                  %s323 = sphi %s284, %s284
                  %s324 = sphi %s279, %s279
                $region135: #{encoder_forward.19} parent=124 // loop_header_branch
                  %321 = sbr.rel (%p319) target = $region139
                $region136: #{encoder_forward.19} parent=124 // loop_body
                  %v325 = vld [vmem:[%s323] sm:$0xf]
                  %326 = vst [vmem:[%s324] sm:$0xf] %v325
                  %v327 = vld [vmem:[%s323 + $0x18] sm:$0xf]
                  %328 = vst [vmem:[%s324 + $0x4] sm:$0xf] %v327
                  %v329 = vld [vmem:[%s323 + $0x30] sm:$0xf]
                  %330 = vst [vmem:[%s324 + $0x8] sm:$0xf] %v329
                $region137: #{encoder_forward.19} parent=124 // loop_footer
                  %s322 = sadd.s32 1, %s318
                $region138: #{encoder_forward.19} parent=124 // loop_footer_branch
                  %317 = sbr.rel target = $region134
                $region139: #{encoder_forward.19} parent=124 // loop_exit
                  _
              $region125: #{encoder_forward.19} parent=109 // pred_fallthru
                _
            $region110: #{encoder_forward.19} parent=105 // pred_fallthru
              _
            // Predicated region
            $region111: #{encoder_forward.19} parent=105 // pred_check
              _
            $region112: #{encoder_forward.19} parent=105 // pred_check_branch
              %290 = sbr.rel (0) target = $region114
            $region113: #{encoder_forward.19} parent=105 // pred_region
              loop: start=0, step=1, limit=1
              $region115: #{encoder_forward.19} parent=113 // loop_pre_header
                _
              $region116: #{encoder_forward.19} parent=113 // loop_header
                %s293 = sphi 0, %s297
                %p294 = scmp.ge.s32.totalorder %s293, 1
                %s298 = sphi %s284, %s284
                %s299 = sphi %s279, %s279
              $region117: #{encoder_forward.19} parent=113 // loop_header_branch
                %296 = sbr.rel (%p294) target = $region121
              $region118: #{encoder_forward.19} parent=113 // loop_body
                %v300 = vld [vmem:[%s298] sm:$0xf]
                %301 = vst [vmem:[%s299] sm:$0xf] %v300
                %v302 = vld [vmem:[%s298 + $0x18] sm:$0xf]
                %303 = vst [vmem:[%s299 + $0x4] sm:$0xf] %v302
                %v304 = vld [vmem:[%s298 + $0x30] sm:$0xf]
                %305 = vst [vmem:[%s299 + $0x8] sm:$0xf] %v304
              $region119: #{encoder_forward.19} parent=113 // loop_footer
                %s297 = sadd.s32 1, %s293
              $region120: #{encoder_forward.19} parent=113 // loop_footer_branch
                %292 = sbr.rel target = $region116
              $region121: #{encoder_forward.19} parent=113 // loop_exit
                _
            $region114: #{encoder_forward.19} parent=105 // pred_fallthru
              _
          $region106: #{encoder_forward.19} parent=101 // pred_fallthru
            _
          %331 = vnop
        $region102: #{encoder_forward.19} parent=15 // pred_fallthru
          _
      $region16: #{encoder_forward.19} parent=5 // pred_fallthru
        _
      %p332 = scmp.le.s32.totalorder 1, %s9
      %p333 = scmp.lt.s32.totalorder %s9, 5
      %p334 = pnand %p332, %p333
      %p335 = pneg %p334
      // Predicated region
      $region140: #{encoder_forward.19} parent=5 // pred_check
        _
      $region141: #{encoder_forward.19} parent=5 // pred_check_branch
        %337 = sbr.rel (%p334) target = $region143
      $region142: #{encoder_forward.19} parent=5 // pred_region
        %s338 = ssub.s32 %s9, 1
        %s339 = sand.u32 %s36, 1
        %s340 = sand.u32 %s36, 1
        %s341 = smul.addr %s340, 12
        %s342 = scalar_lea.vmem [#allocation2], %s341
        // Predicated region
        $region144: #{encoder_forward.19} parent=142 // pred_check
          %p343 = pneg %p49
        $region145: #{encoder_forward.19} parent=142 // pred_check_branch
          %345 = sbr.rel (%p343) target = $region147
        $region146: #{encoder_forward.19} parent=142 // pred_region
          _
        $region147: #{encoder_forward.19} parent=142 // pred_fallthru
          _
        %s346 = sand.u32 %s66, 1
        %s347 = sand.u32 %s66, 1
        %s348 = smul.addr %s347, 12
        %s349 = scalar_lea.vmem [#allocation3], %s348
        // Predicated region
        $region148: #{encoder_forward.19} parent=142 // pred_check
          %p350 = pneg %p79
        $region149: #{encoder_forward.19} parent=142 // pred_check_branch
          %352 = sbr.rel (%p350) target = $region151
        $region150: #{encoder_forward.19} parent=142 // pred_region
          _
        $region151: #{encoder_forward.19} parent=142 // pred_fallthru
          _
        %s353 = sand.u32 %s96, 1
        %s354 = sand.u32 %s96, 1
        %s355 = smul.addr %s354, 12
        %s356 = scalar_lea.vmem [#allocation4], %s355
        // Predicated region
        $region152: #{encoder_forward.19} parent=142 // pred_check
          %p357 = pneg %p109
        $region153: #{encoder_forward.19} parent=142 // pred_check_branch
          %359 = sbr.rel (%p357) target = $region155
        $region154: #{encoder_forward.19} parent=142 // pred_region
          _
        $region155: #{encoder_forward.19} parent=142 // pred_fallthru
          _
        %s360 = sand.u32 %s36, 1
        %s361 = sand.u32 %s36, 1
        %s362 = smul.addr %s361, 12
        %s363 = scalar_lea.vmem [#allocation2], %s362
        %p364 = pneg %p49
        %p365 = pneg %p46
        %s366 = sand.u32 %s66, 1
        %s367 = sand.u32 %s66, 1
        %s368 = smul.addr %s367, 12
        %s369 = scalar_lea.vmem [#allocation3], %s368
        %p370 = pneg %p79
        %p371 = pneg %p76
        %s372 = sand.u32 %s96, 1
        %s373 = sand.u32 %s96, 1
        %s374 = smul.addr %s373, 12
        %s375 = scalar_lea.vmem [#allocation4], %s374
        %p376 = pneg %p109
        %p377 = pneg %p106
        %p378 = pneg %p137
        %p379 = pneg %p134
        %s380 = sand.u32 %s124, 1
        %s381 = sand.u32 %s124, 1
        %s382 = smul.addr %s381, 12
        %s383 = scalar_lea.vmem [#allocation5], %s382
        %s384 = sadd.s32 %s19, 2
        %s385 = sadd.s32 %s19, 4
        %v388 = vld [vmem:[%s342] sm:$0xf]
        %v389 = vld [vmem:[%s342 + $0x4] sm:$0xf]
        %v390 = vld [vmem:[%s342 + $0x8] sm:$0x1]
        %v391 = vmul.bf16 %v388, 1040203264
        %v392 = vmul.bf16 %v389, 1040203264
        %v393 = vmul.bf16 %v390, 1040203264
        %v394 = vld [vmem:[%s349] sm:$0xf]
        %v395 = vld [vmem:[%s349 + $0x4] sm:$0xf]
        %v396 = vld [vmem:[%s349 + $0x8] sm:$0x1]
        %v397 = vld [vmem:[%s356] sm:$0xf]
        %v398 = vld [vmem:[%s356 + $0x4] sm:$0xf]
        %v399 = vld [vmem:[%s356 + $0x8] sm:$0x1]
        %v403 = vunpack.c.l.b16 %v391
        %v404 = vunpack.c.l.b16 %v392
        %v405 = vunpack.c.l.b16 %v393
        %v406 = vpack.c.b16 %v404, %v403
        %v407 = vpack.c.b16 %v405, %v405
        %v411 = vunpack.c.l.b16 %v394
        %v412 = vunpack.c.l.b16 %v395
        %v413 = vunpack.c.l.b16 %v396
        %v414 = vpack.c.b16 %v412, %v411
        %v415 = vpack.c.b16 %v413, %v413
        %vm416 = vcmask 523264
        %v418 = vsel %vm416, %v406, 0
        %v421 = vsel %vm416, %v407, 0
        %v424 = vsel %vm416, %v414, 0
        %v427 = vsel %vm416, %v415, 0
        %429 = vmatprep.subr.bf16.mxu0 0
        %430 = vmatpush1.bf16.xpose.msra.mxu0 %v424
        %431 = vmatprep.subr.bf16.mxu0 0
        %432 = vmatpush1.bf16.xpose.msra.mxu0 %v427
        %433 = vmatprep.subr.bf16.mxu0 0
        %434 = vmatpush1.bf16.xpose.msra.mxu0 0
        %435 = vmatprep.subr.bf16.mxu0 0
        %436 = vmatpush1.bf16.xpose.msra.mxu0 0
        %437 = vmatprep.subr.bf16.mxu0 0
        %438 = vmatpush1.bf16.xpose.msra.mxu0 0
        %439 = vmatprep.subr.bf16.mxu0 0
        %440 = vmatpush1.bf16.xpose.msra.mxu0 0
        %441 = vmatprep.subr.bf16.mxu0 0
        %442 = vmatpush1.bf16.xpose.msra.mxu0 0
        %443 = vmatprep.subr.bf16.mxu0 0
        %444 = vmatpush1.bf16.xpose.msra.mxu0 0
        %445 = vmatprep.subr.bf16.mxu0 0
        %446 = vmatpush1.bf16.xpose.msra.mxu0 0
        %447 = vmatprep.subr.bf16.mxu0 0
        %448 = vmatpush1.bf16.xpose.msra.mxu0 0
        %449 = vmatprep.subr.bf16.mxu0 0
        %450 = vmatpush1.bf16.xpose.msra.mxu0 0
        %451 = vmatprep.subr.bf16.mxu0 0
        %452 = vmatpush1.bf16.xpose.msra.mxu0 0
        %453 = vmatprep.subr.bf16.mxu0 0
        %454 = vmatpush1.bf16.xpose.msra.mxu0 0
        %455 = vmatprep.subr.bf16.mxu0 0
        %456 = vmatpush1.bf16.xpose.msra.mxu0 0
        %457 = vmatprep.subr.bf16.mxu0 0
        %458 = vmatpush1.bf16.xpose.msra.mxu0 0
        %459 = vmatprep.subr.bf16.mxu0 0
        %460 = vmatpush1.bf16.xpose.msra.mxu0 0
        %461 = vmatprep.mubr.bf16.mxu0 0
        %462 = vmatmul.mubr.bf16.gmra.mrb[0].mxu0 %v418
        %v463 = vpop.f32.mrb[0].mxu0
        %v464 = vadd.f32 0.0, %v463
        %v465 = vpop.f32.mrb[0].mxu0
        %v466 = vpop.f32.mrb[0].mxu0
        %v467 = vadd.f32 0.0, %v466
        %v468 = vpop.f32.mrb[0].mxu0
        %469 = vmatprep.mubr.bf16.mxu0 0
        %470 = vmatmul.mubr.bf16.gmra.mrb[0].mxu0 %v421
        %v471 = vpop.f32.mrb[0].mxu0
        %v472 = vadd.f32 0.0, %v471
        %v473 = vpop.f32.mrb[0].mxu0
        %v474 = vpop.f32.mrb[0].mxu0
        %v475 = vpop.f32.mrb[0].mxu0
        %476 = vdwg.mxu0
        %vm477 = vcmask 138240
        %v478 = vsel %vm477, %v464, -inf
        %479 = vmax.xlane.f32.xlu0 %v478
        %v480 = vpop.xlane.xlu0 %479
        %v481 = vsel %vm477, %v467, -inf
        %482 = vmax.xlane.f32.xlu0 %v481
        %v483 = vpop.xlane.xlu0 %482
        %vm484 = vcmask 131072
        %v485 = vsel %vm484, %v472, -inf
        %486 = vmax.xlane.f32.xlu0 %v485
        %v487 = vpop.xlane.xlu0 %486
        %v488 = vsub.f32 %v464, %v480
        %v489 = vsub.f32 %v467, %v483
        %v490 = vsub.f32 %v472, %v487
        %v491 = vmul.f32 %v488, 1.442695
        %v492 = vpow.pop %v491
        %v493 = vmul.f32 %v489, 1.442695
        %v494 = vpow.pop %v493
        %v495 = vmul.f32 %v490, 1.442695
        %v496 = vpow.pop %v495
        %v497 = vsel %vm477, %v492, 0.0
        %498 = vadd.xlane.f32.xlu0 %v497
        %v499 = vpop.xlane.xlu0 %498
        %v500 = vsel %vm477, %v494, 0.0
        %501 = vadd.xlane.f32.xlu0 %v500
        %v502 = vpop.xlane.xlu0 %501
        %v503 = vsel %vm484, %v496, 0.0
        %504 = vadd.xlane.f32.xlu0 %v503
        %v505 = vpop.xlane.xlu0 %504
        %v506 = vrcp.pop %v499
        %v507 = vrcp.pop %v502
        %v508 = vrcp.pop %v505
        %v509 = vmul.f32 %v492, %v506
        %v510 = vmul.f32 %v494, %v507
        %v511 = vmul.f32 %v496, %v508
        %v512 = vpack.c.bf16 %v510, %v509
        %v513 = vpack.c.bf16 %v511, %v511
        %v517 = vunpack.c.l.b16 %v397
        %v518 = vunpack.c.l.b16 %v398
        %v519 = vunpack.c.l.b16 %v399
        %v520 = vpack.c.b16 %v518, %v517
        %v521 = vpack.c.b16 %v519, %v519
        %v524 = vsel %vm477, %v512, 0
        %v527 = vsel %vm477, %v513, 0
        %vm529 = vcmask 1040384
        %v530 = vsel 0, 4294967295, 65535
        %v531 = vsel %vm529, %v530, 0
        %v533 = vand.u32 %v521, %v531
        %535 = vmatprep.subr.bf16.mxu0 0
        %536 = vmatpush1.bf16.msra.mxu0 %v520
        %537 = vmatprep.subr.bf16.mxu0 0
        %538 = vmatpush1.bf16.msra.mxu0 %v533
        %539 = vmatprep.subr.bf16.mxu0 0
        %540 = vmatpush1.bf16.msra.mxu0 0
        %541 = vmatprep.subr.bf16.mxu0 0
        %542 = vmatpush1.bf16.msra.mxu0 0
        %543 = vmatprep.subr.bf16.mxu0 0
        %544 = vmatpush1.bf16.msra.mxu0 0
        %545 = vmatprep.subr.bf16.mxu0 0
        %546 = vmatpush1.bf16.msra.mxu0 0
        %547 = vmatprep.subr.bf16.mxu0 0
        %548 = vmatpush1.bf16.msra.mxu0 0
        %549 = vmatprep.subr.bf16.mxu0 0
        %550 = vmatpush1.bf16.msra.mxu0 0
        %551 = vmatprep.subr.bf16.mxu0 0
        %552 = vmatpush1.bf16.msra.mxu0 0
        %553 = vmatprep.subr.bf16.mxu0 0
        %554 = vmatpush1.bf16.msra.mxu0 0
        %555 = vmatprep.subr.bf16.mxu0 0
        %556 = vmatpush1.bf16.msra.mxu0 0
        %557 = vmatprep.subr.bf16.mxu0 0
        %558 = vmatpush1.bf16.msra.mxu0 0
        %559 = vmatprep.subr.bf16.mxu0 0
        %560 = vmatpush1.bf16.msra.mxu0 0
        %561 = vmatprep.subr.bf16.mxu0 0
        %562 = vmatpush1.bf16.msra.mxu0 0
        %563 = vmatprep.subr.bf16.mxu0 0
        %564 = vmatpush1.bf16.msra.mxu0 0
        %565 = vmatprep.subr.bf16.mxu0 0
        %566 = vmatpush1.bf16.msra.mxu0 0
        %567 = vmatprep.mubr.bf16.mxu0 0
        %568 = vmatmul.mubr.bf16.gmra.mrb[0].mxu0 %v524
        %v569 = vpop.f32.mrb[0].mxu0
        %v570 = vadd.f32 0.0, %v569
        %v571 = vpop.f32.mrb[0].mxu0
        %v572 = vpop.f32.mrb[0].mxu0
        %v573 = vadd.f32 0.0, %v572
        %v574 = vpop.f32.mrb[0].mxu0
        %575 = vmatprep.mubr.bf16.mxu0 0
        %576 = vmatmul.mubr.bf16.gmra.mrb[0].mxu0 %v527
        %v577 = vpop.f32.mrb[0].mxu0
        %v578 = vadd.f32 0.0, %v577
        %v579 = vpop.f32.mrb[0].mxu0
        %v580 = vpop.f32.mrb[0].mxu0
        %v581 = vpop.f32.mrb[0].mxu0
        %582 = vdwg.mxu0
        %v583 = vpack.c.bf16 %v573, %v570
        %v584 = vpack.c.bf16 %v578, %v578
        %v587 = vunpack.c.l.b16 %v583
        %v588 = vunpack.c.h.b16 %v583
        %v589 = vunpack.c.l.b16 %v584
        %v590 = vpack.c.b16 %v587, %v587
        %v591 = vpack.c.b16 %v588, %v588
        %v592 = vpack.c.b16 %v589, %v589
        %vm596 = vcmask 519168
        %597 = vst.msk [vmem:[%s383] sm:$0xf] %vm596, %v590
        %598 = vst.msk [vmem:[%s383 + $0x4] sm:$0xf] %vm596, %v591
        %vm599 = vcmask 516096
        %vm600 = vsmask.f32 256
        %vm601 = vmand %vm599, %vm600
        %v602 = vld [vmem:[%s383 + $0x8] sm:$0x1]
        %v603 = vsel %vm601, %v592, %v602
        %604 = vst [vmem:[%s383 + $0x8] sm:$0x1] %v603
        %605 = vrot.lane.b32.xlu0 %v406, 64
        %v606 = vpop.permute.xlu0 %605
        %607 = vrot.lane.b32.xlu0 %v407, 64
        %v608 = vpop.permute.xlu0 %607
        %609 = vrot.lane.b32.xlu0 %v414, 64
        %v610 = vpop.permute.xlu0 %609
        %611 = vrot.lane.b32.xlu0 %v415, 64
        %v612 = vpop.permute.xlu0 %611
        %v614 = vsel %vm416, %v606, 0
        %v617 = vsel %vm416, %v608, 0
        %v620 = vsel %vm416, %v610, 0
        %v623 = vsel %vm416, %v612, 0
        %625 = vmatprep.subr.bf16.mxu0 0
        %626 = vmatpush1.bf16.xpose.msra.mxu0 %v620
        %627 = vmatprep.subr.bf16.mxu0 0
        %628 = vmatpush1.bf16.xpose.msra.mxu0 %v623
        %629 = vmatprep.subr.bf16.mxu0 0
        %630 = vmatpush1.bf16.xpose.msra.mxu0 0
        %631 = vmatprep.subr.bf16.mxu0 0
        %632 = vmatpush1.bf16.xpose.msra.mxu0 0
        %633 = vmatprep.subr.bf16.mxu0 0
        %634 = vmatpush1.bf16.xpose.msra.mxu0 0
        %635 = vmatprep.subr.bf16.mxu0 0
        %636 = vmatpush1.bf16.xpose.msra.mxu0 0
        %637 = vmatprep.subr.bf16.mxu0 0
        %638 = vmatpush1.bf16.xpose.msra.mxu0 0
        %639 = vmatprep.subr.bf16.mxu0 0
        %640 = vmatpush1.bf16.xpose.msra.mxu0 0
        %641 = vmatprep.subr.bf16.mxu0 0
        %642 = vmatpush1.bf16.xpose.msra.mxu0 0
        %643 = vmatprep.subr.bf16.mxu0 0
        %644 = vmatpush1.bf16.xpose.msra.mxu0 0
        %645 = vmatprep.subr.bf16.mxu0 0
        %646 = vmatpush1.bf16.xpose.msra.mxu0 0
        %647 = vmatprep.subr.bf16.mxu0 0
        %648 = vmatpush1.bf16.xpose.msra.mxu0 0
        %649 = vmatprep.subr.bf16.mxu0 0
        %650 = vmatpush1.bf16.xpose.msra.mxu0 0
        %651 = vmatprep.subr.bf16.mxu0 0
        %652 = vmatpush1.bf16.xpose.msra.mxu0 0
        %653 = vmatprep.subr.bf16.mxu0 0
        %654 = vmatpush1.bf16.xpose.msra.mxu0 0
        %655 = vmatprep.subr.bf16.mxu0 0
        %656 = vmatpush1.bf16.xpose.msra.mxu0 0
        %657 = vmatprep.mubr.bf16.mxu0 0
        %658 = vmatmul.mubr.bf16.gmra.mrb[0].mxu0 %v614
        %v659 = vpop.f32.mrb[0].mxu0
        %v660 = vadd.f32 0.0, %v659
        %v661 = vpop.f32.mrb[0].mxu0
        %v662 = vpop.f32.mrb[0].mxu0
        %v663 = vadd.f32 0.0, %v662
        %v664 = vpop.f32.mrb[0].mxu0
        %665 = vmatprep.mubr.bf16.mxu0 0
        %666 = vmatmul.mubr.bf16.gmra.mrb[0].mxu0 %v617
        %v667 = vpop.f32.mrb[0].mxu0
        %v668 = vadd.f32 0.0, %v667
        %v669 = vpop.f32.mrb[0].mxu0
        %v670 = vpop.f32.mrb[0].mxu0
        %v671 = vpop.f32.mrb[0].mxu0
        %672 = vdwg.mxu0
        %v673 = vsel %vm477, %v660, -inf
        %674 = vmax.xlane.f32.xlu0 %v673
        %v675 = vpop.xlane.xlu0 %674
        %v676 = vsel %vm477, %v663, -inf
        %677 = vmax.xlane.f32.xlu0 %v676
        %v678 = vpop.xlane.xlu0 %677
        %v679 = vsel %vm484, %v668, -inf
        %680 = vmax.xlane.f32.xlu0 %v679
        %v681 = vpop.xlane.xlu0 %680
        %v682 = vsub.f32 %v660, %v675
        %v683 = vsub.f32 %v663, %v678
        %v684 = vsub.f32 %v668, %v681
        %v685 = vmul.f32 %v682, 1.442695
        %v686 = vpow.pop %v685
        %v687 = vmul.f32 %v683, 1.442695
        %v688 = vpow.pop %v687
        %v689 = vmul.f32 %v684, 1.442695
        %v690 = vpow.pop %v689
        %v691 = vsel %vm477, %v686, 0.0
        %692 = vadd.xlane.f32.xlu0 %v691
        %v693 = vpop.xlane.xlu0 %692
        %v694 = vsel %vm477, %v688, 0.0
        %695 = vadd.xlane.f32.xlu0 %v694
        %v696 = vpop.xlane.xlu0 %695
        %v697 = vsel %vm484, %v690, 0.0
        %698 = vadd.xlane.f32.xlu0 %v697
        %v699 = vpop.xlane.xlu0 %698
        %v700 = vrcp.pop %v693
        %v701 = vrcp.pop %v696
        %v702 = vrcp.pop %v699
        %v703 = vmul.f32 %v686, %v700
        %v704 = vmul.f32 %v688, %v701
        %v705 = vmul.f32 %v690, %v702
        %v706 = vpack.c.bf16 %v704, %v703
        %v707 = vpack.c.bf16 %v705, %v705
        %708 = vrot.lane.b32.xlu0 %v520, 64
        %v709 = vpop.permute.xlu0 %708
        %710 = vrot.lane.b32.xlu0 %v521, 64
        %v711 = vpop.permute.xlu0 %710
        %v714 = vsel %vm477, %v706, 0
        %v717 = vsel %vm477, %v707, 0
        %v720 = vand.u32 %v711, %v531
        %722 = vmatprep.subr.bf16.mxu0 0
        %723 = vmatpush1.bf16.msra.mxu0 %v709
        %724 = vmatprep.subr.bf16.mxu0 0
        %725 = vmatpush1.bf16.msra.mxu0 %v720
        %726 = vmatprep.subr.bf16.mxu0 0
        %727 = vmatpush1.bf16.msra.mxu0 0
        %728 = vmatprep.subr.bf16.mxu0 0
        %729 = vmatpush1.bf16.msra.mxu0 0
        %730 = vmatprep.subr.bf16.mxu0 0
        %731 = vmatpush1.bf16.msra.mxu0 0
        %732 = vmatprep.subr.bf16.mxu0 0
        %733 = vmatpush1.bf16.msra.mxu0 0
        %734 = vmatprep.subr.bf16.mxu0 0
        %735 = vmatpush1.bf16.msra.mxu0 0
        %736 = vmatprep.subr.bf16.mxu0 0
        %737 = vmatpush1.bf16.msra.mxu0 0
        %738 = vmatprep.subr.bf16.mxu0 0
        %739 = vmatpush1.bf16.msra.mxu0 0
        %740 = vmatprep.subr.bf16.mxu0 0
        %741 = vmatpush1.bf16.msra.mxu0 0
        %742 = vmatprep.subr.bf16.mxu0 0
        %743 = vmatpush1.bf16.msra.mxu0 0
        %744 = vmatprep.subr.bf16.mxu0 0
        %745 = vmatpush1.bf16.msra.mxu0 0
        %746 = vmatprep.subr.bf16.mxu0 0
        %747 = vmatpush1.bf16.msra.mxu0 0
        %748 = vmatprep.subr.bf16.mxu0 0
        %749 = vmatpush1.bf16.msra.mxu0 0
        %750 = vmatprep.subr.bf16.mxu0 0
        %751 = vmatpush1.bf16.msra.mxu0 0
        %752 = vmatprep.subr.bf16.mxu0 0
        %753 = vmatpush1.bf16.msra.mxu0 0
        %754 = vmatprep.mubr.bf16.mxu0 0
        %755 = vmatmul.mubr.bf16.gmra.mrb[0].mxu0 %v714
        %v756 = vpop.f32.mrb[0].mxu0
        %v757 = vadd.f32 0.0, %v756
        %v758 = vpop.f32.mrb[0].mxu0
        %v759 = vpop.f32.mrb[0].mxu0
        %v760 = vadd.f32 0.0, %v759
        %v761 = vpop.f32.mrb[0].mxu0
        %762 = vmatprep.mubr.bf16.mxu0 0
        %763 = vmatmul.mubr.bf16.gmra.mrb[0].mxu0 %v717
        %v764 = vpop.f32.mrb[0].mxu0
        %v765 = vadd.f32 0.0, %v764
        %v766 = vpop.f32.mrb[0].mxu0
        %v767 = vpop.f32.mrb[0].mxu0
        %v768 = vpop.f32.mrb[0].mxu0
        %769 = vdwg.mxu0
        %v770 = vpack.c.bf16 %v760, %v757
        %v771 = vpack.c.bf16 %v765, %v765
        %v774 = vunpack.c.l.b16 %v770
        %v775 = vunpack.c.h.b16 %v770
        %v776 = vunpack.c.l.b16 %v771
        %v777 = vpack.c.b16 %v774, %v774
        %v778 = vpack.c.b16 %v775, %v775
        %v779 = vpack.c.b16 %v776, %v776
        %780 = vrot.lane.b32.xlu0 %v777, 64
        %v781 = vpop.permute.xlu0 %780
        %782 = vrot.lane.b32.xlu0 %v778, 64
        %v783 = vpop.permute.xlu0 %782
        %784 = vrot.lane.b32.xlu0 %v779, 64
        %v785 = vpop.permute.xlu0 %784
        %vm789 = vcmask 1043968
        %790 = vst.msk [vmem:[%s383] sm:$0xf] %vm789, %v781
        %791 = vst.msk [vmem:[%s383 + $0x4] sm:$0xf] %vm789, %v783
        %vm792 = vcmask 1040896
        %vm793 = vmand %vm792, %vm600
        %v794 = vld [vmem:[%s383 + $0x8] sm:$0x1]
        %v795 = vsel %vm793, %v785, %v794
        %796 = vst [vmem:[%s383 + $0x8] sm:$0x1] %v795
        %s797 = sand.u32 %s124, 1
        %s798 = sand.u32 %s124, 1
        %s799 = smul.addr %s798, 12
        %s800 = scalar_lea.vmem [#allocation5], %s799
        // Predicated region
        $region156: #{encoder_forward.19} parent=142 // pred_check
          %p801 = pneg %p134
        $region157: #{encoder_forward.19} parent=142 // pred_check_branch
          %803 = sbr.rel (%p801) target = $region159
        $region158: #{encoder_forward.19} parent=142 // pred_region
          %s804 = smul.addr %s18, 6
          %s805 = sadd.s32 %s19, %s804
          %s806 = smul.addr %s805, 4
          %s807 = scalar_lea.vmem %s3, %s806
          // Predicated region
          $region160: #{encoder_forward.19} parent=158 // pred_check
            _
          $region161: #{encoder_forward.19} parent=158 // pred_check_branch
            %809 = sbr.rel (0) target = $region163
          $region162: #{encoder_forward.19} parent=158 // pred_region
            // Predicated region
            $region164: #{encoder_forward.19} parent=162 // pred_check
              _
            $region165: #{encoder_forward.19} parent=162 // pred_check_branch
              %811 = sbr.rel target = $region167
            $region166: #{encoder_forward.19} parent=162 // pred_region
              // Predicated region
              $region179: #{encoder_forward.19} parent=166 // pred_check
                _
              $region180: #{encoder_forward.19} parent=166 // pred_check_branch
                %830 = sbr.rel (0) target = $region182
              $region181: #{encoder_forward.19} parent=166 // pred_region
                loop: start=0, step=1, limit=1
                $region183: #{encoder_forward.19} parent=181 // loop_pre_header
                  _
                $region184: #{encoder_forward.19} parent=181 // loop_header
                  %s832 = sphi 0, %s836
                  %p833 = scmp.ge.s32.totalorder %s832, 1
                  %s837 = sphi %s800, %s800
                  %s838 = sphi %s807, %s807
                $region185: #{encoder_forward.19} parent=181 // loop_header_branch
                  %835 = sbr.rel (%p833) target = $region189
                $region186: #{encoder_forward.19} parent=181 // loop_body
                  _
                $region187: #{encoder_forward.19} parent=181 // loop_footer
                  %s836 = sadd.s32 1, %s832
                $region188: #{encoder_forward.19} parent=181 // loop_footer_branch
                  %831 = sbr.rel target = $region184
                $region189: #{encoder_forward.19} parent=181 // loop_exit
                  _
                loop: start=0, step=1, limit=1
                $region190: #{encoder_forward.19} parent=181 // loop_pre_header
                  _
                $region191: #{encoder_forward.19} parent=181 // loop_header
                  %s841 = sphi 0, %s845
                  %p842 = scmp.ge.s32.totalorder %s841, 1
                  %s846 = sphi %s800, %s800
                  %s847 = sphi %s807, %s807
                $region192: #{encoder_forward.19} parent=181 // loop_header_branch
                  %844 = sbr.rel (%p842) target = $region196
                $region193: #{encoder_forward.19} parent=181 // loop_body
                  %v848 = vld [vmem:[%s846] sm:$0xf]
                  %849 = vst [vmem:[%s847] sm:$0xf] %v848
                  %v850 = vld [vmem:[%s846 + $0x4] sm:$0xf]
                  %851 = vst [vmem:[%s847 + $0x8] sm:$0xf] %v850
                  %v852 = vld [vmem:[%s846 + $0x8] sm:$0xf]
                  %853 = vst [vmem:[%s847 + $0x10] sm:$0xf] %v852
                $region194: #{encoder_forward.19} parent=181 // loop_footer
                  %s845 = sadd.s32 1, %s841
                $region195: #{encoder_forward.19} parent=181 // loop_footer_branch
                  %840 = sbr.rel target = $region191
                $region196: #{encoder_forward.19} parent=181 // loop_exit
                  _
              $region182: #{encoder_forward.19} parent=166 // pred_fallthru
                _
            $region167: #{encoder_forward.19} parent=162 // pred_fallthru
              _
            // Predicated region
            $region168: #{encoder_forward.19} parent=162 // pred_check
              _
            $region169: #{encoder_forward.19} parent=162 // pred_check_branch
              %813 = sbr.rel (0) target = $region171
            $region170: #{encoder_forward.19} parent=162 // pred_region
              loop: start=0, step=1, limit=1
              $region172: #{encoder_forward.19} parent=170 // loop_pre_header
                _
              $region173: #{encoder_forward.19} parent=170 // loop_header
                %s816 = sphi 0, %s820
                %p817 = scmp.ge.s32.totalorder %s816, 1
                %s821 = sphi %s800, %s800
                %s822 = sphi %s807, %s807
              $region174: #{encoder_forward.19} parent=170 // loop_header_branch
                %819 = sbr.rel (%p817) target = $region178
              $region175: #{encoder_forward.19} parent=170 // loop_body
                %v823 = vld [vmem:[%s821] sm:$0xf]
                %824 = vst [vmem:[%s822] sm:$0xf] %v823
                %v825 = vld [vmem:[%s821 + $0x4] sm:$0xf]
                %826 = vst [vmem:[%s822 + $0x8] sm:$0xf] %v825
                %v827 = vld [vmem:[%s821 + $0x8] sm:$0xf]
                %828 = vst [vmem:[%s822 + $0x10] sm:$0xf] %v827
              $region176: #{encoder_forward.19} parent=170 // loop_footer
                %s820 = sadd.s32 1, %s816
              $region177: #{encoder_forward.19} parent=170 // loop_footer_branch
                %815 = sbr.rel target = $region173
              $region178: #{encoder_forward.19} parent=170 // loop_exit
                _
            $region171: #{encoder_forward.19} parent=162 // pred_fallthru
              _
          $region163: #{encoder_forward.19} parent=158 // pred_fallthru
            _
          %854 = vnop
        $region159: #{encoder_forward.19} parent=142 // pred_fallthru
          _
      $region143: #{encoder_forward.19} parent=5 // pred_fallthru
        _
      %p855 = scmp.le.s32.totalorder 2, %s9
      // Predicated region
      $region197: #{encoder_forward.19} parent=5 // pred_check
        %p856 = pneg %p855
      $region198: #{encoder_forward.19} parent=5 // pred_check_branch
        %858 = sbr.rel (%p856) target = $region200
      $region199: #{encoder_forward.19} parent=5 // pred_region
        %s859 = ssub.s32 %s9, 2
        // Predicated region
        $region201: #{encoder_forward.19} parent=199 // pred_check
          %p860 = pneg %p140
        $region202: #{encoder_forward.19} parent=199 // pred_check_branch
          %862 = sbr.rel (%p860) target = $region204
        $region203: #{encoder_forward.19} parent=199 // pred_region
          %s863 = sand.u32 %s125, 1
          %s864 = sand.u32 %s125, 1
          %s865 = smul.addr %s864, 12
          %s866 = scalar_lea.vmem [#allocation5], %s865
        $region204: #{encoder_forward.19} parent=199 // pred_fallthru
          _
      $region200: #{encoder_forward.19} parent=5 // pred_fallthru
        _
    $region6: #{encoder_forward.19} parent=1 // loop_footer
      %s13 = sadd.s32 1, %s9
    $region7: #{encoder_forward.19} parent=1 // loop_footer_branch
      %8 = sbr.rel target = $region3
    $region8: #{encoder_forward.19} parent=1 // loop_exit
      _

// kernel: encoder_forward.20
$region0: #{encoder_forward.20}
  #allocation0 [shape = 'u32[]', space=smem, size = 0x4, offset = 0x4, fixed_abs, tag = 'smem constant byte address 0x4 - core index']
  #allocation1 [shape = 'u32[144,128]{1,0:T(1,128)}', space=vmem, size = 0x12000, scoped, tag = 'internal scratch']
  %s0 = inlined_call_operand.vmem [shape: bf16[34,256], index: 0, kind: input, shape index: {}]
  %s1 = inlined_call_operand.vmem [shape: bf16[256,256], index: 1, kind: input, shape index: {}]
  %s2 = inlined_call_operand.vmem [shape: f32[1,256], index: 2, kind: input, shape index: {}]
  %s3 = inlined_call_operand.vmem [shape: f32[34,256], index: 3, kind: input, shape index: {}]
  %s4 = inlined_call_operand.vmem [shape: f32[34,256], index: 4, kind: output, shape index: {}]
  %s5 = sld [smem:[#allocation0]]
  $region26: #{encoder_forward.20} parent=0
    _
  %s7 = ssub.s32 1, %s5
  %s8 = scalar_select 0, %s7, %s5
  // Predicated region
  $region2: #{encoder_forward.20} parent=0 // pred_check
    _
  $region3: #{encoder_forward.20} parent=0 // pred_check_branch
    %10 = sbr.rel (0) target = $region5
  $region4: #{encoder_forward.20} parent=0 // pred_region
    _
  $region5: #{encoder_forward.20} parent=0 // pred_fallthru
    _
  // Predicated region
  $region6: #{encoder_forward.20} parent=0 // pred_check
    _
  $region7: #{encoder_forward.20} parent=0 // pred_check_branch
    %12 = sbr.rel (0) target = $region9
  $region8: #{encoder_forward.20} parent=0 // pred_region
    _
  $region9: #{encoder_forward.20} parent=0 // pred_fallthru
    _
  // Predicated region
  $region10: #{encoder_forward.20} parent=0 // pred_check
    _
  $region11: #{encoder_forward.20} parent=0 // pred_check_branch
    %14 = sbr.rel (0) target = $region13
  $region12: #{encoder_forward.20} parent=0 // pred_region
    _
  $region13: #{encoder_forward.20} parent=0 // pred_fallthru
    _
  // Predicated region
  $region14: #{encoder_forward.20} parent=0 // pred_check
    _
  $region15: #{encoder_forward.20} parent=0 // pred_check_branch
    %16 = sbr.rel (0) target = $region17
  $region16: #{encoder_forward.20} parent=0 // pred_region
    _
  $region17: #{encoder_forward.20} parent=0 // pred_fallthru
    _
  %v17 = vld [vmem:[%s0] sm:$0xff]
  %v18 = vld [vmem:[%s0 + $0x8] sm:$0xff]
  %v19 = vld [vmem:[%s0 + $0x10] sm:$0xff]
  %v20 = vld [vmem:[%s0 + $0x18] sm:$0xff]
  %v21 = vld [vmem:[%s0 + $0x20] sm:$0x11]
  %v22 = vld [vmem:[%s1] sm:$0xff]
  %v23 = vld [vmem:[%s1 + $0x8] sm:$0xff]
  %v24 = vld [vmem:[%s1 + $0x10] sm:$0xff]
  %v25 = vld [vmem:[%s1 + $0x18] sm:$0xff]
  %v26 = vld [vmem:[%s1 + $0x20] sm:$0xff]
  %v27 = vld [vmem:[%s1 + $0x28] sm:$0xff]
  %v28 = vld [vmem:[%s1 + $0x30] sm:$0xff]
  %v29 = vld [vmem:[%s1 + $0x38] sm:$0xff]
  %v30 = vld [vmem:[%s1 + $0x40] sm:$0xff]
  %v31 = vld [vmem:[%s1 + $0x48] sm:$0xff]
  %v32 = vld [vmem:[%s1 + $0x50] sm:$0xff]
  %v33 = vld [vmem:[%s1 + $0x58] sm:$0xff]
  %v34 = vld [vmem:[%s1 + $0x60] sm:$0xff]
  %v35 = vld [vmem:[%s1 + $0x68] sm:$0xff]
  %v36 = vld [vmem:[%s1 + $0x70] sm:$0xff]
  %v37 = vld [vmem:[%s1 + $0x78] sm:$0xff]
  %v38 = vld [vmem:[%s1 + $0x80] sm:$0xff]
  %v39 = vld [vmem:[%s1 + $0x88] sm:$0xff]
  %v40 = vld [vmem:[%s1 + $0x90] sm:$0xff]
  %v41 = vld [vmem:[%s1 + $0x98] sm:$0xff]
  %v42 = vld [vmem:[%s1 + $0xa0] sm:$0xff]
  %v43 = vld [vmem:[%s1 + $0xa8] sm:$0xff]
  %v44 = vld [vmem:[%s1 + $0xb0] sm:$0xff]
  %v45 = vld [vmem:[%s1 + $0xb8] sm:$0xff]
  %v46 = vld [vmem:[%s1 + $0xc0] sm:$0xff]
  %v47 = vld [vmem:[%s1 + $0xc8] sm:$0xff]
  %v48 = vld [vmem:[%s1 + $0xd0] sm:$0xff]
  %v49 = vld [vmem:[%s1 + $0xd8] sm:$0xff]
  %v50 = vld [vmem:[%s1 + $0xe0] sm:$0xff]
  %v51 = vld [vmem:[%s1 + $0xe8] sm:$0xff]
  %v52 = vld [vmem:[%s1 + $0xf0] sm:$0xff]
  %v53 = vld [vmem:[%s1 + $0xf8] sm:$0xff]
  %v54 = vld [vmem:[%s2] sm:$0x3]
  %v56 = vlaneseq
  %v57 = vshrl.u32 %v56, 7
  %v58 = vsub.s32 0, %v57
  %v59 = vrot.slane %v54, %v58
  %v60 = vlaneseq
  %v61 = vshrl.u32 %v60, 7
  %v62 = vsub.s32 1, %v61
  %v63 = vrot.slane %v54, %v62
  %v71 = vunpack.c.l.b16 %v17
  %v72 = vunpack.c.h.b16 %v17
  %v73 = vunpack.c.l.b16 %v18
  %v74 = vunpack.c.h.b16 %v18
  %v75 = vunpack.c.l.b16 %v19
  %v76 = vunpack.c.h.b16 %v19
  %v77 = vunpack.c.l.b16 %v20
  %v78 = vunpack.c.h.b16 %v20
  %v79 = vunpack.c.l.b16 %v21
  %v80 = vunpack.c.h.b16 %v21
  %v81 = vpack.c.b16 %v73, %v71
  %v82 = vpack.c.b16 %v74, %v72
  %v83 = vpack.c.b16 %v77, %v75
  %v84 = vpack.c.b16 %v78, %v76
  %v85 = vpack.c.b16 %v79, %v79
  %v86 = vpack.c.b16 %v80, %v80
  %v125 = vunpack.c.l.b16 %v22
  %v126 = vunpack.c.h.b16 %v22
  %v127 = vunpack.c.l.b16 %v23
  %v128 = vunpack.c.h.b16 %v23
  %v129 = vunpack.c.l.b16 %v24
  %v130 = vunpack.c.h.b16 %v24
  %v131 = vunpack.c.l.b16 %v25
  %v132 = vunpack.c.h.b16 %v25
  %v133 = vunpack.c.l.b16 %v26
  %v134 = vunpack.c.h.b16 %v26
  %v135 = vunpack.c.l.b16 %v27
  %v136 = vunpack.c.h.b16 %v27
  %v137 = vunpack.c.l.b16 %v28
  %v138 = vunpack.c.h.b16 %v28
  %v139 = vunpack.c.l.b16 %v29
  %v140 = vunpack.c.h.b16 %v29
  %v141 = vunpack.c.l.b16 %v30
  %v142 = vunpack.c.h.b16 %v30
  %v143 = vunpack.c.l.b16 %v31
  %v144 = vunpack.c.h.b16 %v31
  %v145 = vunpack.c.l.b16 %v32
  %v146 = vunpack.c.h.b16 %v32
  %v147 = vunpack.c.l.b16 %v33
  %v148 = vunpack.c.h.b16 %v33
  %v149 = vunpack.c.l.b16 %v34
  %v150 = vunpack.c.h.b16 %v34
  %v151 = vunpack.c.l.b16 %v35
  %v152 = vunpack.c.h.b16 %v35
  %v153 = vunpack.c.l.b16 %v36
  %v154 = vunpack.c.h.b16 %v36
  %v155 = vunpack.c.l.b16 %v37
  %v156 = vunpack.c.h.b16 %v37
  %v157 = vunpack.c.l.b16 %v38
  %v158 = vunpack.c.h.b16 %v38
  %v159 = vunpack.c.l.b16 %v39
  %v160 = vunpack.c.h.b16 %v39
  %v161 = vunpack.c.l.b16 %v40
  %v162 = vunpack.c.h.b16 %v40
  %v163 = vunpack.c.l.b16 %v41
  %v164 = vunpack.c.h.b16 %v41
  %v165 = vunpack.c.l.b16 %v42
  %v166 = vunpack.c.h.b16 %v42
  %v167 = vunpack.c.l.b16 %v43
  %v168 = vunpack.c.h.b16 %v43
  %v169 = vunpack.c.l.b16 %v44
  %v170 = vunpack.c.h.b16 %v44
  %v171 = vunpack.c.l.b16 %v45
  %v172 = vunpack.c.h.b16 %v45
  %v173 = vunpack.c.l.b16 %v46
  %v174 = vunpack.c.h.b16 %v46
  %v175 = vunpack.c.l.b16 %v47
  %v176 = vunpack.c.h.b16 %v47
  %v177 = vunpack.c.l.b16 %v48
  %v178 = vunpack.c.h.b16 %v48
  %v179 = vunpack.c.l.b16 %v49
  %v180 = vunpack.c.h.b16 %v49
  %v181 = vunpack.c.l.b16 %v50
  %v182 = vunpack.c.h.b16 %v50
  %v183 = vunpack.c.l.b16 %v51
  %v184 = vunpack.c.h.b16 %v51
  %v185 = vunpack.c.l.b16 %v52
  %v186 = vunpack.c.h.b16 %v52
  %v187 = vunpack.c.l.b16 %v53
  %v188 = vunpack.c.h.b16 %v53
  %v189 = vpack.c.b16 %v127, %v125
  %v190 = vpack.c.b16 %v128, %v126
  %v191 = vpack.c.b16 %v131, %v129
  %v192 = vpack.c.b16 %v132, %v130
  %v193 = vpack.c.b16 %v135, %v133
  %v194 = vpack.c.b16 %v136, %v134
  %v195 = vpack.c.b16 %v139, %v137
  %v196 = vpack.c.b16 %v140, %v138
  %v197 = vpack.c.b16 %v143, %v141
  %v198 = vpack.c.b16 %v144, %v142
  %v199 = vpack.c.b16 %v147, %v145
  %v200 = vpack.c.b16 %v148, %v146
  %v201 = vpack.c.b16 %v151, %v149
  %v202 = vpack.c.b16 %v152, %v150
  %v203 = vpack.c.b16 %v155, %v153
  %v204 = vpack.c.b16 %v156, %v154
  %v205 = vpack.c.b16 %v159, %v157
  %v206 = vpack.c.b16 %v160, %v158
  %v207 = vpack.c.b16 %v163, %v161
  %v208 = vpack.c.b16 %v164, %v162
  %v209 = vpack.c.b16 %v167, %v165
  %v210 = vpack.c.b16 %v168, %v166
  %v211 = vpack.c.b16 %v171, %v169
  %v212 = vpack.c.b16 %v172, %v170
  %v213 = vpack.c.b16 %v175, %v173
  %v214 = vpack.c.b16 %v176, %v174
  %v215 = vpack.c.b16 %v179, %v177
  %v216 = vpack.c.b16 %v180, %v178
  %v217 = vpack.c.b16 %v183, %v181
  %v218 = vpack.c.b16 %v184, %v182
  %v219 = vpack.c.b16 %v187, %v185
  %v220 = vpack.c.b16 %v188, %v186
  %253 = vmatprep.subr.bf16.mxu0 %v190
  %254 = vmatpush1.bf16.msra.mxu0 %v189
  %255 = vmatprep.subr.bf16.mxu0 %v192
  %256 = vmatpush1.bf16.msra.mxu0 %v191
  %257 = vmatprep.subr.bf16.mxu0 %v194
  %258 = vmatpush1.bf16.msra.mxu0 %v193
  %259 = vmatprep.subr.bf16.mxu0 %v196
  %260 = vmatpush1.bf16.msra.mxu0 %v195
  %261 = vmatprep.subr.bf16.mxu0 %v198
  %262 = vmatpush1.bf16.msra.mxu0 %v197
  %263 = vmatprep.subr.bf16.mxu0 %v200
  %264 = vmatpush1.bf16.msra.mxu0 %v199
  %265 = vmatprep.subr.bf16.mxu0 %v202
  %266 = vmatpush1.bf16.msra.mxu0 %v201
  %267 = vmatprep.subr.bf16.mxu0 %v204
  %268 = vmatpush1.bf16.msra.mxu0 %v203
  %269 = vmatprep.subr.bf16.mxu0 %v206
  %270 = vmatpush1.bf16.msra.mxu0 %v205
  %271 = vmatprep.subr.bf16.mxu0 %v208
  %272 = vmatpush1.bf16.msra.mxu0 %v207
  %273 = vmatprep.subr.bf16.mxu0 %v210
  %274 = vmatpush1.bf16.msra.mxu0 %v209
  %275 = vmatprep.subr.bf16.mxu0 %v212
  %276 = vmatpush1.bf16.msra.mxu0 %v211
  %277 = vmatprep.subr.bf16.mxu0 %v214
  %278 = vmatpush1.bf16.msra.mxu0 %v213
  %279 = vmatprep.subr.bf16.mxu0 %v216
  %280 = vmatpush1.bf16.msra.mxu0 %v215
  %281 = vmatprep.subr.bf16.mxu0 %v218
  %282 = vmatpush1.bf16.msra.mxu0 %v217
  %283 = vmatprep.subr.bf16.mxu0 %v220
  %284 = vmatpush1.bf16.msra.mxu0 %v219
  %285 = vmatprep.mubr.bf16.mxu0 %v82
  %286 = vmatmul.mubr.bf16.gmra.mrb[0].mxu0 %v81
  %v287 = vpop.f32.mrb[0].mxu0
  %v288 = vadd.f32 %v59, %v287
  %v289 = vpop.f32.mrb[0].mxu0
  %v290 = vadd.f32 %v63, %v289
  %v291 = vpop.f32.mrb[0].mxu0
  %v292 = vadd.f32 %v59, %v291
  %v293 = vpop.f32.mrb[0].mxu0
  %v294 = vadd.f32 %v63, %v293
  %295 = vmatprep.mubr.bf16.mxu0 %v84
  %296 = vmatmul.mubr.bf16.gmra.mrb[0].mxu0 %v83
  %v297 = vpop.f32.mrb[0].mxu0
  %v298 = vadd.f32 %v59, %v297
  %v299 = vpop.f32.mrb[0].mxu0
  %v300 = vadd.f32 %v63, %v299
  %v301 = vpop.f32.mrb[0].mxu0
  %v302 = vadd.f32 %v59, %v301
  %v303 = vpop.f32.mrb[0].mxu0
  %v304 = vadd.f32 %v63, %v303
  %305 = vmatprep.mubr.bf16.mxu0 %v86
  %306 = vmatmul.mubr.bf16.gmra.mrb[0].mxu0 %v85
  %v307 = vpop.f32.mrb[0].mxu0
  %v308 = vadd.f32 %v59, %v307
  %v309 = vpop.f32.mrb[0].mxu0
  %v310 = vadd.f32 %v63, %v309
  %v311 = vpop.f32.mrb[0].mxu0
  %v312 = vpop.f32.mrb[0].mxu0
  %313 = vdwg.mxu0
  %v314 = vld [vmem:[%s3] sm:$0xff]
  %v315 = vld [vmem:[%s3 + $0x8] sm:$0xff]
  %v316 = vld [vmem:[%s3 + $0x10] sm:$0xff]
  %v317 = vld [vmem:[%s3 + $0x18] sm:$0xff]
  %v318 = vld [vmem:[%s3 + $0x20] sm:$0xff]
  %v319 = vld [vmem:[%s3 + $0x28] sm:$0xff]
  %v320 = vld [vmem:[%s3 + $0x30] sm:$0xff]
  %v321 = vld [vmem:[%s3 + $0x38] sm:$0xff]
  %v322 = vld [vmem:[%s3 + $0x40] sm:$0x3]
  %v323 = vld [vmem:[%s3 + $0x48] sm:$0x3]
  %v324 = vadd.f32 %v288, %v314
  %v325 = vadd.f32 %v290, %v315
  %v326 = vadd.f32 %v292, %v316
  %v327 = vadd.f32 %v294, %v317
  %v328 = vadd.f32 %v298, %v318
  %v329 = vadd.f32 %v300, %v319
  %v330 = vadd.f32 %v302, %v320
  %v331 = vadd.f32 %v304, %v321
  %v332 = vadd.f32 %v308, %v322
  %v333 = vadd.f32 %v310, %v323
  %334 = vst [vmem:[%s4] sm:$0xff] %v324
  %335 = vst [vmem:[%s4 + $0x8] sm:$0xff] %v325
  %336 = vst [vmem:[%s4 + $0x10] sm:$0xff] %v326
  %337 = vst [vmem:[%s4 + $0x18] sm:$0xff] %v327
  %338 = vst [vmem:[%s4 + $0x20] sm:$0xff] %v328
  %339 = vst [vmem:[%s4 + $0x28] sm:$0xff] %v329
  %340 = vst [vmem:[%s4 + $0x30] sm:$0xff] %v330
  %341 = vst [vmem:[%s4 + $0x38] sm:$0xff] %v331
  %342 = vst [vmem:[%s4 + $0x40] sm:$0x3] %v332
  %343 = vst [vmem:[%s4 + $0x48] sm:$0x3] %v333
  // Predicated region
  $region18: #{encoder_forward.20} parent=0 // pred_check
    _
  $region19: #{encoder_forward.20} parent=0 // pred_check_branch
    %345 = sbr.rel (0) target = $region21
  $region20: #{encoder_forward.20} parent=0 // pred_region
    _
  $region21: #{encoder_forward.20} parent=0 // pred_fallthru
    _
  // Predicated region
  $region22: #{encoder_forward.20} parent=0 // pred_check
    _
  $region23: #{encoder_forward.20} parent=0 // pred_check_branch
    %347 = sbr.rel (0) target = $region25
  $region24: #{encoder_forward.20} parent=0 // pred_region
    _
  $region25: #{encoder_forward.20} parent=0 // pred_fallthru
    _

// kernel: encoder_forward.18
$region0: #{encoder_forward.18}
  #allocation0 [shape = 'u32[]', space=smem, size = 0x4, offset = 0x4, fixed_abs, tag = 'smem constant byte address 0x4 - core index']
  #allocation1 [shape = 'u32[144,128]{1,0:T(1,128)}', space=vmem, size = 0x12000, scoped, tag = 'internal scratch']
  #allocation2 [shape = 'bf16[34,256]{1,0:T(8,128)(2,1)}', space=vmem, size = 0x5000, scoped, tag = 'scratch operand']
  %s0 = inlined_call_operand.vmem [shape: f32[34,256], index: 0, kind: input, shape index: {}]
  %s1 = inlined_call_operand.vmem [shape: f32[1,256], index: 1, kind: input, shape index: {}]
  %s2 = inlined_call_operand.vmem [shape: f32[1,256], index: 2, kind: input, shape index: {}]
  %s3 = inlined_call_operand.vmem [shape: bf16[256,768], index: 3, kind: input, shape index: {}]
  %s4 = inlined_call_operand.vmem [shape: f32[1,768], index: 4, kind: input, shape index: {}]
  %s5 = inlined_call_operand.vmem [shape: bf16[34,768], index: 5, kind: output, shape index: {}]
  %s6 = sld [smem:[#allocation0]]
  $region105: #{encoder_forward.18} parent=0
    _
  %s8 = ssub.s32 1, %s6
  %s9 = scalar_select 0, %s8, %s6
  $region1: #{encoder_forward.18} parent=0
    #allocation3 [shape = 'u8[393216]{0}', space=vmem, size = 0x60000, scoped, tag = 'input window, operand 3']
    #allocation4 [shape = 'u8[61440]{0}', space=vmem, size = 0xf000, scoped, tag = 'output window, operand 0']
    loop: start=0, step=1, limit=4
    $region2: #{encoder_forward.18} parent=1 // loop_pre_header
      _
    $region3: #{encoder_forward.18} parent=1 // loop_header
      %s11 = sphi 0, %s15
      %p12 = scmp.ge.s32.totalorder %s11, 4
      %s18 = sphi 0, %s30
      %s19 = sphi 0, %s26
      %s20 = sphi 0, %s18
      %s21 = sphi 0, %s19
      %s22 = sphi 0, %s20
      %s23 = sphi 0, %s21
      %s33 = sphi 0, %s35
      %s36 = sphi 0, %s33
      %s37 = sphi 0, %s36
      %s53 = sphi 0, %s37
      %s57 = sphi 0, %s57
      %s59 = sphi 0, %s57
      %s60 = sphi 0, %s59
      %s74 = sphi 0, %s60
      %s78 = sphi 0, %s78
      %s80 = sphi 0, %s78
      %s81 = sphi 0, %s80
      %s95 = sphi 0, %s81
      %s101 = sphi 0, %s103
      %s104 = sphi 0, %s101
      %s105 = sphi 0, %s104
      %s121 = sphi 0, %s105
      %s127 = sphi 0, %s129
      %s130 = sphi 0, %s127
      %s131 = sphi 0, %s130
      %s147 = sphi 0, %s131
      %s155 = sphi 0, %s157
      %s158 = sphi 0, %s155
      %s159 = sphi 0, %s158
      %s175 = sphi 0, %s159
    $region4: #{encoder_forward.18} parent=1 // loop_header_branch
      %14 = sbr.rel (%p12) target = $region8
    $region5: #{encoder_forward.18} parent=1 // loop_body
      %s16 = ssub.s32 %s11, 1
      %s17 = ssub.s32 %s11, 2
      %s24 = sadd.s32 1, %s19
      %p25 = scmp.ge.s32.totalorder %s24, 2
      %s26 = scalar_select %p25, 0, %s24
      %s27 = sadd.s32 1, %s18
      %s28 = scalar_select %p25, %s27, %s18
      %p29 = scmp.ge.s32.totalorder %s28, 1
      %s30 = scalar_select %p29, 0, %s28
      %s31 = ssub.s32 %s18, %s30
      %p32 = scmp.eq.s32.totalorder %s31, 0
      %s34 = sadd.s32 %s33, 1
      %s35 = scalar_select %p32, %s33, %s34
      %p38 = pneg %p32
      %p39 = scmp.eq.s32.totalorder %s11, 1
      %p40 = por %p38, %p39
      %p41 = scmp.ne.s32.totalorder %s33, %s36
      %p42 = scmp.eq.s32.totalorder %s11, 0
      %p43 = por %p41, %p42
      %p44 = scmp.ne.s32.totalorder %s33, %s36
      %p45 = scmp.eq.s32.totalorder %s16, 1
      %p46 = por %p44, %p45
      %p47 = scmp.ne.s32.totalorder %s36, %s37
      %p48 = scmp.eq.s32.totalorder %s16, 0
      %p49 = por %p47, %p48
      %p50 = scmp.ne.s32.totalorder %s36, %s37
      %p51 = scmp.eq.s32.totalorder %s17, 1
      %p52 = por %p50, %p51
      %p54 = scmp.ne.s32.totalorder %s37, %s53
      %p55 = scmp.eq.s32.totalorder %s17, 0
      %p56 = por %p54, %p55
      %s58 = sadd.s32 %s57, 1
      %p61 = scmp.eq.s32.totalorder %s11, 1
      %p62 = scmp.ne.s32.totalorder %s57, %s59
      %p63 = scmp.eq.s32.totalorder %s11, 0
      %p64 = por %p62, %p63
      %p65 = scmp.ne.s32.totalorder %s57, %s59
      %p66 = scmp.eq.s32.totalorder %s16, 1
      %p67 = por %p65, %p66
      %p68 = scmp.ne.s32.totalorder %s59, %s60
      %p69 = scmp.eq.s32.totalorder %s16, 0
      %p70 = por %p68, %p69
      %p71 = scmp.ne.s32.totalorder %s59, %s60
      %p72 = scmp.eq.s32.totalorder %s17, 1
      %p73 = por %p71, %p72
      %p75 = scmp.ne.s32.totalorder %s60, %s74
      %p76 = scmp.eq.s32.totalorder %s17, 0
      %p77 = por %p75, %p76
      %s79 = sadd.s32 %s78, 1
      %p82 = scmp.eq.s32.totalorder %s11, 1
      %p83 = scmp.ne.s32.totalorder %s78, %s80
      %p84 = scmp.eq.s32.totalorder %s11, 0
      %p85 = por %p83, %p84
      %p86 = scmp.ne.s32.totalorder %s78, %s80
      %p87 = scmp.eq.s32.totalorder %s16, 1
      %p88 = por %p86, %p87
      %p89 = scmp.ne.s32.totalorder %s80, %s81
      %p90 = scmp.eq.s32.totalorder %s16, 0
      %p91 = por %p89, %p90
      %p92 = scmp.ne.s32.totalorder %s80, %s81
      %p93 = scmp.eq.s32.totalorder %s17, 1
      %p94 = por %p92, %p93
      %p96 = scmp.ne.s32.totalorder %s81, %s95
      %p97 = scmp.eq.s32.totalorder %s17, 0
      %p98 = por %p96, %p97
      %s99 = ssub.s32 %s19, %s26
      %p100 = scmp.eq.s32.totalorder %s99, 0
      %s102 = sadd.s32 %s101, 1
      %s103 = scalar_select %p100, %s101, %s102
      %p106 = pneg %p100
      %p107 = scmp.eq.s32.totalorder %s11, 1
      %p108 = por %p106, %p107
      %p109 = scmp.ne.s32.totalorder %s101, %s104
      %p110 = scmp.eq.s32.totalorder %s11, 0
      %p111 = por %p109, %p110
      %p112 = scmp.ne.s32.totalorder %s101, %s104
      %p113 = scmp.eq.s32.totalorder %s16, 1
      %p114 = por %p112, %p113
      %p115 = scmp.ne.s32.totalorder %s104, %s105
      %p116 = scmp.eq.s32.totalorder %s16, 0
      %p117 = por %p115, %p116
      %p118 = scmp.ne.s32.totalorder %s104, %s105
      %p119 = scmp.eq.s32.totalorder %s17, 1
      %p120 = por %p118, %p119
      %p122 = scmp.ne.s32.totalorder %s105, %s121
      %p123 = scmp.eq.s32.totalorder %s17, 0
      %p124 = por %p122, %p123
      %s125 = ssub.s32 %s19, %s26
      %p126 = scmp.eq.s32.totalorder %s125, 0
      %s128 = sadd.s32 %s127, 1
      %s129 = scalar_select %p126, %s127, %s128
      %p132 = pneg %p126
      %p133 = scmp.eq.s32.totalorder %s11, 1
      %p134 = por %p132, %p133
      %p135 = scmp.ne.s32.totalorder %s127, %s130
      %p136 = scmp.eq.s32.totalorder %s11, 0
      %p137 = por %p135, %p136
      %p138 = scmp.ne.s32.totalorder %s127, %s130
      %p139 = scmp.eq.s32.totalorder %s16, 1
      %p140 = por %p138, %p139
      %p141 = scmp.ne.s32.totalorder %s130, %s131
      %p142 = scmp.eq.s32.totalorder %s16, 0
      %p143 = por %p141, %p142
      %p144 = scmp.ne.s32.totalorder %s130, %s131
      %p145 = scmp.eq.s32.totalorder %s17, 1
      %p146 = por %p144, %p145
      %p148 = scmp.ne.s32.totalorder %s131, %s147
      %p149 = scmp.eq.s32.totalorder %s17, 0
      %p150 = por %p148, %p149
      %s151 = ssub.s32 %s18, %s30
      %s152 = ssub.s32 %s19, %s26
      %s153 = sor.u32 %s151, %s152
      %p154 = scmp.eq.s32.totalorder %s153, 0
      %s156 = sadd.s32 %s155, 1
      %s157 = scalar_select %p154, %s155, %s156
      %p160 = pneg %p154
      %p161 = scmp.eq.s32.totalorder %s11, 1
      %p162 = por %p160, %p161
      %p163 = scmp.ne.s32.totalorder %s155, %s158
      %p164 = scmp.eq.s32.totalorder %s11, 0
      %p165 = por %p163, %p164
      %p166 = scmp.ne.s32.totalorder %s155, %s158
      %p167 = scmp.eq.s32.totalorder %s16, 1
      %p168 = por %p166, %p167
      %p169 = scmp.ne.s32.totalorder %s158, %s159
      %p170 = scmp.eq.s32.totalorder %s16, 0
      %p171 = por %p169, %p170
      %p172 = scmp.ne.s32.totalorder %s158, %s159
      %p173 = scmp.eq.s32.totalorder %s17, 1
      %p174 = por %p172, %p173
      %p176 = scmp.ne.s32.totalorder %s159, %s175
      %p177 = scmp.eq.s32.totalorder %s17, 0
      %p178 = por %p176, %p177
      %p179 = scmp.le.s32.totalorder 1, %s11
      %p180 = scmp.lt.s32.totalorder %s11, 3
      %p181 = pnand %p179, %p180
      %p182 = pneg %p181
      // Predicated region
      $region9: #{encoder_forward.18} parent=5 // pred_check
        _
      $region10: #{encoder_forward.18} parent=5 // pred_check_branch
        %184 = sbr.rel (%p181) target = $region12
      $region11: #{encoder_forward.18} parent=5 // pred_region
        %s185 = ssub.s32 %s11, 1
        // Predicated region
        $region13: #{encoder_forward.18} parent=11 // pred_check
          %p186 = pneg %p49
        $region14: #{encoder_forward.18} parent=11 // pred_check_branch
          %188 = sbr.rel (%p186) target = $region16
        $region15: #{encoder_forward.18} parent=11 // pred_region
          %s189 = smul.u32 5, %s20
          %p190 = scmp.lt.s32.totalorder %s189, 4
          %s191 = scalar_select %p190, %s189, 4
          %s192 = smul.addr %s191, 2
          %s193 = smul.addr %s192, 8
          %s194 = scalar_lea.vmem %s0, %s193
          %s195 = smul.u32 5, %s20
        $region16: #{encoder_forward.18} parent=11 // pred_fallthru
          _
        // Predicated region
        $region17: #{encoder_forward.18} parent=11 // pred_check
          %p196 = pneg %p70
        $region18: #{encoder_forward.18} parent=11 // pred_check_branch
          %198 = sbr.rel (%p196) target = $region20
        $region19: #{encoder_forward.18} parent=11 // pred_region
          _
        $region20: #{encoder_forward.18} parent=11 // pred_fallthru
          _
        // Predicated region
        $region21: #{encoder_forward.18} parent=11 // pred_check
          %p199 = pneg %p91
        $region22: #{encoder_forward.18} parent=11 // pred_check_branch
          %201 = sbr.rel (%p199) target = $region24
        $region23: #{encoder_forward.18} parent=11 // pred_region
          _
        $region24: #{encoder_forward.18} parent=11 // pred_fallthru
          _
      $region12: #{encoder_forward.18} parent=5 // pred_fallthru
        _
      %p202 = scmp.lt.s32.totalorder %s11, 2
      // Predicated region
      $region25: #{encoder_forward.18} parent=5 // pred_check
        %p203 = pneg %p202
      $region26: #{encoder_forward.18} parent=5 // pred_check_branch
        %205 = sbr.rel (%p203) target = $region28
      $region27: #{encoder_forward.18} parent=5 // pred_region
        // Predicated region
        $region29: #{encoder_forward.18} parent=27 // pred_check
          %p206 = pneg %p111
        $region30: #{encoder_forward.18} parent=27 // pred_check_branch
          %208 = sbr.rel (%p206) target = $region32
        $region31: #{encoder_forward.18} parent=27 // pred_region
          %s209 = sand.u32 %s101, 1
          %s210 = sand.u32 %s101, 1
          %s211 = smul.addr %s210, 384
          %s212 = scalar_lea.vmem [#allocation3], %s211
          %s213 = smul.u32 3, %s19
          %s214 = smul.addr %s213, 4
          %s215 = scalar_lea.vmem %s3, %s214
          // Predicated region
          $region33: #{encoder_forward.18} parent=31 // pred_check
            _
          $region34: #{encoder_forward.18} parent=31 // pred_check_branch
            %217 = sbr.rel (0) target = $region36
          $region35: #{encoder_forward.18} parent=31 // pred_region
            // Predicated region
            $region37: #{encoder_forward.18} parent=35 // pred_check
              _
            $region38: #{encoder_forward.18} parent=35 // pred_check_branch
              %219 = sbr.rel (0) target = $region40
            $region39: #{encoder_forward.18} parent=35 // pred_region
              %s220 = scalar_lea.vmem %s215, 8
              %s221 = scalar_lea.vmem %s212, 8 [#allocation3]
              loop: start=0, step=1, limit=1
              $region41: #{encoder_forward.18} parent=39 // loop_pre_header
                _
              $region42: #{encoder_forward.18} parent=39 // loop_header
                %s223 = sphi 0, %s227
                %p224 = scmp.ge.s32.totalorder %s223, 1
                %s228 = sphi %s215, %s215
                %s229 = sphi %s212, %s212
              $region43: #{encoder_forward.18} parent=39 // loop_header_branch
                %226 = sbr.rel (%p224) target = $region47
              $region44: #{encoder_forward.18} parent=39 // loop_body
                %v230 = vld [vmem:[%s228] sm:$0xff]
                %231 = vst [vmem:[%s229] sm:$0xff] %v230
                %v232 = vld [vmem:[%s228 + $0x18] sm:$0xff]
                %233 = vst [vmem:[%s229 + $0xc] sm:$0xff] %v232
                %v234 = vld [vmem:[%s228 + $0x30] sm:$0xff]
                %235 = vst [vmem:[%s229 + $0x18] sm:$0xff] %v234
                %v236 = vld [vmem:[%s228 + $0x48] sm:$0xff]
                %237 = vst [vmem:[%s229 + $0x24] sm:$0xff] %v236
                %v238 = vld [vmem:[%s228 + $0x60] sm:$0xff]
                %239 = vst [vmem:[%s229 + $0x30] sm:$0xff] %v238
                %v240 = vld [vmem:[%s228 + $0x78] sm:$0xff]
                %241 = vst [vmem:[%s229 + $0x3c] sm:$0xff] %v240
                %v242 = vld [vmem:[%s228 + $0x90] sm:$0xff]
                %243 = vst [vmem:[%s229 + $0x48] sm:$0xff] %v242
                %v244 = vld [vmem:[%s228 + $0xa8] sm:$0xff]
                %245 = vst [vmem:[%s229 + $0x54] sm:$0xff] %v244
                %v246 = vld [vmem:[%s228 + $0xc0] sm:$0xff]
                %247 = vst [vmem:[%s229 + $0x60] sm:$0xff] %v246
                %v248 = vld [vmem:[%s228 + $0xd8] sm:$0xff]
                %249 = vst [vmem:[%s229 + $0x6c] sm:$0xff] %v248
                %v250 = vld [vmem:[%s228 + $0xf0] sm:$0xff]
                %251 = vst [vmem:[%s229 + $0x78] sm:$0xff] %v250
                %v252 = vld [vmem:[%s228 + $0x108] sm:$0xff]
                %253 = vst [vmem:[%s229 + $0x84] sm:$0xff] %v252
                %v254 = vld [vmem:[%s228 + $0x120] sm:$0xff]
                %255 = vst [vmem:[%s229 + $0x90] sm:$0xff] %v254
                %v256 = vld [vmem:[%s228 + $0x138] sm:$0xff]
                %257 = vst [vmem:[%s229 + $0x9c] sm:$0xff] %v256
                %v258 = vld [vmem:[%s228 + $0x150] sm:$0xff]
                %259 = vst [vmem:[%s229 + $0xa8] sm:$0xff] %v258
                %v260 = vld [vmem:[%s228 + $0x168] sm:$0xff]
                %261 = vst [vmem:[%s229 + $0xb4] sm:$0xff] %v260
                %v262 = vld [vmem:[%s228 + $0x180] sm:$0xff]
                %263 = vst [vmem:[%s229 + $0xc0] sm:$0xff] %v262
                %v264 = vld [vmem:[%s228 + $0x198] sm:$0xff]
                %265 = vst [vmem:[%s229 + $0xcc] sm:$0xff] %v264
                %v266 = vld [vmem:[%s228 + $0x1b0] sm:$0xff]
                %267 = vst [vmem:[%s229 + $0xd8] sm:$0xff] %v266
                %v268 = vld [vmem:[%s228 + $0x1c8] sm:$0xff]
                %269 = vst [vmem:[%s229 + $0xe4] sm:$0xff] %v268
                %v270 = vld [vmem:[%s228 + $0x1e0] sm:$0xff]
                %271 = vst [vmem:[%s229 + $0xf0] sm:$0xff] %v270
                %v272 = vld [vmem:[%s228 + $0x1f8] sm:$0xff]
                %273 = vst [vmem:[%s229 + $0xfc] sm:$0xff] %v272
                %v274 = vld [vmem:[%s228 + $0x210] sm:$0xff]
                %275 = vst [vmem:[%s229 + $0x108] sm:$0xff] %v274
                %v276 = vld [vmem:[%s228 + $0x228] sm:$0xff]
                %277 = vst [vmem:[%s229 + $0x114] sm:$0xff] %v276
                %v278 = vld [vmem:[%s228 + $0x240] sm:$0xff]
                %279 = vst [vmem:[%s229 + $0x120] sm:$0xff] %v278
                %v280 = vld [vmem:[%s228 + $0x258] sm:$0xff]
                %281 = vst [vmem:[%s229 + $0x12c] sm:$0xff] %v280
                %v282 = vld [vmem:[%s228 + $0x270] sm:$0xff]
                %283 = vst [vmem:[%s229 + $0x138] sm:$0xff] %v282
                %v284 = vld [vmem:[%s228 + $0x288] sm:$0xff]
                %285 = vst [vmem:[%s229 + $0x144] sm:$0xff] %v284
                %v286 = vld [vmem:[%s228 + $0x2a0] sm:$0xff]
                %287 = vst [vmem:[%s229 + $0x150] sm:$0xff] %v286
                %v288 = vld [vmem:[%s228 + $0x2b8] sm:$0xff]
                %289 = vst [vmem:[%s229 + $0x15c] sm:$0xff] %v288
                %v290 = vld [vmem:[%s228 + $0x2d0] sm:$0xff]
                %291 = vst [vmem:[%s229 + $0x168] sm:$0xff] %v290
                %v292 = vld [vmem:[%s228 + $0x2e8] sm:$0xff]
                %293 = vst [vmem:[%s229 + $0x174] sm:$0xff] %v292
              $region45: #{encoder_forward.18} parent=39 // loop_footer
                %s227 = sadd.s32 1, %s223
              $region46: #{encoder_forward.18} parent=39 // loop_footer_branch
                %222 = sbr.rel target = $region42
              $region47: #{encoder_forward.18} parent=39 // loop_exit
                _
              loop: start=0, step=1, limit=1
              $region48: #{encoder_forward.18} parent=39 // loop_pre_header
                _
              $region49: #{encoder_forward.18} parent=39 // loop_header
                %s296 = sphi 0, %s300
                %p297 = scmp.ge.s32.totalorder %s296, 1
                %s301 = sphi %s220, %s220
                %s302 = sphi %s221, %s221
              $region50: #{encoder_forward.18} parent=39 // loop_header_branch
                %299 = sbr.rel (%p297) target = $region54
              $region51: #{encoder_forward.18} parent=39 // loop_body
                %v303 = vld [vmem:[%s301] sm:$0xf]
                %304 = vst [vmem:[%s302] sm:$0xf] %v303
                %v305 = vld [vmem:[%s301 + $0x18] sm:$0xf]
                %306 = vst [vmem:[%s302 + $0xc] sm:$0xf] %v305
                %v307 = vld [vmem:[%s301 + $0x30] sm:$0xf]
                %308 = vst [vmem:[%s302 + $0x18] sm:$0xf] %v307
                %v309 = vld [vmem:[%s301 + $0x48] sm:$0xf]
                %310 = vst [vmem:[%s302 + $0x24] sm:$0xf] %v309
                %v311 = vld [vmem:[%s301 + $0x60] sm:$0xf]
                %312 = vst [vmem:[%s302 + $0x30] sm:$0xf] %v311
                %v313 = vld [vmem:[%s301 + $0x78] sm:$0xf]
                %314 = vst [vmem:[%s302 + $0x3c] sm:$0xf] %v313
                %v315 = vld [vmem:[%s301 + $0x90] sm:$0xf]
                %316 = vst [vmem:[%s302 + $0x48] sm:$0xf] %v315
                %v317 = vld [vmem:[%s301 + $0xa8] sm:$0xf]
                %318 = vst [vmem:[%s302 + $0x54] sm:$0xf] %v317
                %v319 = vld [vmem:[%s301 + $0xc0] sm:$0xf]
                %320 = vst [vmem:[%s302 + $0x60] sm:$0xf] %v319
                %v321 = vld [vmem:[%s301 + $0xd8] sm:$0xf]
                %322 = vst [vmem:[%s302 + $0x6c] sm:$0xf] %v321
                %v323 = vld [vmem:[%s301 + $0xf0] sm:$0xf]
                %324 = vst [vmem:[%s302 + $0x78] sm:$0xf] %v323
                %v325 = vld [vmem:[%s301 + $0x108] sm:$0xf]
                %326 = vst [vmem:[%s302 + $0x84] sm:$0xf] %v325
                %v327 = vld [vmem:[%s301 + $0x120] sm:$0xf]
                %328 = vst [vmem:[%s302 + $0x90] sm:$0xf] %v327
                %v329 = vld [vmem:[%s301 + $0x138] sm:$0xf]
                %330 = vst [vmem:[%s302 + $0x9c] sm:$0xf] %v329
                %v331 = vld [vmem:[%s301 + $0x150] sm:$0xf]
                %332 = vst [vmem:[%s302 + $0xa8] sm:$0xf] %v331
                %v333 = vld [vmem:[%s301 + $0x168] sm:$0xf]
                %334 = vst [vmem:[%s302 + $0xb4] sm:$0xf] %v333
                %v335 = vld [vmem:[%s301 + $0x180] sm:$0xf]
                %336 = vst [vmem:[%s302 + $0xc0] sm:$0xf] %v335
                %v337 = vld [vmem:[%s301 + $0x198] sm:$0xf]
                %338 = vst [vmem:[%s302 + $0xcc] sm:$0xf] %v337
                %v339 = vld [vmem:[%s301 + $0x1b0] sm:$0xf]
                %340 = vst [vmem:[%s302 + $0xd8] sm:$0xf] %v339
                %v341 = vld [vmem:[%s301 + $0x1c8] sm:$0xf]
                %342 = vst [vmem:[%s302 + $0xe4] sm:$0xf] %v341
                %v343 = vld [vmem:[%s301 + $0x1e0] sm:$0xf]
                %344 = vst [vmem:[%s302 + $0xf0] sm:$0xf] %v343
                %v345 = vld [vmem:[%s301 + $0x1f8] sm:$0xf]
                %346 = vst [vmem:[%s302 + $0xfc] sm:$0xf] %v345
                %v347 = vld [vmem:[%s301 + $0x210] sm:$0xf]
                %348 = vst [vmem:[%s302 + $0x108] sm:$0xf] %v347
                %v349 = vld [vmem:[%s301 + $0x228] sm:$0xf]
                %350 = vst [vmem:[%s302 + $0x114] sm:$0xf] %v349
                %v351 = vld [vmem:[%s301 + $0x240] sm:$0xf]
                %352 = vst [vmem:[%s302 + $0x120] sm:$0xf] %v351
                %v353 = vld [vmem:[%s301 + $0x258] sm:$0xf]
                %354 = vst [vmem:[%s302 + $0x12c] sm:$0xf] %v353
                %v355 = vld [vmem:[%s301 + $0x270] sm:$0xf]
                %356 = vst [vmem:[%s302 + $0x138] sm:$0xf] %v355
                %v357 = vld [vmem:[%s301 + $0x288] sm:$0xf]
                %358 = vst [vmem:[%s302 + $0x144] sm:$0xf] %v357
                %v359 = vld [vmem:[%s301 + $0x2a0] sm:$0xf]
                %360 = vst [vmem:[%s302 + $0x150] sm:$0xf] %v359
                %v361 = vld [vmem:[%s301 + $0x2b8] sm:$0xf]
                %362 = vst [vmem:[%s302 + $0x15c] sm:$0xf] %v361
                %v363 = vld [vmem:[%s301 + $0x2d0] sm:$0xf]
                %364 = vst [vmem:[%s302 + $0x168] sm:$0xf] %v363
                %v365 = vld [vmem:[%s301 + $0x2e8] sm:$0xf]
                %366 = vst [vmem:[%s302 + $0x174] sm:$0xf] %v365
              $region52: #{encoder_forward.18} parent=39 // loop_footer
                %s300 = sadd.s32 1, %s296
              $region53: #{encoder_forward.18} parent=39 // loop_footer_branch
                %295 = sbr.rel target = $region49
              $region54: #{encoder_forward.18} parent=39 // loop_exit
                _
            $region40: #{encoder_forward.18} parent=35 // pred_fallthru
              _
          $region36: #{encoder_forward.18} parent=31 // pred_fallthru
            _
          %367 = vnop
        $region32: #{encoder_forward.18} parent=27 // pred_fallthru
          _
        // Predicated region
        $region55: #{encoder_forward.18} parent=27 // pred_check
          %p368 = pneg %p137
        $region56: #{encoder_forward.18} parent=27 // pred_check_branch
          %370 = sbr.rel (%p368) target = $region58
        $region57: #{encoder_forward.18} parent=27 // pred_region
          %s371 = smul.u32 3, %s19
          %p372 = scmp.lt.s32.totalorder %s371, 5
          %s373 = scalar_select %p372, %s371, 5
          %s374 = scalar_lea.vmem %s4, %s373
          %s375 = smul.u32 3, %s19
        $region58: #{encoder_forward.18} parent=27 // pred_fallthru
          _
      $region28: #{encoder_forward.18} parent=5 // pred_fallthru
        _
      %p376 = scmp.le.s32.totalorder 1, %s11
      %p377 = scmp.lt.s32.totalorder %s11, 3
      %p378 = pnand %p376, %p377
      %p379 = pneg %p378
      // Predicated region
      $region59: #{encoder_forward.18} parent=5 // pred_check
        _
      $region60: #{encoder_forward.18} parent=5 // pred_check_branch
        %381 = sbr.rel (%p378) target = $region62
      $region61: #{encoder_forward.18} parent=5 // pred_region
        %s382 = ssub.s32 %s11, 1
        %s383 = sand.u32 %s104, 1
        %s384 = sand.u32 %s104, 1
        %s385 = smul.addr %s384, 384
        %s386 = scalar_lea.vmem [#allocation3], %s385
        // Predicated region
        $region63: #{encoder_forward.18} parent=61 // pred_check
          %p387 = pneg %p117
        $region64: #{encoder_forward.18} parent=61 // pred_check_branch
          %389 = sbr.rel (%p387) target = $region66
        $region65: #{encoder_forward.18} parent=61 // pred_region
          _
        $region66: #{encoder_forward.18} parent=61 // pred_fallthru
          _
        %s390 = smul.u32 5, %s20
        %p391 = scmp.lt.s32.totalorder %s390, 4
        %s392 = scalar_select %p391, %s390, 4
        %s393 = smul.addr %s392, 2
        %s394 = smul.addr %s393, 8
        %s395 = scalar_lea.vmem %s0, %s394
        %p396 = pneg %p49
        %p397 = pneg %p46
        %p398 = pneg %p70
        %p399 = pneg %p67
        %p400 = pneg %p91
        %p401 = pneg %p88
        %s402 = sand.u32 %s104, 1
        %s403 = sand.u32 %s104, 1
        %s404 = smul.addr %s403, 384
        %s405 = scalar_lea.vmem [#allocation3], %s404
        %p406 = pneg %p117
        %p407 = pneg %p114
        %s408 = smul.u32 3, %s21
        %p409 = scmp.lt.s32.totalorder %s408, 5
        %s410 = scalar_select %p409, %s408, 5
        %s411 = scalar_lea.vmem %s4, %s410
        %p412 = pneg %p143
        %p413 = pneg %p140
        %p414 = pneg %p171
        %p415 = pneg %p168
        %s416 = sand.u32 %s158, 1
        %s417 = sand.u32 %s158, 1
        %s418 = smul.addr %s417, 60
        %s419 = scalar_lea.vmem [#allocation4], %s418
        %s420 = smul.u32 5, %s20
        %p421 = scmp.lt.s32.totalorder %s420, 4
        %s422 = scalar_select %p421, %s420, 4
        %s423 = smul.addr %s422, 2
        %s424 = smul.addr %s423, 8
        %s425 = scalar_lea.vmem %s0, %s424
        %s426 = smul.u32 5, %s20
        %s427 = smul.u32 3, %s21
        %s428 = smul.u32 3, %s21
        %p429 = scmp.lt.s32.totalorder %s428, 5
        %s430 = scalar_select %p429, %s428, 5
        %s431 = scalar_lea.vmem %s4, %s430
        %s432 = smul.u32 3, %s21
        %s433 = smul.u32 5, %s20
        %s434 = smul.u32 3, %s21
        %p436 = scmp.eq.s32.totalorder %s21, 0
        // Predicated region
        $region67: #{encoder_forward.18} parent=61 // pred_check
          %p437 = pneg %p436
        $region68: #{encoder_forward.18} parent=61 // pred_check_branch
          %439 = sbr.rel (%p437) target = $region70
        $region69: #{encoder_forward.18} parent=61 // pred_region
          %v440 = vld [vmem:[%s425] sm:$0xff]
          %v441 = vld [vmem:[%s425 + $0x8] sm:$0xff]
          %v442 = vld [vmem:[%s425 + $0x10] sm:$0xff]
          %v443 = vld [vmem:[%s425 + $0x18] sm:$0xff]
          %v444 = vld [vmem:[%s425 + $0x20] sm:$0xff]
          %v445 = vld [vmem:[%s425 + $0x28] sm:$0xff]
          %v446 = vld [vmem:[%s425 + $0x30] sm:$0xff]
          %v447 = vld [vmem:[%s425 + $0x38] sm:$0xff]
          %v448 = vld [vmem:[%s425 + $0x40] sm:$0x3]
          %v449 = vld [vmem:[%s425 + $0x48] sm:$0x3]
          %v450 = vld [vmem:[%s1] sm:$0x3]
          %v451 = vld [vmem:[%s2] sm:$0x3]
          %v452 = vadd.f32 %v440, %v441
          %453 = vadd.xlane.f32.xlu0 %v452
          %v454 = vpop.xlane.xlu0 %453
          %v455 = vadd.f32 %v442, %v443
          %456 = vadd.xlane.f32.xlu0 %v455
          %v457 = vpop.xlane.xlu0 %456
          %v458 = vadd.f32 %v444, %v445
          %459 = vadd.xlane.f32.xlu0 %v458
          %v460 = vpop.xlane.xlu0 %459
          %v461 = vadd.f32 %v446, %v447
          %462 = vadd.xlane.f32.xlu0 %v461
          %v463 = vpop.xlane.xlu0 %462
          %vm464 = vcmask 1041408
          %v465 = vsel %vm464, %v448, 0.0
          %v466 = vsel %vm464, %v449, 0.0
          %v467 = vadd.f32 %v465, %v466
          %468 = vadd.xlane.f32.xlu0 %v467
          %v469 = vpop.xlane.xlu0 %468
          %v470 = vrcp.pop 256.0
          %v471 = vmul.f32 %v454, %v470
          %v472 = vmul.f32 %v457, %v470
          %v473 = vmul.f32 %v460, %v470
          %v474 = vmul.f32 %v463, %v470
          %v475 = vmul.f32 %v469, %v470
          %v476 = vsub.f32 %v440, %v471
          %v477 = vsub.f32 %v441, %v471
          %v478 = vsub.f32 %v442, %v472
          %v479 = vsub.f32 %v443, %v472
          %v480 = vsub.f32 %v444, %v473
          %v481 = vsub.f32 %v445, %v473
          %v482 = vsub.f32 %v446, %v474
          %v483 = vsub.f32 %v447, %v474
          %v484 = vsub.f32 %v448, %v475
          %v485 = vsub.f32 %v449, %v475
          %v486 = vmul.f32 %v476, %v476
          %v487 = vmul.f32 %v477, %v477
          %v488 = vmul.f32 %v478, %v478
          %v489 = vmul.f32 %v479, %v479
          %v490 = vmul.f32 %v480, %v480
          %v491 = vmul.f32 %v481, %v481
          %v492 = vmul.f32 %v482, %v482
          %v493 = vmul.f32 %v483, %v483
          %v494 = vmul.f32 %v484, %v484
          %v495 = vmul.f32 %v485, %v485
          %v496 = vadd.f32 %v486, %v487
          %497 = vadd.xlane.f32.xlu0 %v496
          %v498 = vpop.xlane.xlu0 %497
          %v499 = vadd.f32 %v488, %v489
          %500 = vadd.xlane.f32.xlu0 %v499
          %v501 = vpop.xlane.xlu0 %500
          %v502 = vadd.f32 %v490, %v491
          %503 = vadd.xlane.f32.xlu0 %v502
          %v504 = vpop.xlane.xlu0 %503
          %v505 = vadd.f32 %v492, %v493
          %506 = vadd.xlane.f32.xlu0 %v505
          %v507 = vpop.xlane.xlu0 %506
          %v508 = vsel %vm464, %v494, 0.0
          %v509 = vsel %vm464, %v495, 0.0
          %v510 = vadd.f32 %v508, %v509
          %511 = vadd.xlane.f32.xlu0 %v510
          %v512 = vpop.xlane.xlu0 %511
          %v513 = vmul.f32 %v498, %v470
          %v514 = vmul.f32 %v501, %v470
          %v515 = vmul.f32 %v504, %v470
          %v516 = vmul.f32 %v507, %v470
          %v517 = vmul.f32 %v512, %v470
          %v518 = vadd.f32 %v513, 1e-06
          %v519 = vadd.f32 %v514, 1e-06
          %v520 = vadd.f32 %v515, 1e-06
          %v521 = vadd.f32 %v516, 1e-06
          %v522 = vadd.f32 %v517, 1e-06
          %v523 = vrsqrt.pop %v518
          %v524 = vrsqrt.pop %v519
          %v525 = vrsqrt.pop %v520
          %v526 = vrsqrt.pop %v521
          %v527 = vrsqrt.pop %v522
          %v528 = vmul.f32 %v476, %v523
          %v529 = vmul.f32 %v477, %v523
          %v530 = vmul.f32 %v478, %v524
          %v531 = vmul.f32 %v479, %v524
          %v532 = vmul.f32 %v480, %v525
          %v533 = vmul.f32 %v481, %v525
          %v534 = vmul.f32 %v482, %v526
          %v535 = vmul.f32 %v483, %v526
          %v536 = vmul.f32 %v484, %v527
          %v537 = vmul.f32 %v485, %v527
          %v539 = vlaneseq
          %v540 = vshrl.u32 %v539, 7
          %v541 = vsub.s32 0, %v540
          %v542 = vrot.slane %v450, %v541
          %v543 = vlaneseq
          %v544 = vshrl.u32 %v543, 7
          %v545 = vsub.s32 1, %v544
          %v546 = vrot.slane %v450, %v545
          %v549 = vmul.f32 %v528, %v542
          %v550 = vmul.f32 %v529, %v546
          %v551 = vmul.f32 %v530, %v542
          %v552 = vmul.f32 %v531, %v546
          %v553 = vmul.f32 %v532, %v542
          %v554 = vmul.f32 %v533, %v546
          %v555 = vmul.f32 %v534, %v542
          %v556 = vmul.f32 %v535, %v546
          %v557 = vmul.f32 %v536, %v542
          %v558 = vmul.f32 %v537, %v546
          %v560 = vlaneseq
          %v561 = vshrl.u32 %v560, 7
          %v562 = vsub.s32 0, %v561
          %v563 = vrot.slane %v451, %v562
          %v564 = vlaneseq
          %v565 = vshrl.u32 %v564, 7
          %v566 = vsub.s32 1, %v565
          %v567 = vrot.slane %v451, %v566
          %v570 = vadd.f32 %v549, %v563
          %v571 = vadd.f32 %v550, %v567
          %v572 = vadd.f32 %v551, %v563
          %v573 = vadd.f32 %v552, %v567
          %v574 = vadd.f32 %v553, %v563
          %v575 = vadd.f32 %v554, %v567
          %v576 = vadd.f32 %v555, %v563
          %v577 = vadd.f32 %v556, %v567
          %v578 = vadd.f32 %v557, %v563
          %v579 = vadd.f32 %v558, %v567
          %v580 = vpack.c.bf16 %v572, %v570
          %v581 = vpack.c.bf16 %v573, %v571
          %v582 = vpack.c.bf16 %v576, %v574
          %v583 = vpack.c.bf16 %v577, %v575
          %v584 = vpack.c.bf16 %v578, %v578
          %v585 = vpack.c.bf16 %v579, %v579
          %v592 = vunpack.c.l.b16 %v580
          %v593 = vunpack.c.l.b16 %v581
          %v594 = vunpack.c.h.b16 %v580
          %v595 = vunpack.c.h.b16 %v581
          %v596 = vunpack.c.l.b16 %v582
          %v597 = vunpack.c.l.b16 %v583
          %v598 = vunpack.c.h.b16 %v582
          %v599 = vunpack.c.h.b16 %v583
          %v600 = vunpack.c.l.b16 %v584
          %v601 = vunpack.c.l.b16 %v585
          %v602 = vpack.c.b16 %v593, %v592
          %v603 = vpack.c.b16 %v595, %v594
          %v604 = vpack.c.b16 %v597, %v596
          %v605 = vpack.c.b16 %v599, %v598
          %v606 = vpack.c.b16 %v601, %v600
          %612 = vst [vmem:[#allocation2] sm:$0xff] %v602
          %613 = vst [vmem:[#allocation2 + $0x8] sm:$0xff] %v603
          %614 = vst [vmem:[#allocation2 + $0x10] sm:$0xff] %v604
          %615 = vst [vmem:[#allocation2 + $0x18] sm:$0xff] %v605
          %616 = vst [vmem:[#allocation2 + $0x20] sm:$0x11] %v606
        $region70: #{encoder_forward.18} parent=61 // pred_fallthru
          _
        %v617 = vld [vmem:[#allocation2] sm:$0xff]
        %v618 = vld [vmem:[#allocation2 + $0x8] sm:$0xff]
        %v619 = vld [vmem:[#allocation2 + $0x10] sm:$0xff]
        %v620 = vld [vmem:[#allocation2 + $0x18] sm:$0xff]
        %v621 = vld [vmem:[#allocation2 + $0x20] sm:$0x11]
        %v622 = vld [vmem:[%s386] sm:$0xff]
        %v623 = vld [vmem:[%s386 + $0x8] sm:$0xf]
        %v624 = vld [vmem:[%s386 + $0xc] sm:$0xff]
        %v625 = vld [vmem:[%s386 + $0x14] sm:$0xf]
        %v626 = vld [vmem:[%s386 + $0x18] sm:$0xff]
        %v627 = vld [vmem:[%s386 + $0x20] sm:$0xf]
        %v628 = vld [vmem:[%s386 + $0x24] sm:$0xff]
        %v629 = vld [vmem:[%s386 + $0x2c] sm:$0xf]
        %v630 = vld [vmem:[%s386 + $0x30] sm:$0xff]
        %v631 = vld [vmem:[%s386 + $0x38] sm:$0xf]
        %v632 = vld [vmem:[%s386 + $0x3c] sm:$0xff]
        %v633 = vld [vmem:[%s386 + $0x44] sm:$0xf]
        %v634 = vld [vmem:[%s386 + $0x48] sm:$0xff]
        %v635 = vld [vmem:[%s386 + $0x50] sm:$0xf]
        %v636 = vld [vmem:[%s386 + $0x54] sm:$0xff]
        %v637 = vld [vmem:[%s386 + $0x5c] sm:$0xf]
        %v638 = vld [vmem:[%s386 + $0x60] sm:$0xff]
        %v639 = vld [vmem:[%s386 + $0x68] sm:$0xf]
        %v640 = vld [vmem:[%s386 + $0x6c] sm:$0xff]
        %v641 = vld [vmem:[%s386 + $0x74] sm:$0xf]
        %v642 = vld [vmem:[%s386 + $0x78] sm:$0xff]
        %v643 = vld [vmem:[%s386 + $0x80] sm:$0xf]
        %v644 = vld [vmem:[%s386 + $0x84] sm:$0xff]
        %v645 = vld [vmem:[%s386 + $0x8c] sm:$0xf]
        %v646 = vld [vmem:[%s386 + $0x90] sm:$0xff]
        %v647 = vld [vmem:[%s386 + $0x98] sm:$0xf]
        %v648 = vld [vmem:[%s386 + $0x9c] sm:$0xff]
        %v649 = vld [vmem:[%s386 + $0xa4] sm:$0xf]
        %v650 = vld [vmem:[%s386 + $0xa8] sm:$0xff]
        %v651 = vld [vmem:[%s386 + $0xb0] sm:$0xf]
        %v652 = vld [vmem:[%s386 + $0xb4] sm:$0xff]
        %v653 = vld [vmem:[%s386 + $0xbc] sm:$0xf]
        %v654 = vld [vmem:[%s386 + $0xc0] sm:$0xff]
        %v655 = vld [vmem:[%s386 + $0xc8] sm:$0xf]
        %v656 = vld [vmem:[%s386 + $0xcc] sm:$0xff]
        %v657 = vld [vmem:[%s386 + $0xd4] sm:$0xf]
        %v658 = vld [vmem:[%s386 + $0xd8] sm:$0xff]
        %v659 = vld [vmem:[%s386 + $0xe0] sm:$0xf]
        %v660 = vld [vmem:[%s386 + $0xe4] sm:$0xff]
        %v661 = vld [vmem:[%s386 + $0xec] sm:$0xf]
        %v662 = vld [vmem:[%s386 + $0xf0] sm:$0xff]
        %v663 = vld [vmem:[%s386 + $0xf8] sm:$0xf]
        %v664 = vld [vmem:[%s386 + $0xfc] sm:$0xff]
        %v665 = vld [vmem:[%s386 + $0x104] sm:$0xf]
        %v666 = vld [vmem:[%s386 + $0x108] sm:$0xff]
        %v667 = vld [vmem:[%s386 + $0x110] sm:$0xf]
        %v668 = vld [vmem:[%s386 + $0x114] sm:$0xff]
        %v669 = vld [vmem:[%s386 + $0x11c] sm:$0xf]
        %v670 = vld [vmem:[%s386 + $0x120] sm:$0xff]
        %v671 = vld [vmem:[%s386 + $0x128] sm:$0xf]
        %v672 = vld [vmem:[%s386 + $0x12c] sm:$0xff]
        %v673 = vld [vmem:[%s386 + $0x134] sm:$0xf]
        %v674 = vld [vmem:[%s386 + $0x138] sm:$0xff]
        %v675 = vld [vmem:[%s386 + $0x140] sm:$0xf]
        %v676 = vld [vmem:[%s386 + $0x144] sm:$0xff]
        %v677 = vld [vmem:[%s386 + $0x14c] sm:$0xf]
        %v678 = vld [vmem:[%s386 + $0x150] sm:$0xff]
        %v679 = vld [vmem:[%s386 + $0x158] sm:$0xf]
        %v680 = vld [vmem:[%s386 + $0x15c] sm:$0xff]
        %v681 = vld [vmem:[%s386 + $0x164] sm:$0xf]
        %v682 = vld [vmem:[%s386 + $0x168] sm:$0xff]
        %v683 = vld [vmem:[%s386 + $0x170] sm:$0xf]
        %v684 = vld [vmem:[%s386 + $0x174] sm:$0xff]
        %v685 = vld [vmem:[%s386 + $0x17c] sm:$0xf]
        %v686 = vld [vmem:[%s431] sm:$0x7]
        %v688 = vlaneseq
        %v689 = vshrl.u32 %v688, 7
        %v690 = vsub.s32 0, %v689
        %v691 = vrot.slane %v686, %v690
        %v692 = vlaneseq
        %v693 = vshrl.u32 %v692, 7
        %v694 = vsub.s32 1, %v693
        %v695 = vrot.slane %v686, %v694
        %v696 = vlaneseq
        %v697 = vshrl.u32 %v696, 7
        %v698 = vsub.s32 2, %v697
        %v699 = vrot.slane %v686, %v698
        %v708 = vunpack.c.l.b16 %v617
        %v709 = vunpack.c.h.b16 %v617
        %v710 = vunpack.c.l.b16 %v618
        %v711 = vunpack.c.h.b16 %v618
        %v712 = vunpack.c.l.b16 %v619
        %v713 = vunpack.c.h.b16 %v619
        %v714 = vunpack.c.l.b16 %v620
        %v715 = vunpack.c.h.b16 %v620
        %v716 = vunpack.c.l.b16 %v621
        %v717 = vunpack.c.h.b16 %v621
        %v718 = vpack.c.b16 %v710, %v708
        %v719 = vpack.c.b16 %v711, %v709
        %v720 = vpack.c.b16 %v714, %v712
        %v721 = vpack.c.b16 %v715, %v713
        %v722 = vpack.c.b16 %v716, %v716
        %v723 = vpack.c.b16 %v717, %v717
        %v794 = vunpack.c.l.b16 %v622
        %v795 = vunpack.c.h.b16 %v622
        %v796 = vunpack.c.l.b16 %v623
        %v797 = vunpack.c.l.b16 %v624
        %v798 = vunpack.c.h.b16 %v624
        %v799 = vunpack.c.l.b16 %v625
        %v800 = vunpack.c.l.b16 %v626
        %v801 = vunpack.c.h.b16 %v626
        %v802 = vunpack.c.l.b16 %v627
        %v803 = vunpack.c.l.b16 %v628
        %v804 = vunpack.c.h.b16 %v628
        %v805 = vunpack.c.l.b16 %v629
        %v806 = vunpack.c.l.b16 %v630
        %v807 = vunpack.c.h.b16 %v630
        %v808 = vunpack.c.l.b16 %v631
        %v809 = vunpack.c.l.b16 %v632
        %v810 = vunpack.c.h.b16 %v632
        %v811 = vunpack.c.l.b16 %v633
        %v812 = vunpack.c.l.b16 %v634
        %v813 = vunpack.c.h.b16 %v634
        %v814 = vunpack.c.l.b16 %v635
        %v815 = vunpack.c.l.b16 %v636
        %v816 = vunpack.c.h.b16 %v636
        %v817 = vunpack.c.l.b16 %v637
        %v818 = vunpack.c.l.b16 %v638
        %v819 = vunpack.c.h.b16 %v638
        %v820 = vunpack.c.l.b16 %v639
        %v821 = vunpack.c.l.b16 %v640
        %v822 = vunpack.c.h.b16 %v640
        %v823 = vunpack.c.l.b16 %v641
        %v824 = vunpack.c.l.b16 %v642
        %v825 = vunpack.c.h.b16 %v642
        %v826 = vunpack.c.l.b16 %v643
        %v827 = vunpack.c.l.b16 %v644
        %v828 = vunpack.c.h.b16 %v644
        %v829 = vunpack.c.l.b16 %v645
        %v830 = vunpack.c.l.b16 %v646
        %v831 = vunpack.c.h.b16 %v646
        %v832 = vunpack.c.l.b16 %v647
        %v833 = vunpack.c.l.b16 %v648
        %v834 = vunpack.c.h.b16 %v648
        %v835 = vunpack.c.l.b16 %v649
        %v836 = vunpack.c.l.b16 %v650
        %v837 = vunpack.c.h.b16 %v650
        %v838 = vunpack.c.l.b16 %v651
        %v839 = vunpack.c.l.b16 %v652
        %v840 = vunpack.c.h.b16 %v652
        %v841 = vunpack.c.l.b16 %v653
        %v842 = vunpack.c.l.b16 %v654
        %v843 = vunpack.c.h.b16 %v654
        %v844 = vunpack.c.l.b16 %v655
        %v845 = vunpack.c.l.b16 %v656
        %v846 = vunpack.c.h.b16 %v656
        %v847 = vunpack.c.l.b16 %v657
        %v848 = vunpack.c.l.b16 %v658
        %v849 = vunpack.c.h.b16 %v658
        %v850 = vunpack.c.l.b16 %v659
        %v851 = vunpack.c.l.b16 %v660
        %v852 = vunpack.c.h.b16 %v660
        %v853 = vunpack.c.l.b16 %v661
        %v854 = vunpack.c.l.b16 %v662
        %v855 = vunpack.c.h.b16 %v662
        %v856 = vunpack.c.l.b16 %v663
        %v857 = vunpack.c.l.b16 %v664
        %v858 = vunpack.c.h.b16 %v664
        %v859 = vunpack.c.l.b16 %v665
        %v860 = vunpack.c.l.b16 %v666
        %v861 = vunpack.c.h.b16 %v666
        %v862 = vunpack.c.l.b16 %v667
        %v863 = vunpack.c.l.b16 %v668
        %v864 = vunpack.c.h.b16 %v668
        %v865 = vunpack.c.l.b16 %v669
        %v866 = vunpack.c.l.b16 %v670
        %v867 = vunpack.c.h.b16 %v670
        %v868 = vunpack.c.l.b16 %v671
        %v869 = vunpack.c.l.b16 %v672
        %v870 = vunpack.c.h.b16 %v672
        %v871 = vunpack.c.l.b16 %v673
        %v872 = vunpack.c.l.b16 %v674
        %v873 = vunpack.c.h.b16 %v674
        %v874 = vunpack.c.l.b16 %v675
        %v875 = vunpack.c.l.b16 %v676
        %v876 = vunpack.c.h.b16 %v676
        %v877 = vunpack.c.l.b16 %v677
        %v878 = vunpack.c.l.b16 %v678
        %v879 = vunpack.c.h.b16 %v678
        %v880 = vunpack.c.l.b16 %v679
        %v881 = vunpack.c.l.b16 %v680
        %v882 = vunpack.c.h.b16 %v680
        %v883 = vunpack.c.l.b16 %v681
        %v884 = vunpack.c.l.b16 %v682
        %v885 = vunpack.c.h.b16 %v682
        %v886 = vunpack.c.l.b16 %v683
        %v887 = vunpack.c.l.b16 %v684
        %v888 = vunpack.c.h.b16 %v684
        %v889 = vunpack.c.l.b16 %v685
        %v890 = vpack.c.b16 %v797, %v794
        %v891 = vpack.c.b16 %v798, %v795
        %v892 = vpack.c.b16 %v799, %v796
        %v893 = vpack.c.b16 %v803, %v800
        %v894 = vpack.c.b16 %v804, %v801
        %v895 = vpack.c.b16 %v805, %v802
        %v896 = vpack.c.b16 %v809, %v806
        %v897 = vpack.c.b16 %v810, %v807
        %v898 = vpack.c.b16 %v811, %v808
        %v899 = vpack.c.b16 %v815, %v812
        %v900 = vpack.c.b16 %v816, %v813
        %v901 = vpack.c.b16 %v817, %v814
        %v902 = vpack.c.b16 %v821, %v818
        %v903 = vpack.c.b16 %v822, %v819
        %v904 = vpack.c.b16 %v823, %v820
        %v905 = vpack.c.b16 %v827, %v824
        %v906 = vpack.c.b16 %v828, %v825
        %v907 = vpack.c.b16 %v829, %v826
        %v908 = vpack.c.b16 %v833, %v830
        %v909 = vpack.c.b16 %v834, %v831
        %v910 = vpack.c.b16 %v835, %v832
        %v911 = vpack.c.b16 %v839, %v836
        %v912 = vpack.c.b16 %v840, %v837
        %v913 = vpack.c.b16 %v841, %v838
        %v914 = vpack.c.b16 %v845, %v842
        %v915 = vpack.c.b16 %v846, %v843
        %v916 = vpack.c.b16 %v847, %v844
        %v917 = vpack.c.b16 %v851, %v848
        %v918 = vpack.c.b16 %v852, %v849
        %v919 = vpack.c.b16 %v853, %v850
        %v920 = vpack.c.b16 %v857, %v854
        %v921 = vpack.c.b16 %v858, %v855
        %v922 = vpack.c.b16 %v859, %v856
        %v923 = vpack.c.b16 %v863, %v860
        %v924 = vpack.c.b16 %v864, %v861
        %v925 = vpack.c.b16 %v865, %v862
        %v926 = vpack.c.b16 %v869, %v866
        %v927 = vpack.c.b16 %v870, %v867
        %v928 = vpack.c.b16 %v871, %v868
        %v929 = vpack.c.b16 %v875, %v872
        %v930 = vpack.c.b16 %v876, %v873
        %v931 = vpack.c.b16 %v877, %v874
        %v932 = vpack.c.b16 %v881, %v878
        %v933 = vpack.c.b16 %v882, %v879
        %v934 = vpack.c.b16 %v883, %v880
        %v935 = vpack.c.b16 %v887, %v884
        %v936 = vpack.c.b16 %v888, %v885
        %v937 = vpack.c.b16 %v889, %v886
        %986 = vmatprep.subr.bf16.mxu0 %v891
        %987 = vmatpush1.bf16.msra.mxu0 %v890
        %988 = vmatprep.subr.bf16.mxu0 %v894
        %989 = vmatpush1.bf16.msra.mxu0 %v893
        %990 = vmatprep.subr.bf16.mxu0 %v897
        %991 = vmatpush1.bf16.msra.mxu0 %v896
        %992 = vmatprep.subr.bf16.mxu0 %v900
        %993 = vmatpush1.bf16.msra.mxu0 %v899
        %994 = vmatprep.subr.bf16.mxu0 %v903
        %995 = vmatpush1.bf16.msra.mxu0 %v902
        %996 = vmatprep.subr.bf16.mxu0 %v906
        %997 = vmatpush1.bf16.msra.mxu0 %v905
        %998 = vmatprep.subr.bf16.mxu0 %v909
        %999 = vmatpush1.bf16.msra.mxu0 %v908
        %1000 = vmatprep.subr.bf16.mxu0 %v912
        %1001 = vmatpush1.bf16.msra.mxu0 %v911
        %1002 = vmatprep.subr.bf16.mxu0 %v915
        %1003 = vmatpush1.bf16.msra.mxu0 %v914
        %1004 = vmatprep.subr.bf16.mxu0 %v918
        %1005 = vmatpush1.bf16.msra.mxu0 %v917
        %1006 = vmatprep.subr.bf16.mxu0 %v921
        %1007 = vmatpush1.bf16.msra.mxu0 %v920
        %1008 = vmatprep.subr.bf16.mxu0 %v924
        %1009 = vmatpush1.bf16.msra.mxu0 %v923
        %1010 = vmatprep.subr.bf16.mxu0 %v927
        %1011 = vmatpush1.bf16.msra.mxu0 %v926
        %1012 = vmatprep.subr.bf16.mxu0 %v930
        %1013 = vmatpush1.bf16.msra.mxu0 %v929
        %1014 = vmatprep.subr.bf16.mxu0 %v933
        %1015 = vmatpush1.bf16.msra.mxu0 %v932
        %1016 = vmatprep.subr.bf16.mxu0 %v936
        %1017 = vmatpush1.bf16.msra.mxu0 %v935
        %1018 = vmatprep.mubr.bf16.mxu0 %v719
        %1019 = vmatmul.mubr.bf16.gmra.mrb[0].mxu0 %v718
        %v1020 = vpop.f32.mrb[0].mxu0
        %v1021 = vadd.f32 %v691, %v1020
        %v1022 = vpop.f32.mrb[0].mxu0
        %v1023 = vadd.f32 %v695, %v1022
        %v1024 = vpop.f32.mrb[0].mxu0
        %v1025 = vadd.f32 %v691, %v1024
        %v1026 = vpop.f32.mrb[0].mxu0
        %v1027 = vadd.f32 %v695, %v1026
        %1028 = vmatprep.mubr.bf16.mxu0 %v721
        %1029 = vmatmul.mubr.bf16.gmra.mrb[0].mxu0 %v720
        %v1030 = vpop.f32.mrb[0].mxu0
        %v1031 = vadd.f32 %v691, %v1030
        %v1032 = vpop.f32.mrb[0].mxu0
        %v1033 = vadd.f32 %v695, %v1032
        %v1034 = vpop.f32.mrb[0].mxu0
        %v1035 = vadd.f32 %v691, %v1034
        %v1036 = vpop.f32.mrb[0].mxu0
        %v1037 = vadd.f32 %v695, %v1036
        %1038 = vmatprep.mubr.bf16.mxu0 %v723
        %1039 = vmatmul.mubr.bf16.gmra.mrb[0].mxu0 %v722
        %v1040 = vpop.f32.mrb[0].mxu0
        %v1041 = vadd.f32 %v691, %v1040
        %v1042 = vpop.f32.mrb[0].mxu0
        %v1043 = vadd.f32 %v695, %v1042
        %v1044 = vpop.f32.mrb[0].mxu0
        %v1045 = vpop.f32.mrb[0].mxu0
        %1046 = vdwg.mxu0
        %1047 = vmatprep.subr.bf16.mxu0 0
        %1048 = vmatpush1.bf16.msra.mxu0 %v892
        %1049 = vmatprep.subr.bf16.mxu0 0
        %1050 = vmatpush1.bf16.msra.mxu0 %v895
        %1051 = vmatprep.subr.bf16.mxu0 0
        %1052 = vmatpush1.bf16.msra.mxu0 %v898
        %1053 = vmatprep.subr.bf16.mxu0 0
        %1054 = vmatpush1.bf16.msra.mxu0 %v901
        %1055 = vmatprep.subr.bf16.mxu0 0
        %1056 = vmatpush1.bf16.msra.mxu0 %v904
        %1057 = vmatprep.subr.bf16.mxu0 0
        %1058 = vmatpush1.bf16.msra.mxu0 %v907
        %1059 = vmatprep.subr.bf16.mxu0 0
        %1060 = vmatpush1.bf16.msra.mxu0 %v910
        %1061 = vmatprep.subr.bf16.mxu0 0
        %1062 = vmatpush1.bf16.msra.mxu0 %v913
        %1063 = vmatprep.subr.bf16.mxu0 0
        %1064 = vmatpush1.bf16.msra.mxu0 %v916
        %1065 = vmatprep.subr.bf16.mxu0 0
        %1066 = vmatpush1.bf16.msra.mxu0 %v919
        %1067 = vmatprep.subr.bf16.mxu0 0
        %1068 = vmatpush1.bf16.msra.mxu0 %v922
        %1069 = vmatprep.subr.bf16.mxu0 0
        %1070 = vmatpush1.bf16.msra.mxu0 %v925
        %1071 = vmatprep.subr.bf16.mxu0 0
        %1072 = vmatpush1.bf16.msra.mxu0 %v928
        %1073 = vmatprep.subr.bf16.mxu0 0
        %1074 = vmatpush1.bf16.msra.mxu0 %v931
        %1075 = vmatprep.subr.bf16.mxu0 0
        %1076 = vmatpush1.bf16.msra.mxu0 %v934
        %1077 = vmatprep.subr.bf16.mxu0 0
        %1078 = vmatpush1.bf16.msra.mxu0 %v937
        %1079 = vmatprep.mubr.bf16.mxu0 %v719
        %1080 = vmatmul.mubr.bf16.gmra.mrb[0].mxu0 %v718
        %v1081 = vpop.f32.mrb[0].mxu0
        %v1082 = vadd.f32 %v699, %v1081
        %v1083 = vpop.f32.mrb[0].mxu0
        %v1084 = vpop.f32.mrb[0].mxu0
        %v1085 = vadd.f32 %v699, %v1084
        %v1086 = vpop.f32.mrb[0].mxu0
        %1087 = vmatprep.mubr.bf16.mxu0 %v721
        %1088 = vmatmul.mubr.bf16.gmra.mrb[0].mxu0 %v720
        %v1089 = vpop.f32.mrb[0].mxu0
        %v1090 = vadd.f32 %v699, %v1089
        %v1091 = vpop.f32.mrb[0].mxu0
        %v1092 = vpop.f32.mrb[0].mxu0
        %v1093 = vadd.f32 %v699, %v1092
        %v1094 = vpop.f32.mrb[0].mxu0
        %1095 = vmatprep.mubr.bf16.mxu0 %v723
        %1096 = vmatmul.mubr.bf16.gmra.mrb[0].mxu0 %v722
        %v1097 = vpop.f32.mrb[0].mxu0
        %v1098 = vadd.f32 %v699, %v1097
        %v1099 = vpop.f32.mrb[0].mxu0
        %v1100 = vpop.f32.mrb[0].mxu0
        %v1101 = vpop.f32.mrb[0].mxu0
        %1102 = vdwg.mxu0
        %v1103 = vpack.c.bf16 %v1025, %v1021
        %v1104 = vpack.c.bf16 %v1027, %v1023
        %v1105 = vpack.c.bf16 %v1085, %v1082
        %v1106 = vpack.c.bf16 %v1035, %v1031
        %v1107 = vpack.c.bf16 %v1037, %v1033
        %v1108 = vpack.c.bf16 %v1093, %v1090
        %v1109 = vpack.c.bf16 %v1041, %v1041
        %v1110 = vpack.c.bf16 %v1043, %v1043
        %v1111 = vpack.c.bf16 %v1098, %v1098
        %v1121 = vunpack.c.l.b16 %v1103
        %v1122 = vunpack.c.l.b16 %v1104
        %v1123 = vunpack.c.l.b16 %v1105
        %v1124 = vunpack.c.h.b16 %v1103
        %v1125 = vunpack.c.h.b16 %v1104
        %v1126 = vunpack.c.h.b16 %v1105
        %v1127 = vunpack.c.l.b16 %v1106
        %v1128 = vunpack.c.l.b16 %v1107
        %v1129 = vunpack.c.l.b16 %v1108
        %v1130 = vunpack.c.h.b16 %v1106
        %v1131 = vunpack.c.h.b16 %v1107
        %v1132 = vunpack.c.h.b16 %v1108
        %v1133 = vunpack.c.l.b16 %v1109
        %v1134 = vunpack.c.l.b16 %v1110
        %v1135 = vunpack.c.l.b16 %v1111
        %v1136 = vpack.c.b16 %v1122, %v1121
        %v1137 = vpack.c.b16 %v1123, %v1123
        %v1138 = vpack.c.b16 %v1125, %v1124
        %v1139 = vpack.c.b16 %v1126, %v1126
        %v1140 = vpack.c.b16 %v1128, %v1127
        %v1141 = vpack.c.b16 %v1129, %v1129
        %v1142 = vpack.c.b16 %v1131, %v1130
        %v1143 = vpack.c.b16 %v1132, %v1132
        %v1144 = vpack.c.b16 %v1134, %v1133
        %v1145 = vpack.c.b16 %v1135, %v1135
        %1156 = vst [vmem:[%s419] sm:$0xff] %v1136
        %1157 = vst [vmem:[%s419 + $0x8] sm:$0xf] %v1137
        %1158 = vst [vmem:[%s419 + $0xc] sm:$0xff] %v1138
        %1159 = vst [vmem:[%s419 + $0x14] sm:$0xf] %v1139
        %1160 = vst [vmem:[%s419 + $0x18] sm:$0xff] %v1140
        %1161 = vst [vmem:[%s419 + $0x20] sm:$0xf] %v1141
        %1162 = vst [vmem:[%s419 + $0x24] sm:$0xff] %v1142
        %1163 = vst [vmem:[%s419 + $0x2c] sm:$0xf] %v1143
        %1164 = vst [vmem:[%s419 + $0x30] sm:$0x11] %v1144
        %1165 = vst [vmem:[%s419 + $0x38] sm:$0x1] %v1145
        %s1166 = sand.u32 %s158, 1
        %s1167 = sand.u32 %s158, 1
        %s1168 = smul.addr %s1167, 60
        %s1169 = scalar_lea.vmem [#allocation4], %s1168
        // Predicated region
        $region71: #{encoder_forward.18} parent=61 // pred_check
          %p1170 = pneg %p168
        $region72: #{encoder_forward.18} parent=61 // pred_check_branch
          %1172 = sbr.rel (%p1170) target = $region74
        $region73: #{encoder_forward.18} parent=61 // pred_region
          %s1173 = smul.u32 5, %s20
          %s1174 = smul.u32 3, %s21
          %s1175 = smul.addr %s1173, 6
          %s1176 = sadd.s32 %s1174, %s1175
          %s1177 = smul.addr %s1176, 4
          %s1178 = scalar_lea.vmem %s5, %s1177
          // Predicated region
          $region75: #{encoder_forward.18} parent=73 // pred_check
            _
          $region76: #{encoder_forward.18} parent=73 // pred_check_branch
            %1180 = sbr.rel (0) target = $region78
          $region77: #{encoder_forward.18} parent=73 // pred_region
            // Predicated region
            $region79: #{encoder_forward.18} parent=77 // pred_check
              _
            $region80: #{encoder_forward.18} parent=77 // pred_check_branch
              %1182 = sbr.rel (0) target = $region82
            $region81: #{encoder_forward.18} parent=77 // pred_region
              %s1183 = scalar_lea.vmem %s1169, 8 [#allocation4]
              %s1184 = scalar_lea.vmem %s1178, 8
              loop: start=0, step=1, limit=1
              $region83: #{encoder_forward.18} parent=81 // loop_pre_header
                _
              $region84: #{encoder_forward.18} parent=81 // loop_header
                %s1186 = sphi 0, %s1190
                %p1187 = scmp.ge.s32.totalorder %s1186, 1
                %s1191 = sphi %s1169, %s1169
                %s1192 = sphi %s1178, %s1178
              $region85: #{encoder_forward.18} parent=81 // loop_header_branch
                %1189 = sbr.rel (%p1187) target = $region89
              $region86: #{encoder_forward.18} parent=81 // loop_body
                %v1193 = vld [vmem:[%s1191] sm:$0xff]
                %1194 = vst [vmem:[%s1192] sm:$0xff] %v1193
                %v1195 = vld [vmem:[%s1191 + $0xc] sm:$0xff]
                %1196 = vst [vmem:[%s1192 + $0x18] sm:$0xff] %v1195
                %v1197 = vld [vmem:[%s1191 + $0x18] sm:$0xff]
                %1198 = vst [vmem:[%s1192 + $0x30] sm:$0xff] %v1197
                %v1199 = vld [vmem:[%s1191 + $0x24] sm:$0xff]
                %1200 = vst [vmem:[%s1192 + $0x48] sm:$0xff] %v1199
                %v1201 = vld [vmem:[%s1191 + $0x30] sm:$0xff]
                %1202 = vst [vmem:[%s1192 + $0x60] sm:$0xff] %v1201
              $region87: #{encoder_forward.18} parent=81 // loop_footer
                %s1190 = sadd.s32 1, %s1186
              $region88: #{encoder_forward.18} parent=81 // loop_footer_branch
                %1185 = sbr.rel target = $region84
              $region89: #{encoder_forward.18} parent=81 // loop_exit
                _
              loop: start=0, step=1, limit=1
              $region90: #{encoder_forward.18} parent=81 // loop_pre_header
                _
              $region91: #{encoder_forward.18} parent=81 // loop_header
                %s1205 = sphi 0, %s1209
                %p1206 = scmp.ge.s32.totalorder %s1205, 1
                %s1210 = sphi %s1183, %s1183
                %s1211 = sphi %s1184, %s1184
              $region92: #{encoder_forward.18} parent=81 // loop_header_branch
                %1208 = sbr.rel (%p1206) target = $region96
              $region93: #{encoder_forward.18} parent=81 // loop_body
                %v1212 = vld [vmem:[%s1210] sm:$0xf]
                %1213 = vst [vmem:[%s1211] sm:$0xf] %v1212
                %v1214 = vld [vmem:[%s1210 + $0xc] sm:$0xf]
                %1215 = vst [vmem:[%s1211 + $0x18] sm:$0xf] %v1214
                %v1216 = vld [vmem:[%s1210 + $0x18] sm:$0xf]
                %1217 = vst [vmem:[%s1211 + $0x30] sm:$0xf] %v1216
                %v1218 = vld [vmem:[%s1210 + $0x24] sm:$0xf]
                %1219 = vst [vmem:[%s1211 + $0x48] sm:$0xf] %v1218
                %v1220 = vld [vmem:[%s1210 + $0x30] sm:$0xf]
                %1221 = vst [vmem:[%s1211 + $0x60] sm:$0xf] %v1220
              $region94: #{encoder_forward.18} parent=81 // loop_footer
                %s1209 = sadd.s32 1, %s1205
              $region95: #{encoder_forward.18} parent=81 // loop_footer_branch
                %1204 = sbr.rel target = $region91
              $region96: #{encoder_forward.18} parent=81 // loop_exit
                _
            $region82: #{encoder_forward.18} parent=77 // pred_fallthru
              _
          $region78: #{encoder_forward.18} parent=73 // pred_fallthru
            _
          %1222 = vnop
        $region74: #{encoder_forward.18} parent=61 // pred_fallthru
          _
      $region62: #{encoder_forward.18} parent=5 // pred_fallthru
        _
      %p1223 = scmp.le.s32.totalorder 2, %s11
      // Predicated region
      $region97: #{encoder_forward.18} parent=5 // pred_check
        %p1224 = pneg %p1223
      $region98: #{encoder_forward.18} parent=5 // pred_check_branch
        %1226 = sbr.rel (%p1224) target = $region100
      $region99: #{encoder_forward.18} parent=5 // pred_region
        %s1227 = ssub.s32 %s11, 2
        // Predicated region
        $region101: #{encoder_forward.18} parent=99 // pred_check
          %p1228 = pneg %p174
        $region102: #{encoder_forward.18} parent=99 // pred_check_branch
          %1230 = sbr.rel (%p1228) target = $region104
        $region103: #{encoder_forward.18} parent=99 // pred_region
          %s1231 = sand.u32 %s159, 1
          %s1232 = sand.u32 %s159, 1
          %s1233 = smul.addr %s1232, 60
          %s1234 = scalar_lea.vmem [#allocation4], %s1233
        $region104: #{encoder_forward.18} parent=99 // pred_fallthru
          _
      $region100: #{encoder_forward.18} parent=5 // pred_fallthru
        _
    $region6: #{encoder_forward.18} parent=1 // loop_footer
      %s15 = sadd.s32 1, %s11
    $region7: #{encoder_forward.18} parent=1 // loop_footer_branch
      %10 = sbr.rel target = $region3
    $region8: #{encoder_forward.18} parent=1 // loop_exit
      _

// kernel: custom-call
$region0: #{custom-call}
  %s0 = inlined_call_operand.vmem [shape: f32[34816], index: 0, kind: output, shape index: {}]

// kernel: encoder_forward.21
$region0: #{encoder_forward.21}
  #allocation0 [shape = 'u32[]', space=smem, size = 0x4, offset = 0x4, fixed_abs, tag = 'smem constant byte address 0x4 - core index']
  #allocation1 [shape = 'u32[144,128]{1,0:T(1,128)}', space=vmem, size = 0x12000, scoped, tag = 'internal scratch']
  %s0 = inlined_call_operand.vmem [shape: f32[34,256], index: 0, kind: input, shape index: {}, may-alias: {0,9}]
  %s1 = inlined_call_operand.vmem [shape: f32[1,256], index: 1, kind: input, shape index: {}]
  %s2 = inlined_call_operand.vmem [shape: f32[1,256], index: 2, kind: input, shape index: {}]
  %s3 = inlined_call_operand.vmem [shape: bf16[256,1024], index: 3, kind: input, shape index: {}]
  %s4 = inlined_call_operand.vmem [shape: f32[1,1024], index: 4, kind: input, shape index: {}]
  %s5 = inlined_call_operand.vmem [shape: bf16[1024,256], index: 5, kind: input, shape index: {}]
  %s6 = inlined_call_operand.vmem [shape: f32[1,256], index: 6, kind: input, shape index: {}]
  %s7 = inlined_call_operand.vmem [shape: f32[1,256], index: 7, kind: input, shape index: {}]
  %s8 = inlined_call_operand.vmem [shape: f32[1,256], index: 8, kind: input, shape index: {}]
  %s9 = inlined_call_operand.vmem [shape: f32[34,256], index: 9, kind: output, shape index: {0}, may-alias: {0,9}]
  %s10 = inlined_call_operand.vmem [shape: f32[34,256], index: 10, kind: output, shape index: {1}]
  %11 = xla_tuple %s9, %s10
  %s12 = sld [smem:[#allocation0]]
  $region54: #{encoder_forward.21} parent=0
    _
  %s14 = ssub.s32 1, %s12
  %s15 = scalar_select 0, %s14, %s12
  // Predicated region
  $region2: #{encoder_forward.21} parent=0 // pred_check
    _
  $region3: #{encoder_forward.21} parent=0 // pred_check_branch
    %17 = sbr.rel (0) target = $region5
  $region4: #{encoder_forward.21} parent=0 // pred_region
    _
  $region5: #{encoder_forward.21} parent=0 // pred_fallthru
    _
  // Predicated region
  $region6: #{encoder_forward.21} parent=0 // pred_check
    _
  $region7: #{encoder_forward.21} parent=0 // pred_check_branch
    %19 = sbr.rel (0) target = $region9
  $region8: #{encoder_forward.21} parent=0 // pred_region
    _
  $region9: #{encoder_forward.21} parent=0 // pred_fallthru
    _
  // Predicated region
  $region10: #{encoder_forward.21} parent=0 // pred_check
    _
  $region11: #{encoder_forward.21} parent=0 // pred_check_branch
    %21 = sbr.rel (0) target = $region13
  $region12: #{encoder_forward.21} parent=0 // pred_region
    _
  $region13: #{encoder_forward.21} parent=0 // pred_fallthru
    _
  // Predicated region
  $region14: #{encoder_forward.21} parent=0 // pred_check
    _
  $region15: #{encoder_forward.21} parent=0 // pred_check_branch
    %23 = sbr.rel (0) target = $region17
  $region16: #{encoder_forward.21} parent=0 // pred_region
    _
  $region17: #{encoder_forward.21} parent=0 // pred_fallthru
    _
  // Predicated region
  $region18: #{encoder_forward.21} parent=0 // pred_check
    _
  $region19: #{encoder_forward.21} parent=0 // pred_check_branch
    %25 = sbr.rel (0) target = $region21
  $region20: #{encoder_forward.21} parent=0 // pred_region
    _
  $region21: #{encoder_forward.21} parent=0 // pred_fallthru
    _
  // Predicated region
  $region22: #{encoder_forward.21} parent=0 // pred_check
    _
  $region23: #{encoder_forward.21} parent=0 // pred_check_branch
    %27 = sbr.rel (0) target = $region25
  $region24: #{encoder_forward.21} parent=0 // pred_region
    _
  $region25: #{encoder_forward.21} parent=0 // pred_fallthru
    _
  // Predicated region
  $region26: #{encoder_forward.21} parent=0 // pred_check
    _
  $region27: #{encoder_forward.21} parent=0 // pred_check_branch
    %29 = sbr.rel (0) target = $region29
  $region28: #{encoder_forward.21} parent=0 // pred_region
    _
  $region29: #{encoder_forward.21} parent=0 // pred_fallthru
    _
  // Predicated region
  $region30: #{encoder_forward.21} parent=0 // pred_check
    _
  $region31: #{encoder_forward.21} parent=0 // pred_check_branch
    %31 = sbr.rel (0) target = $region33
  $region32: #{encoder_forward.21} parent=0 // pred_region
    _
  $region33: #{encoder_forward.21} parent=0 // pred_fallthru
    _
  // Predicated region
  $region34: #{encoder_forward.21} parent=0 // pred_check
    _
  $region35: #{encoder_forward.21} parent=0 // pred_check_branch
    %33 = sbr.rel (0) target = $region37
  $region36: #{encoder_forward.21} parent=0 // pred_region
    _
  $region37: #{encoder_forward.21} parent=0 // pred_fallthru
    _
  %v34 = vld [vmem:[%s0] sm:$0xff]
  %v35 = vld [vmem:[%s0 + $0x8] sm:$0xff]
  %v36 = vld [vmem:[%s0 + $0x10] sm:$0xff]
  %v37 = vld [vmem:[%s0 + $0x18] sm:$0xff]
  %v38 = vld [vmem:[%s0 + $0x20] sm:$0xff]
  %v39 = vld [vmem:[%s0 + $0x28] sm:$0xff]
  %v40 = vld [vmem:[%s0 + $0x30] sm:$0xff]
  %v41 = vld [vmem:[%s0 + $0x38] sm:$0xff]
  %v42 = vld [vmem:[%s0 + $0x40] sm:$0x3]
  %v43 = vld [vmem:[%s0 + $0x48] sm:$0x3]
  %v44 = vld [vmem:[%s1] sm:$0x3]
  %v45 = vld [vmem:[%s2] sm:$0x3]
  %v46 = vadd.f32 %v34, %v35
  %47 = vadd.xlane.f32.xlu0 %v46
  %v48 = vpop.xlane.xlu0 %47
  %v49 = vadd.f32 %v36, %v37
  %50 = vadd.xlane.f32.xlu0 %v49
  %v51 = vpop.xlane.xlu0 %50
  %v52 = vadd.f32 %v38, %v39
  %53 = vadd.xlane.f32.xlu0 %v52
  %v54 = vpop.xlane.xlu0 %53
  %v55 = vadd.f32 %v40, %v41
  %56 = vadd.xlane.f32.xlu0 %v55
  %v57 = vpop.xlane.xlu0 %56
  %vm58 = vcmask 1041408
  %v59 = vsel %vm58, %v42, 0.0
  %v60 = vsel %vm58, %v43, 0.0
  %v61 = vadd.f32 %v59, %v60
  %62 = vadd.xlane.f32.xlu0 %v61
  %v63 = vpop.xlane.xlu0 %62
  %v64 = vrcp.pop 256.0
  %v65 = vmul.f32 %v48, %v64
  %v66 = vmul.f32 %v51, %v64
  %v67 = vmul.f32 %v54, %v64
  %v68 = vmul.f32 %v57, %v64
  %v69 = vmul.f32 %v63, %v64
  %v70 = vsub.f32 %v34, %v65
  %v71 = vsub.f32 %v35, %v65
  %v72 = vsub.f32 %v36, %v66
  %v73 = vsub.f32 %v37, %v66
  %v74 = vsub.f32 %v38, %v67
  %v75 = vsub.f32 %v39, %v67
  %v76 = vsub.f32 %v40, %v68
  %v77 = vsub.f32 %v41, %v68
  %v78 = vsub.f32 %v42, %v69
  %v79 = vsub.f32 %v43, %v69
  %v80 = vmul.f32 %v70, %v70
  %v81 = vmul.f32 %v71, %v71
  %v82 = vmul.f32 %v72, %v72
  %v83 = vmul.f32 %v73, %v73
  %v84 = vmul.f32 %v74, %v74
  %v85 = vmul.f32 %v75, %v75
  %v86 = vmul.f32 %v76, %v76
  %v87 = vmul.f32 %v77, %v77
  %v88 = vmul.f32 %v78, %v78
  %v89 = vmul.f32 %v79, %v79
  %v90 = vadd.f32 %v80, %v81
  %91 = vadd.xlane.f32.xlu0 %v90
  %v92 = vpop.xlane.xlu0 %91
  %v93 = vadd.f32 %v82, %v83
  %94 = vadd.xlane.f32.xlu0 %v93
  %v95 = vpop.xlane.xlu0 %94
  %v96 = vadd.f32 %v84, %v85
  %97 = vadd.xlane.f32.xlu0 %v96
  %v98 = vpop.xlane.xlu0 %97
  %v99 = vadd.f32 %v86, %v87
  %100 = vadd.xlane.f32.xlu0 %v99
  %v101 = vpop.xlane.xlu0 %100
  %v102 = vsel %vm58, %v88, 0.0
  %v103 = vsel %vm58, %v89, 0.0
  %v104 = vadd.f32 %v102, %v103
  %105 = vadd.xlane.f32.xlu0 %v104
  %v106 = vpop.xlane.xlu0 %105
  %v107 = vmul.f32 %v92, %v64
  %v108 = vmul.f32 %v95, %v64
  %v109 = vmul.f32 %v98, %v64
  %v110 = vmul.f32 %v101, %v64
  %v111 = vmul.f32 %v106, %v64
  %v112 = vadd.f32 %v107, 1e-06
  %v113 = vadd.f32 %v108, 1e-06
  %v114 = vadd.f32 %v109, 1e-06
  %v115 = vadd.f32 %v110, 1e-06
  %v116 = vadd.f32 %v111, 1e-06
  %v117 = vrsqrt.pop %v112
  %v118 = vrsqrt.pop %v113
  %v119 = vrsqrt.pop %v114
  %v120 = vrsqrt.pop %v115
  %v121 = vrsqrt.pop %v116
  %v122 = vmul.f32 %v70, %v117
  %v123 = vmul.f32 %v71, %v117
  %v124 = vmul.f32 %v72, %v118
  %v125 = vmul.f32 %v73, %v118
  %v126 = vmul.f32 %v74, %v119
  %v127 = vmul.f32 %v75, %v119
  %v128 = vmul.f32 %v76, %v120
  %v129 = vmul.f32 %v77, %v120
  %v130 = vmul.f32 %v78, %v121
  %v131 = vmul.f32 %v79, %v121
  %v133 = vlaneseq
  %v134 = vshrl.u32 %v133, 7
  %v135 = vsub.s32 0, %v134
  %v136 = vrot.slane %v44, %v135
  %v137 = vlaneseq
  %v138 = vshrl.u32 %v137, 7
  %v139 = vsub.s32 1, %v138
  %v140 = vrot.slane %v44, %v139
  %v143 = vmul.f32 %v122, %v136
  %v144 = vmul.f32 %v123, %v140
  %v145 = vmul.f32 %v124, %v136
  %v146 = vmul.f32 %v125, %v140
  %v147 = vmul.f32 %v126, %v136
  %v148 = vmul.f32 %v127, %v140
  %v149 = vmul.f32 %v128, %v136
  %v150 = vmul.f32 %v129, %v140
  %v151 = vmul.f32 %v130, %v136
  %v152 = vmul.f32 %v131, %v140
  %v154 = vlaneseq
  %v155 = vshrl.u32 %v154, 7
  %v156 = vsub.s32 0, %v155
  %v157 = vrot.slane %v45, %v156
  %v158 = vlaneseq
  %v159 = vshrl.u32 %v158, 7
  %v160 = vsub.s32 1, %v159
  %v161 = vrot.slane %v45, %v160
  %v164 = vadd.f32 %v143, %v157
  %v165 = vadd.f32 %v144, %v161
  %v166 = vadd.f32 %v145, %v157
  %v167 = vadd.f32 %v146, %v161
  %v168 = vadd.f32 %v147, %v157
  %v169 = vadd.f32 %v148, %v161
  %v170 = vadd.f32 %v149, %v157
  %v171 = vadd.f32 %v150, %v161
  %v172 = vadd.f32 %v151, %v157
  %v173 = vadd.f32 %v152, %v161
  %v174 = vpack.c.bf16 %v166, %v164
  %v175 = vpack.c.bf16 %v167, %v165
  %v176 = vpack.c.bf16 %v170, %v168
  %v177 = vpack.c.bf16 %v171, %v169
  %v178 = vpack.c.bf16 %v172, %v172
  %v179 = vpack.c.bf16 %v173, %v173
  %v180 = vld [vmem:[%s3] sm:$0xff]
  %v181 = vld [vmem:[%s3 + $0x8] sm:$0xff]
  %v182 = vld [vmem:[%s3 + $0x10] sm:$0xff]
  %v183 = vld [vmem:[%s3 + $0x18] sm:$0xff]
  %v184 = vld [vmem:[%s3 + $0x20] sm:$0xff]
  %v185 = vld [vmem:[%s3 + $0x28] sm:$0xff]
  %v186 = vld [vmem:[%s3 + $0x30] sm:$0xff]
  %v187 = vld [vmem:[%s3 + $0x38] sm:$0xff]
  %v188 = vld [vmem:[%s3 + $0x40] sm:$0xff]
  %v189 = vld [vmem:[%s3 + $0x48] sm:$0xff]
  %v190 = vld [vmem:[%s3 + $0x50] sm:$0xff]
  %v191 = vld [vmem:[%s3 + $0x58] sm:$0xff]
  %v192 = vld [vmem:[%s3 + $0x60] sm:$0xff]
  %v193 = vld [vmem:[%s3 + $0x68] sm:$0xff]
  %v194 = vld [vmem:[%s3 + $0x70] sm:$0xff]
  %v195 = vld [vmem:[%s3 + $0x78] sm:$0xff]
  %v196 = vld [vmem:[%s3 + $0x80] sm:$0xff]
  %v197 = vld [vmem:[%s3 + $0x88] sm:$0xff]
  %v198 = vld [vmem:[%s3 + $0x90] sm:$0xff]
  %v199 = vld [vmem:[%s3 + $0x98] sm:$0xff]
  %v200 = vld [vmem:[%s3 + $0xa0] sm:$0xff]
  %v201 = vld [vmem:[%s3 + $0xa8] sm:$0xff]
  %v202 = vld [vmem:[%s3 + $0xb0] sm:$0xff]
  %v203 = vld [vmem:[%s3 + $0xb8] sm:$0xff]
  %v204 = vld [vmem:[%s3 + $0xc0] sm:$0xff]
  %v205 = vld [vmem:[%s3 + $0xc8] sm:$0xff]
  %v206 = vld [vmem:[%s3 + $0xd0] sm:$0xff]
  %v207 = vld [vmem:[%s3 + $0xd8] sm:$0xff]
  %v208 = vld [vmem:[%s3 + $0xe0] sm:$0xff]
  %v209 = vld [vmem:[%s3 + $0xe8] sm:$0xff]
  %v210 = vld [vmem:[%s3 + $0xf0] sm:$0xff]
  %v211 = vld [vmem:[%s3 + $0xf8] sm:$0xff]
  %v212 = vld [vmem:[%s3 + $0x100] sm:$0xff]
  %v213 = vld [vmem:[%s3 + $0x108] sm:$0xff]
  %v214 = vld [vmem:[%s3 + $0x110] sm:$0xff]
  %v215 = vld [vmem:[%s3 + $0x118] sm:$0xff]
  %v216 = vld [vmem:[%s3 + $0x120] sm:$0xff]
  %v217 = vld [vmem:[%s3 + $0x128] sm:$0xff]
  %v218 = vld [vmem:[%s3 + $0x130] sm:$0xff]
  %v219 = vld [vmem:[%s3 + $0x138] sm:$0xff]
  %v220 = vld [vmem:[%s3 + $0x140] sm:$0xff]
  %v221 = vld [vmem:[%s3 + $0x148] sm:$0xff]
  %v222 = vld [vmem:[%s3 + $0x150] sm:$0xff]
  %v223 = vld [vmem:[%s3 + $0x158] sm:$0xff]
  %v224 = vld [vmem:[%s3 + $0x160] sm:$0xff]
  %v225 = vld [vmem:[%s3 + $0x168] sm:$0xff]
  %v226 = vld [vmem:[%s3 + $0x170] sm:$0xff]
  %v227 = vld [vmem:[%s3 + $0x178] sm:$0xff]
  %v228 = vld [vmem:[%s3 + $0x180] sm:$0xff]
  %v229 = vld [vmem:[%s3 + $0x188] sm:$0xff]
  %v230 = vld [vmem:[%s3 + $0x190] sm:$0xff]
  %v231 = vld [vmem:[%s3 + $0x198] sm:$0xff]
  %v232 = vld [vmem:[%s3 + $0x1a0] sm:$0xff]
  %v233 = vld [vmem:[%s3 + $0x1a8] sm:$0xff]
  %v234 = vld [vmem:[%s3 + $0x1b0] sm:$0xff]
  %v235 = vld [vmem:[%s3 + $0x1b8] sm:$0xff]
  %v236 = vld [vmem:[%s3 + $0x1c0] sm:$0xff]
  %v237 = vld [vmem:[%s3 + $0x1c8] sm:$0xff]
  %v238 = vld [vmem:[%s3 + $0x1d0] sm:$0xff]
  %v239 = vld [vmem:[%s3 + $0x1d8] sm:$0xff]
  %v240 = vld [vmem:[%s3 + $0x1e0] sm:$0xff]
  %v241 = vld [vmem:[%s3 + $0x1e8] sm:$0xff]
  %v242 = vld [vmem:[%s3 + $0x1f0] sm:$0xff]
  %v243 = vld [vmem:[%s3 + $0x1f8] sm:$0xff]
  %v244 = vld [vmem:[%s3 + $0x200] sm:$0xff]
  %v245 = vld [vmem:[%s3 + $0x208] sm:$0xff]
  %v246 = vld [vmem:[%s3 + $0x210] sm:$0xff]
  %v247 = vld [vmem:[%s3 + $0x218] sm:$0xff]
  %v248 = vld [vmem:[%s3 + $0x220] sm:$0xff]
  %v249 = vld [vmem:[%s3 + $0x228] sm:$0xff]
  %v250 = vld [vmem:[%s3 + $0x230] sm:$0xff]
  %v251 = vld [vmem:[%s3 + $0x238] sm:$0xff]
  %v252 = vld [vmem:[%s3 + $0x240] sm:$0xff]
  %v253 = vld [vmem:[%s3 + $0x248] sm:$0xff]
  %v254 = vld [vmem:[%s3 + $0x250] sm:$0xff]
  %v255 = vld [vmem:[%s3 + $0x258] sm:$0xff]
  %v256 = vld [vmem:[%s3 + $0x260] sm:$0xff]
  %v257 = vld [vmem:[%s3 + $0x268] sm:$0xff]
  %v258 = vld [vmem:[%s3 + $0x270] sm:$0xff]
  %v259 = vld [vmem:[%s3 + $0x278] sm:$0xff]
  %v260 = vld [vmem:[%s3 + $0x280] sm:$0xff]
  %v261 = vld [vmem:[%s3 + $0x288] sm:$0xff]
  %v262 = vld [vmem:[%s3 + $0x290] sm:$0xff]
  %v263 = vld [vmem:[%s3 + $0x298] sm:$0xff]
  %v264 = vld [vmem:[%s3 + $0x2a0] sm:$0xff]
  %v265 = vld [vmem:[%s3 + $0x2a8] sm:$0xff]
  %v266 = vld [vmem:[%s3 + $0x2b0] sm:$0xff]
  %v267 = vld [vmem:[%s3 + $0x2b8] sm:$0xff]
  %v268 = vld [vmem:[%s3 + $0x2c0] sm:$0xff]
  %v269 = vld [vmem:[%s3 + $0x2c8] sm:$0xff]
  %v270 = vld [vmem:[%s3 + $0x2d0] sm:$0xff]
  %v271 = vld [vmem:[%s3 + $0x2d8] sm:$0xff]
  %v272 = vld [vmem:[%s3 + $0x2e0] sm:$0xff]
  %v273 = vld [vmem:[%s3 + $0x2e8] sm:$0xff]
  %v274 = vld [vmem:[%s3 + $0x2f0] sm:$0xff]
  %v275 = vld [vmem:[%s3 + $0x2f8] sm:$0xff]
  %v276 = vld [vmem:[%s3 + $0x300] sm:$0xff]
  %v277 = vld [vmem:[%s3 + $0x308] sm:$0xff]
  %v278 = vld [vmem:[%s3 + $0x310] sm:$0xff]
  %v279 = vld [vmem:[%s3 + $0x318] sm:$0xff]
  %v280 = vld [vmem:[%s3 + $0x320] sm:$0xff]
  %v281 = vld [vmem:[%s3 + $0x328] sm:$0xff]
  %v282 = vld [vmem:[%s3 + $0x330] sm:$0xff]
  %v283 = vld [vmem:[%s3 + $0x338] sm:$0xff]
  %v284 = vld [vmem:[%s3 + $0x340] sm:$0xff]
  %v285 = vld [vmem:[%s3 + $0x348] sm:$0xff]
  %v286 = vld [vmem:[%s3 + $0x350] sm:$0xff]
  %v287 = vld [vmem:[%s3 + $0x358] sm:$0xff]
  %v288 = vld [vmem:[%s3 + $0x360] sm:$0xff]
  %v289 = vld [vmem:[%s3 + $0x368] sm:$0xff]
  %v290 = vld [vmem:[%s3 + $0x370] sm:$0xff]
  %v291 = vld [vmem:[%s3 + $0x378] sm:$0xff]
  %v292 = vld [vmem:[%s3 + $0x380] sm:$0xff]
  %v293 = vld [vmem:[%s3 + $0x388] sm:$0xff]
  %v294 = vld [vmem:[%s3 + $0x390] sm:$0xff]
  %v295 = vld [vmem:[%s3 + $0x398] sm:$0xff]
  %v296 = vld [vmem:[%s3 + $0x3a0] sm:$0xff]
  %v297 = vld [vmem:[%s3 + $0x3a8] sm:$0xff]
  %v298 = vld [vmem:[%s3 + $0x3b0] sm:$0xff]
  %v299 = vld [vmem:[%s3 + $0x3b8] sm:$0xff]
  %v300 = vld [vmem:[%s3 + $0x3c0] sm:$0xff]
  %v301 = vld [vmem:[%s3 + $0x3c8] sm:$0xff]
  %v302 = vld [vmem:[%s3 + $0x3d0] sm:$0xff]
  %v303 = vld [vmem:[%s3 + $0x3d8] sm:$0xff]
  %v304 = vld [vmem:[%s3 + $0x3e0] sm:$0xff]
  %v305 = vld [vmem:[%s3 + $0x3e8] sm:$0xff]
  %v306 = vld [vmem:[%s3 + $0x3f0] sm:$0xff]
  %v307 = vld [vmem:[%s3 + $0x3f8] sm:$0xff]
  %v308 = vld [vmem:[%s4] sm:$0xff]
  %v310 = vlaneseq
  %v311 = vshrl.u32 %v310, 7
  %v312 = vsub.s32 0, %v311
  %v313 = vrot.slane %v308, %v312
  %v314 = vlaneseq
  %v315 = vshrl.u32 %v314, 7
  %v316 = vsub.s32 1, %v315
  %v317 = vrot.slane %v308, %v316
  %v318 = vlaneseq
  %v319 = vshrl.u32 %v318, 7
  %v320 = vsub.s32 2, %v319
  %v321 = vrot.slane %v308, %v320
  %v322 = vlaneseq
  %v323 = vshrl.u32 %v322, 7
  %v324 = vsub.s32 3, %v323
  %v325 = vrot.slane %v308, %v324
  %v326 = vlaneseq
  %v327 = vshrl.u32 %v326, 7
  %v328 = vsub.s32 4, %v327
  %v329 = vrot.slane %v308, %v328
  %v330 = vlaneseq
  %v331 = vshrl.u32 %v330, 7
  %v332 = vsub.s32 5, %v331
  %v333 = vrot.slane %v308, %v332
  %v334 = vlaneseq
  %v335 = vshrl.u32 %v334, 7
  %v336 = vsub.s32 6, %v335
  %v337 = vrot.slane %v308, %v336
  %v338 = vlaneseq
  %v339 = vshrl.u32 %v338, 7
  %v340 = vsub.s32 7, %v339
  %v341 = vrot.slane %v308, %v340
  %v478 = vunpack.c.l.b16 %v180
  %v479 = vunpack.c.h.b16 %v180
  %v480 = vunpack.c.l.b16 %v181
  %v481 = vunpack.c.h.b16 %v181
  %v482 = vunpack.c.l.b16 %v182
  %v483 = vunpack.c.h.b16 %v182
  %v484 = vunpack.c.l.b16 %v183
  %v485 = vunpack.c.h.b16 %v183
  %v486 = vunpack.c.l.b16 %v184
  %v487 = vunpack.c.h.b16 %v184
  %v488 = vunpack.c.l.b16 %v185
  %v489 = vunpack.c.h.b16 %v185
  %v490 = vunpack.c.l.b16 %v186
  %v491 = vunpack.c.h.b16 %v186
  %v492 = vunpack.c.l.b16 %v187
  %v493 = vunpack.c.h.b16 %v187
  %v494 = vunpack.c.l.b16 %v188
  %v495 = vunpack.c.h.b16 %v188
  %v496 = vunpack.c.l.b16 %v189
  %v497 = vunpack.c.h.b16 %v189
  %v498 = vunpack.c.l.b16 %v190
  %v499 = vunpack.c.h.b16 %v190
  %v500 = vunpack.c.l.b16 %v191
  %v501 = vunpack.c.h.b16 %v191
  %v502 = vunpack.c.l.b16 %v192
  %v503 = vunpack.c.h.b16 %v192
  %v504 = vunpack.c.l.b16 %v193
  %v505 = vunpack.c.h.b16 %v193
  %v506 = vunpack.c.l.b16 %v194
  %v507 = vunpack.c.h.b16 %v194
  %v508 = vunpack.c.l.b16 %v195
  %v509 = vunpack.c.h.b16 %v195
  %v510 = vunpack.c.l.b16 %v196
  %v511 = vunpack.c.h.b16 %v196
  %v512 = vunpack.c.l.b16 %v197
  %v513 = vunpack.c.h.b16 %v197
  %v514 = vunpack.c.l.b16 %v198
  %v515 = vunpack.c.h.b16 %v198
  %v516 = vunpack.c.l.b16 %v199
  %v517 = vunpack.c.h.b16 %v199
  %v518 = vunpack.c.l.b16 %v200
  %v519 = vunpack.c.h.b16 %v200
  %v520 = vunpack.c.l.b16 %v201
  %v521 = vunpack.c.h.b16 %v201
  %v522 = vunpack.c.l.b16 %v202
  %v523 = vunpack.c.h.b16 %v202
  %v524 = vunpack.c.l.b16 %v203
  %v525 = vunpack.c.h.b16 %v203
  %v526 = vunpack.c.l.b16 %v204
  %v527 = vunpack.c.h.b16 %v204
  %v528 = vunpack.c.l.b16 %v205
  %v529 = vunpack.c.h.b16 %v205
  %v530 = vunpack.c.l.b16 %v206
  %v531 = vunpack.c.h.b16 %v206
  %v532 = vunpack.c.l.b16 %v207
  %v533 = vunpack.c.h.b16 %v207
  %v534 = vunpack.c.l.b16 %v208
  %v535 = vunpack.c.h.b16 %v208
  %v536 = vunpack.c.l.b16 %v209
  %v537 = vunpack.c.h.b16 %v209
  %v538 = vunpack.c.l.b16 %v210
  %v539 = vunpack.c.h.b16 %v210
  %v540 = vunpack.c.l.b16 %v211
  %v541 = vunpack.c.h.b16 %v211
  %v542 = vunpack.c.l.b16 %v212
  %v543 = vunpack.c.h.b16 %v212
  %v544 = vunpack.c.l.b16 %v213
  %v545 = vunpack.c.h.b16 %v213
  %v546 = vunpack.c.l.b16 %v214
  %v547 = vunpack.c.h.b16 %v214
  %v548 = vunpack.c.l.b16 %v215
  %v549 = vunpack.c.h.b16 %v215
  %v550 = vunpack.c.l.b16 %v216
  %v551 = vunpack.c.h.b16 %v216
  %v552 = vunpack.c.l.b16 %v217
  %v553 = vunpack.c.h.b16 %v217
  %v554 = vunpack.c.l.b16 %v218
  %v555 = vunpack.c.h.b16 %v218
  %v556 = vunpack.c.l.b16 %v219
  %v557 = vunpack.c.h.b16 %v219
  %v558 = vunpack.c.l.b16 %v220
  %v559 = vunpack.c.h.b16 %v220
  %v560 = vunpack.c.l.b16 %v221
  %v561 = vunpack.c.h.b16 %v221
  %v562 = vunpack.c.l.b16 %v222
  %v563 = vunpack.c.h.b16 %v222
  %v564 = vunpack.c.l.b16 %v223
  %v565 = vunpack.c.h.b16 %v223
  %v566 = vunpack.c.l.b16 %v224
  %v567 = vunpack.c.h.b16 %v224
  %v568 = vunpack.c.l.b16 %v225
  %v569 = vunpack.c.h.b16 %v225
  %v570 = vunpack.c.l.b16 %v226
  %v571 = vunpack.c.h.b16 %v226
  %v572 = vunpack.c.l.b16 %v227
  %v573 = vunpack.c.h.b16 %v227
  %v574 = vunpack.c.l.b16 %v228
  %v575 = vunpack.c.h.b16 %v228
  %v576 = vunpack.c.l.b16 %v229
  %v577 = vunpack.c.h.b16 %v229
  %v578 = vunpack.c.l.b16 %v230
  %v579 = vunpack.c.h.b16 %v230
  %v580 = vunpack.c.l.b16 %v231
  %v581 = vunpack.c.h.b16 %v231
  %v582 = vunpack.c.l.b16 %v232
  %v583 = vunpack.c.h.b16 %v232
  %v584 = vunpack.c.l.b16 %v233
  %v585 = vunpack.c.h.b16 %v233
  %v586 = vunpack.c.l.b16 %v234
  %v587 = vunpack.c.h.b16 %v234
  %v588 = vunpack.c.l.b16 %v235
  %v589 = vunpack.c.h.b16 %v235
  %v590 = vunpack.c.l.b16 %v236
  %v591 = vunpack.c.h.b16 %v236
  %v592 = vunpack.c.l.b16 %v237
  %v593 = vunpack.c.h.b16 %v237
  %v594 = vunpack.c.l.b16 %v238
  %v595 = vunpack.c.h.b16 %v238
  %v596 = vunpack.c.l.b16 %v239
  %v597 = vunpack.c.h.b16 %v239
  %v598 = vunpack.c.l.b16 %v240
  %v599 = vunpack.c.h.b16 %v240
  %v600 = vunpack.c.l.b16 %v241
  %v601 = vunpack.c.h.b16 %v241
  %v602 = vunpack.c.l.b16 %v242
  %v603 = vunpack.c.h.b16 %v242
  %v604 = vunpack.c.l.b16 %v243
  %v605 = vunpack.c.h.b16 %v243
  %v606 = vunpack.c.l.b16 %v244
  %v607 = vunpack.c.h.b16 %v244
  %v608 = vunpack.c.l.b16 %v245
  %v609 = vunpack.c.h.b16 %v245
  %v610 = vunpack.c.l.b16 %v246
  %v611 = vunpack.c.h.b16 %v246
  %v612 = vunpack.c.l.b16 %v247
  %v613 = vunpack.c.h.b16 %v247
  %v614 = vunpack.c.l.b16 %v248
  %v615 = vunpack.c.h.b16 %v248
  %v616 = vunpack.c.l.b16 %v249
  %v617 = vunpack.c.h.b16 %v249
  %v618 = vunpack.c.l.b16 %v250
  %v619 = vunpack.c.h.b16 %v250
  %v620 = vunpack.c.l.b16 %v251
  %v621 = vunpack.c.h.b16 %v251
  %v622 = vunpack.c.l.b16 %v252
  %v623 = vunpack.c.h.b16 %v252
  %v624 = vunpack.c.l.b16 %v253
  %v625 = vunpack.c.h.b16 %v253
  %v626 = vunpack.c.l.b16 %v254
  %v627 = vunpack.c.h.b16 %v254
  %v628 = vunpack.c.l.b16 %v255
  %v629 = vunpack.c.h.b16 %v255
  %v630 = vunpack.c.l.b16 %v256
  %v631 = vunpack.c.h.b16 %v256
  %v632 = vunpack.c.l.b16 %v257
  %v633 = vunpack.c.h.b16 %v257
  %v634 = vunpack.c.l.b16 %v258
  %v635 = vunpack.c.h.b16 %v258
  %v636 = vunpack.c.l.b16 %v259
  %v637 = vunpack.c.h.b16 %v259
  %v638 = vunpack.c.l.b16 %v260
  %v639 = vunpack.c.h.b16 %v260
  %v640 = vunpack.c.l.b16 %v261
  %v641 = vunpack.c.h.b16 %v261
  %v642 = vunpack.c.l.b16 %v262
  %v643 = vunpack.c.h.b16 %v262
  %v644 = vunpack.c.l.b16 %v263
  %v645 = vunpack.c.h.b16 %v263
  %v646 = vunpack.c.l.b16 %v264
  %v647 = vunpack.c.h.b16 %v264
  %v648 = vunpack.c.l.b16 %v265
  %v649 = vunpack.c.h.b16 %v265
  %v650 = vunpack.c.l.b16 %v266
  %v651 = vunpack.c.h.b16 %v266
  %v652 = vunpack.c.l.b16 %v267
  %v653 = vunpack.c.h.b16 %v267
  %v654 = vunpack.c.l.b16 %v268
  %v655 = vunpack.c.h.b16 %v268
  %v656 = vunpack.c.l.b16 %v269
  %v657 = vunpack.c.h.b16 %v269
  %v658 = vunpack.c.l.b16 %v270
  %v659 = vunpack.c.h.b16 %v270
  %v660 = vunpack.c.l.b16 %v271
  %v661 = vunpack.c.h.b16 %v271
  %v662 = vunpack.c.l.b16 %v272
  %v663 = vunpack.c.h.b16 %v272
  %v664 = vunpack.c.l.b16 %v273
  %v665 = vunpack.c.h.b16 %v273
  %v666 = vunpack.c.l.b16 %v274
  %v667 = vunpack.c.h.b16 %v274
  %v668 = vunpack.c.l.b16 %v275
  %v669 = vunpack.c.h.b16 %v275
  %v670 = vunpack.c.l.b16 %v276
  %v671 = vunpack.c.h.b16 %v276
  %v672 = vunpack.c.l.b16 %v277
  %v673 = vunpack.c.h.b16 %v277
  %v674 = vunpack.c.l.b16 %v278
  %v675 = vunpack.c.h.b16 %v278
  %v676 = vunpack.c.l.b16 %v279
  %v677 = vunpack.c.h.b16 %v279
  %v678 = vunpack.c.l.b16 %v280
  %v679 = vunpack.c.h.b16 %v280
  %v680 = vunpack.c.l.b16 %v281
  %v681 = vunpack.c.h.b16 %v281
  %v682 = vunpack.c.l.b16 %v282
  %v683 = vunpack.c.h.b16 %v282
  %v684 = vunpack.c.l.b16 %v283
  %v685 = vunpack.c.h.b16 %v283
  %v686 = vunpack.c.l.b16 %v284
  %v687 = vunpack.c.h.b16 %v284
  %v688 = vunpack.c.l.b16 %v285
  %v689 = vunpack.c.h.b16 %v285
  %v690 = vunpack.c.l.b16 %v286
  %v691 = vunpack.c.h.b16 %v286
  %v692 = vunpack.c.l.b16 %v287
  %v693 = vunpack.c.h.b16 %v287
  %v694 = vunpack.c.l.b16 %v288
  %v695 = vunpack.c.h.b16 %v288
  %v696 = vunpack.c.l.b16 %v289
  %v697 = vunpack.c.h.b16 %v289
  %v698 = vunpack.c.l.b16 %v290
  %v699 = vunpack.c.h.b16 %v290
  %v700 = vunpack.c.l.b16 %v291
  %v701 = vunpack.c.h.b16 %v291
  %v702 = vunpack.c.l.b16 %v292
  %v703 = vunpack.c.h.b16 %v292
  %v704 = vunpack.c.l.b16 %v293
  %v705 = vunpack.c.h.b16 %v293
  %v706 = vunpack.c.l.b16 %v294
  %v707 = vunpack.c.h.b16 %v294
  %v708 = vunpack.c.l.b16 %v295
  %v709 = vunpack.c.h.b16 %v295
  %v710 = vunpack.c.l.b16 %v296
  %v711 = vunpack.c.h.b16 %v296
  %v712 = vunpack.c.l.b16 %v297
  %v713 = vunpack.c.h.b16 %v297
  %v714 = vunpack.c.l.b16 %v298
  %v715 = vunpack.c.h.b16 %v298
  %v716 = vunpack.c.l.b16 %v299
  %v717 = vunpack.c.h.b16 %v299
  %v718 = vunpack.c.l.b16 %v300
  %v719 = vunpack.c.h.b16 %v300
  %v720 = vunpack.c.l.b16 %v301
  %v721 = vunpack.c.h.b16 %v301
  %v722 = vunpack.c.l.b16 %v302
  %v723 = vunpack.c.h.b16 %v302
  %v724 = vunpack.c.l.b16 %v303
  %v725 = vunpack.c.h.b16 %v303
  %v726 = vunpack.c.l.b16 %v304
  %v727 = vunpack.c.h.b16 %v304
  %v728 = vunpack.c.l.b16 %v305
  %v729 = vunpack.c.h.b16 %v305
  %v730 = vunpack.c.l.b16 %v306
  %v731 = vunpack.c.h.b16 %v306
  %v732 = vunpack.c.l.b16 %v307
  %v733 = vunpack.c.h.b16 %v307
  %v734 = vpack.c.b16 %v486, %v478
  %v735 = vpack.c.b16 %v487, %v479
  %v736 = vpack.c.b16 %v488, %v480
  %v737 = vpack.c.b16 %v489, %v481
  %v738 = vpack.c.b16 %v490, %v482
  %v739 = vpack.c.b16 %v491, %v483
  %v740 = vpack.c.b16 %v492, %v484
  %v741 = vpack.c.b16 %v493, %v485
  %v742 = vpack.c.b16 %v502, %v494
  %v743 = vpack.c.b16 %v503, %v495
  %v744 = vpack.c.b16 %v504, %v496
  %v745 = vpack.c.b16 %v505, %v497
  %v746 = vpack.c.b16 %v506, %v498
  %v747 = vpack.c.b16 %v507, %v499
  %v748 = vpack.c.b16 %v508, %v500
  %v749 = vpack.c.b16 %v509, %v501
  %v750 = vpack.c.b16 %v518, %v510
  %v751 = vpack.c.b16 %v519, %v511
  %v752 = vpack.c.b16 %v520, %v512
  %v753 = vpack.c.b16 %v521, %v513
  %v754 = vpack.c.b16 %v522, %v514
  %v755 = vpack.c.b16 %v523, %v515
  %v756 = vpack.c.b16 %v524, %v516
  %v757 = vpack.c.b16 %v525, %v517
  %v758 = vpack.c.b16 %v534, %v526
  %v759 = vpack.c.b16 %v535, %v527
  %v760 = vpack.c.b16 %v536, %v528
  %v761 = vpack.c.b16 %v537, %v529
  %v762 = vpack.c.b16 %v538, %v530
  %v763 = vpack.c.b16 %v539, %v531
  %v764 = vpack.c.b16 %v540, %v532
  %v765 = vpack.c.b16 %v541, %v533
  %v766 = vpack.c.b16 %v550, %v542
  %v767 = vpack.c.b16 %v551, %v543
  %v768 = vpack.c.b16 %v552, %v544
  %v769 = vpack.c.b16 %v553, %v545
  %v770 = vpack.c.b16 %v554, %v546
  %v771 = vpack.c.b16 %v555, %v547
  %v772 = vpack.c.b16 %v556, %v548
  %v773 = vpack.c.b16 %v557, %v549
  %v774 = vpack.c.b16 %v566, %v558
  %v775 = vpack.c.b16 %v567, %v559
  %v776 = vpack.c.b16 %v568, %v560
  %v777 = vpack.c.b16 %v569, %v561
  %v778 = vpack.c.b16 %v570, %v562
  %v779 = vpack.c.b16 %v571, %v563
  %v780 = vpack.c.b16 %v572, %v564
  %v781 = vpack.c.b16 %v573, %v565
  %v782 = vpack.c.b16 %v582, %v574
  %v783 = vpack.c.b16 %v583, %v575
  %v784 = vpack.c.b16 %v584, %v576
  %v785 = vpack.c.b16 %v585, %v577
  %v786 = vpack.c.b16 %v586, %v578
  %v787 = vpack.c.b16 %v587, %v579
  %v788 = vpack.c.b16 %v588, %v580
  %v789 = vpack.c.b16 %v589, %v581
  %v790 = vpack.c.b16 %v598, %v590
  %v791 = vpack.c.b16 %v599, %v591
  %v792 = vpack.c.b16 %v600, %v592
  %v793 = vpack.c.b16 %v601, %v593
  %v794 = vpack.c.b16 %v602, %v594
  %v795 = vpack.c.b16 %v603, %v595
  %v796 = vpack.c.b16 %v604, %v596
  %v797 = vpack.c.b16 %v605, %v597
  %v798 = vpack.c.b16 %v614, %v606
  %v799 = vpack.c.b16 %v615, %v607
  %v800 = vpack.c.b16 %v616, %v608
  %v801 = vpack.c.b16 %v617, %v609
  %v802 = vpack.c.b16 %v618, %v610
  %v803 = vpack.c.b16 %v619, %v611
  %v804 = vpack.c.b16 %v620, %v612
  %v805 = vpack.c.b16 %v621, %v613
  %v806 = vpack.c.b16 %v630, %v622
  %v807 = vpack.c.b16 %v631, %v623
  %v808 = vpack.c.b16 %v632, %v624
  %v809 = vpack.c.b16 %v633, %v625
  %v810 = vpack.c.b16 %v634, %v626
  %v811 = vpack.c.b16 %v635, %v627
  %v812 = vpack.c.b16 %v636, %v628
  %v813 = vpack.c.b16 %v637, %v629
  %v814 = vpack.c.b16 %v646, %v638
  %v815 = vpack.c.b16 %v647, %v639
  %v816 = vpack.c.b16 %v648, %v640
  %v817 = vpack.c.b16 %v649, %v641
  %v818 = vpack.c.b16 %v650, %v642
  %v819 = vpack.c.b16 %v651, %v643
  %v820 = vpack.c.b16 %v652, %v644
  %v821 = vpack.c.b16 %v653, %v645
  %v822 = vpack.c.b16 %v662, %v654
  %v823 = vpack.c.b16 %v663, %v655
  %v824 = vpack.c.b16 %v664, %v656
  %v825 = vpack.c.b16 %v665, %v657
  %v826 = vpack.c.b16 %v666, %v658
  %v827 = vpack.c.b16 %v667, %v659
  %v828 = vpack.c.b16 %v668, %v660
  %v829 = vpack.c.b16 %v669, %v661
  %v830 = vpack.c.b16 %v678, %v670
  %v831 = vpack.c.b16 %v679, %v671
  %v832 = vpack.c.b16 %v680, %v672
  %v833 = vpack.c.b16 %v681, %v673
  %v834 = vpack.c.b16 %v682, %v674
  %v835 = vpack.c.b16 %v683, %v675
  %v836 = vpack.c.b16 %v684, %v676
  %v837 = vpack.c.b16 %v685, %v677
  %v838 = vpack.c.b16 %v694, %v686
  %v839 = vpack.c.b16 %v695, %v687
  %v840 = vpack.c.b16 %v696, %v688
  %v841 = vpack.c.b16 %v697, %v689
  %v842 = vpack.c.b16 %v698, %v690
  %v843 = vpack.c.b16 %v699, %v691
  %v844 = vpack.c.b16 %v700, %v692
  %v845 = vpack.c.b16 %v701, %v693
  %v846 = vpack.c.b16 %v710, %v702
  %v847 = vpack.c.b16 %v711, %v703
  %v848 = vpack.c.b16 %v712, %v704
  %v849 = vpack.c.b16 %v713, %v705
  %v850 = vpack.c.b16 %v714, %v706
  %v851 = vpack.c.b16 %v715, %v707
  %v852 = vpack.c.b16 %v716, %v708
  %v853 = vpack.c.b16 %v717, %v709
  %v854 = vpack.c.b16 %v726, %v718
  %v855 = vpack.c.b16 %v727, %v719
  %v856 = vpack.c.b16 %v728, %v720
  %v857 = vpack.c.b16 %v729, %v721
  %v858 = vpack.c.b16 %v730, %v722
  %v859 = vpack.c.b16 %v731, %v723
  %v860 = vpack.c.b16 %v732, %v724
  %v861 = vpack.c.b16 %v733, %v725
  %990 = vmatprep.subr.bf16.mxu0 %v735
  %991 = vmatpush1.bf16.msra.mxu0 %v734
  %992 = vmatprep.subr.bf16.mxu0 %v743
  %993 = vmatpush1.bf16.msra.mxu0 %v742
  %994 = vmatprep.subr.bf16.mxu0 %v751
  %995 = vmatpush1.bf16.msra.mxu0 %v750
  %996 = vmatprep.subr.bf16.mxu0 %v759
  %997 = vmatpush1.bf16.msra.mxu0 %v758
  %998 = vmatprep.subr.bf16.mxu0 %v767
  %999 = vmatpush1.bf16.msra.mxu0 %v766
  %1000 = vmatprep.subr.bf16.mxu0 %v775
  %1001 = vmatpush1.bf16.msra.mxu0 %v774
  %1002 = vmatprep.subr.bf16.mxu0 %v783
  %1003 = vmatpush1.bf16.msra.mxu0 %v782
  %1004 = vmatprep.subr.bf16.mxu0 %v791
  %1005 = vmatpush1.bf16.msra.mxu0 %v790
  %1006 = vmatprep.subr.bf16.mxu0 %v799
  %1007 = vmatpush1.bf16.msra.mxu0 %v798
  %1008 = vmatprep.subr.bf16.mxu0 %v807
  %1009 = vmatpush1.bf16.msra.mxu0 %v806
  %1010 = vmatprep.subr.bf16.mxu0 %v815
  %1011 = vmatpush1.bf16.msra.mxu0 %v814
  %1012 = vmatprep.subr.bf16.mxu0 %v823
  %1013 = vmatpush1.bf16.msra.mxu0 %v822
  %1014 = vmatprep.subr.bf16.mxu0 %v831
  %1015 = vmatpush1.bf16.msra.mxu0 %v830
  %1016 = vmatprep.subr.bf16.mxu0 %v839
  %1017 = vmatpush1.bf16.msra.mxu0 %v838
  %1018 = vmatprep.subr.bf16.mxu0 %v847
  %1019 = vmatpush1.bf16.msra.mxu0 %v846
  %1020 = vmatprep.subr.bf16.mxu0 %v855
  %1021 = vmatpush1.bf16.msra.mxu0 %v854
  %1022 = vmatprep.mubr.bf16.mxu0 %v175
  %1023 = vmatmul.mubr.bf16.gmra.mrb[0].mxu0 %v174
  %v1024 = vpop.f32.mrb[0].mxu0
  %v1025 = vadd.f32 %v313, %v1024
  %v1026 = vpop.f32.mrb[0].mxu0
  %v1027 = vadd.f32 %v317, %v1026
  %v1028 = vpop.f32.mrb[0].mxu0
  %v1029 = vadd.f32 %v313, %v1028
  %v1030 = vpop.f32.mrb[0].mxu0
  %v1031 = vadd.f32 %v317, %v1030
  %1032 = vmatprep.mubr.bf16.mxu0 %v177
  %1033 = vmatmul.mubr.bf16.gmra.mrb[0].mxu0 %v176
  %v1034 = vpop.f32.mrb[0].mxu0
  %v1035 = vadd.f32 %v313, %v1034
  %v1036 = vpop.f32.mrb[0].mxu0
  %v1037 = vadd.f32 %v317, %v1036
  %v1038 = vpop.f32.mrb[0].mxu0
  %v1039 = vadd.f32 %v313, %v1038
  %v1040 = vpop.f32.mrb[0].mxu0
  %v1041 = vadd.f32 %v317, %v1040
  %1042 = vmatprep.mubr.bf16.mxu0 %v179
  %1043 = vmatmul.mubr.bf16.gmra.mrb[0].mxu0 %v178
  %v1044 = vpop.f32.mrb[0].mxu0
  %v1045 = vadd.f32 %v313, %v1044
  %v1046 = vpop.f32.mrb[0].mxu0
  %v1047 = vadd.f32 %v317, %v1046
  %v1048 = vpop.f32.mrb[0].mxu0
  %v1049 = vpop.f32.mrb[0].mxu0
  %1050 = vdwg.mxu0
  %1051 = vmatprep.subr.bf16.mxu0 %v737
  %1052 = vmatpush1.bf16.msra.mxu0 %v736
  %1053 = vmatprep.subr.bf16.mxu0 %v745
  %1054 = vmatpush1.bf16.msra.mxu0 %v744
  %1055 = vmatprep.subr.bf16.mxu0 %v753
  %1056 = vmatpush1.bf16.msra.mxu0 %v752
  %1057 = vmatprep.subr.bf16.mxu0 %v761
  %1058 = vmatpush1.bf16.msra.mxu0 %v760
  %1059 = vmatprep.subr.bf16.mxu0 %v769
  %1060 = vmatpush1.bf16.msra.mxu0 %v768
  %1061 = vmatprep.subr.bf16.mxu0 %v777
  %1062 = vmatpush1.bf16.msra.mxu0 %v776
  %1063 = vmatprep.subr.bf16.mxu0 %v785
  %1064 = vmatpush1.bf16.msra.mxu0 %v784
  %1065 = vmatprep.subr.bf16.mxu0 %v793
  %1066 = vmatpush1.bf16.msra.mxu0 %v792
  %1067 = vmatprep.subr.bf16.mxu0 %v801
  %1068 = vmatpush1.bf16.msra.mxu0 %v800
  %1069 = vmatprep.subr.bf16.mxu0 %v809
  %1070 = vmatpush1.bf16.msra.mxu0 %v808
  %1071 = vmatprep.subr.bf16.mxu0 %v817
  %1072 = vmatpush1.bf16.msra.mxu0 %v816
  %1073 = vmatprep.subr.bf16.mxu0 %v825
  %1074 = vmatpush1.bf16.msra.mxu0 %v824
  %1075 = vmatprep.subr.bf16.mxu0 %v833
  %1076 = vmatpush1.bf16.msra.mxu0 %v832
  %1077 = vmatprep.subr.bf16.mxu0 %v841
  %1078 = vmatpush1.bf16.msra.mxu0 %v840
  %1079 = vmatprep.subr.bf16.mxu0 %v849
  %1080 = vmatpush1.bf16.msra.mxu0 %v848
  %1081 = vmatprep.subr.bf16.mxu0 %v857
  %1082 = vmatpush1.bf16.msra.mxu0 %v856
  %1083 = vmatprep.mubr.bf16.mxu0 %v175
  %1084 = vmatmul.mubr.bf16.gmra.mrb[0].mxu0 %v174
  %v1085 = vpop.f32.mrb[0].mxu0
  %v1086 = vadd.f32 %v321, %v1085
  %v1087 = vpop.f32.mrb[0].mxu0
  %v1088 = vadd.f32 %v325, %v1087
  %v1089 = vpop.f32.mrb[0].mxu0
  %v1090 = vadd.f32 %v321, %v1089
  %v1091 = vpop.f32.mrb[0].mxu0
  %v1092 = vadd.f32 %v325, %v1091
  %1093 = vmatprep.mubr.bf16.mxu0 %v177
  %1094 = vmatmul.mubr.bf16.gmra.mrb[0].mxu0 %v176
  %v1095 = vpop.f32.mrb[0].mxu0
  %v1096 = vadd.f32 %v321, %v1095
  %v1097 = vpop.f32.mrb[0].mxu0
  %v1098 = vadd.f32 %v325, %v1097
  %v1099 = vpop.f32.mrb[0].mxu0
  %v1100 = vadd.f32 %v321, %v1099
  %v1101 = vpop.f32.mrb[0].mxu0
  %v1102 = vadd.f32 %v325, %v1101
  %1103 = vmatprep.mubr.bf16.mxu0 %v179
  %1104 = vmatmul.mubr.bf16.gmra.mrb[0].mxu0 %v178
  %v1105 = vpop.f32.mrb[0].mxu0
  %v1106 = vadd.f32 %v321, %v1105
  %v1107 = vpop.f32.mrb[0].mxu0
  %v1108 = vadd.f32 %v325, %v1107
  %v1109 = vpop.f32.mrb[0].mxu0
  %v1110 = vpop.f32.mrb[0].mxu0
  %1111 = vdwg.mxu0
  %1112 = vmatprep.subr.bf16.mxu0 %v739
  %1113 = vmatpush1.bf16.msra.mxu0 %v738
  %1114 = vmatprep.subr.bf16.mxu0 %v747
  %1115 = vmatpush1.bf16.msra.mxu0 %v746
  %1116 = vmatprep.subr.bf16.mxu0 %v755
  %1117 = vmatpush1.bf16.msra.mxu0 %v754
  %1118 = vmatprep.subr.bf16.mxu0 %v763
  %1119 = vmatpush1.bf16.msra.mxu0 %v762
  %1120 = vmatprep.subr.bf16.mxu0 %v771
  %1121 = vmatpush1.bf16.msra.mxu0 %v770
  %1122 = vmatprep.subr.bf16.mxu0 %v779
  %1123 = vmatpush1.bf16.msra.mxu0 %v778
  %1124 = vmatprep.subr.bf16.mxu0 %v787
  %1125 = vmatpush1.bf16.msra.mxu0 %v786
  %1126 = vmatprep.subr.bf16.mxu0 %v795
  %1127 = vmatpush1.bf16.msra.mxu0 %v794
  %1128 = vmatprep.subr.bf16.mxu0 %v803
  %1129 = vmatpush1.bf16.msra.mxu0 %v802
  %1130 = vmatprep.subr.bf16.mxu0 %v811
  %1131 = vmatpush1.bf16.msra.mxu0 %v810
  %1132 = vmatprep.subr.bf16.mxu0 %v819
  %1133 = vmatpush1.bf16.msra.mxu0 %v818
  %1134 = vmatprep.subr.bf16.mxu0 %v827
  %1135 = vmatpush1.bf16.msra.mxu0 %v826
  %1136 = vmatprep.subr.bf16.mxu0 %v835
  %1137 = vmatpush1.bf16.msra.mxu0 %v834
  %1138 = vmatprep.subr.bf16.mxu0 %v843
  %1139 = vmatpush1.bf16.msra.mxu0 %v842
  %1140 = vmatprep.subr.bf16.mxu0 %v851
  %1141 = vmatpush1.bf16.msra.mxu0 %v850
  %1142 = vmatprep.subr.bf16.mxu0 %v859
  %1143 = vmatpush1.bf16.msra.mxu0 %v858
  %1144 = vmatprep.mubr.bf16.mxu0 %v175
  %1145 = vmatmul.mubr.bf16.gmra.mrb[0].mxu0 %v174
  %v1146 = vpop.f32.mrb[0].mxu0
  %v1147 = vadd.f32 %v329, %v1146
  %v1148 = vpop.f32.mrb[0].mxu0
  %v1149 = vadd.f32 %v333, %v1148
  %v1150 = vpop.f32.mrb[0].mxu0
  %v1151 = vadd.f32 %v329, %v1150
  %v1152 = vpop.f32.mrb[0].mxu0
  %v1153 = vadd.f32 %v333, %v1152
  %1154 = vmatprep.mubr.bf16.mxu0 %v177
  %1155 = vmatmul.mubr.bf16.gmra.mrb[0].mxu0 %v176
  %v1156 = vpop.f32.mrb[0].mxu0
  %v1157 = vadd.f32 %v329, %v1156
  %v1158 = vpop.f32.mrb[0].mxu0
  %v1159 = vadd.f32 %v333, %v1158
  %v1160 = vpop.f32.mrb[0].mxu0
  %v1161 = vadd.f32 %v329, %v1160
  %v1162 = vpop.f32.mrb[0].mxu0
  %v1163 = vadd.f32 %v333, %v1162
  %1164 = vmatprep.mubr.bf16.mxu0 %v179
  %1165 = vmatmul.mubr.bf16.gmra.mrb[0].mxu0 %v178
  %v1166 = vpop.f32.mrb[0].mxu0
  %v1167 = vadd.f32 %v329, %v1166
  %v1168 = vpop.f32.mrb[0].mxu0
  %v1169 = vadd.f32 %v333, %v1168
  %v1170 = vpop.f32.mrb[0].mxu0
  %v1171 = vpop.f32.mrb[0].mxu0
  %1172 = vdwg.mxu0
  %1173 = vmatprep.subr.bf16.mxu0 %v741
  %1174 = vmatpush1.bf16.msra.mxu0 %v740
  %1175 = vmatprep.subr.bf16.mxu0 %v749
  %1176 = vmatpush1.bf16.msra.mxu0 %v748
  %1177 = vmatprep.subr.bf16.mxu0 %v757
  %1178 = vmatpush1.bf16.msra.mxu0 %v756
  %1179 = vmatprep.subr.bf16.mxu0 %v765
  %1180 = vmatpush1.bf16.msra.mxu0 %v764
  %1181 = vmatprep.subr.bf16.mxu0 %v773
  %1182 = vmatpush1.bf16.msra.mxu0 %v772
  %1183 = vmatprep.subr.bf16.mxu0 %v781
  %1184 = vmatpush1.bf16.msra.mxu0 %v780
  %1185 = vmatprep.subr.bf16.mxu0 %v789
  %1186 = vmatpush1.bf16.msra.mxu0 %v788
  %1187 = vmatprep.subr.bf16.mxu0 %v797
  %1188 = vmatpush1.bf16.msra.mxu0 %v796
  %1189 = vmatprep.subr.bf16.mxu0 %v805
  %1190 = vmatpush1.bf16.msra.mxu0 %v804
  %1191 = vmatprep.subr.bf16.mxu0 %v813
  %1192 = vmatpush1.bf16.msra.mxu0 %v812
  %1193 = vmatprep.subr.bf16.mxu0 %v821
  %1194 = vmatpush1.bf16.msra.mxu0 %v820
  %1195 = vmatprep.subr.bf16.mxu0 %v829
  %1196 = vmatpush1.bf16.msra.mxu0 %v828
  %1197 = vmatprep.subr.bf16.mxu0 %v837
  %1198 = vmatpush1.bf16.msra.mxu0 %v836
  %1199 = vmatprep.subr.bf16.mxu0 %v845
  %1200 = vmatpush1.bf16.msra.mxu0 %v844
  %1201 = vmatprep.subr.bf16.mxu0 %v853
  %1202 = vmatpush1.bf16.msra.mxu0 %v852
  %1203 = vmatprep.subr.bf16.mxu0 %v861
  %1204 = vmatpush1.bf16.msra.mxu0 %v860
  %1205 = vmatprep.mubr.bf16.mxu0 %v175
  %1206 = vmatmul.mubr.bf16.gmra.mrb[0].mxu0 %v174
  %v1207 = vpop.f32.mrb[0].mxu0
  %v1208 = vadd.f32 %v337, %v1207
  %v1209 = vpop.f32.mrb[0].mxu0
  %v1210 = vadd.f32 %v341, %v1209
  %v1211 = vpop.f32.mrb[0].mxu0
  %v1212 = vadd.f32 %v337, %v1211
  %v1213 = vpop.f32.mrb[0].mxu0
  %v1214 = vadd.f32 %v341, %v1213
  %1215 = vmatprep.mubr.bf16.mxu0 %v177
  %1216 = vmatmul.mubr.bf16.gmra.mrb[0].mxu0 %v176
  %v1217 = vpop.f32.mrb[0].mxu0
  %v1218 = vadd.f32 %v337, %v1217
  %v1219 = vpop.f32.mrb[0].mxu0
  %v1220 = vadd.f32 %v341, %v1219
  %v1221 = vpop.f32.mrb[0].mxu0
  %v1222 = vadd.f32 %v337, %v1221
  %v1223 = vpop.f32.mrb[0].mxu0
  %v1224 = vadd.f32 %v341, %v1223
  %1225 = vmatprep.mubr.bf16.mxu0 %v179
  %1226 = vmatmul.mubr.bf16.gmra.mrb[0].mxu0 %v178
  %v1227 = vpop.f32.mrb[0].mxu0
  %v1228 = vadd.f32 %v337, %v1227
  %v1229 = vpop.f32.mrb[0].mxu0
  %v1230 = vadd.f32 %v341, %v1229
  %v1231 = vpop.f32.mrb[0].mxu0
  %v1232 = vpop.f32.mrb[0].mxu0
  %1233 = vdwg.mxu0
  %v1234 = vmul.f32 %v1025, %v1025
  %v1235 = vmul.f32 %v1027, %v1027
  %v1236 = vmul.f32 %v1086, %v1086
  %v1237 = vmul.f32 %v1088, %v1088
  %v1238 = vmul.f32 %v1147, %v1147
  %v1239 = vmul.f32 %v1149, %v1149
  %v1240 = vmul.f32 %v1208, %v1208
  %v1241 = vmul.f32 %v1210, %v1210
  %v1242 = vmul.f32 %v1029, %v1029
  %v1243 = vmul.f32 %v1031, %v1031
  %v1244 = vmul.f32 %v1090, %v1090
  %v1245 = vmul.f32 %v1092, %v1092
  %v1246 = vmul.f32 %v1151, %v1151
  %v1247 = vmul.f32 %v1153, %v1153
  %v1248 = vmul.f32 %v1212, %v1212
  %v1249 = vmul.f32 %v1214, %v1214
  %v1250 = vmul.f32 %v1035, %v1035
  %v1251 = vmul.f32 %v1037, %v1037
  %v1252 = vmul.f32 %v1096, %v1096
  %v1253 = vmul.f32 %v1098, %v1098
  %v1254 = vmul.f32 %v1157, %v1157
  %v1255 = vmul.f32 %v1159, %v1159
  %v1256 = vmul.f32 %v1218, %v1218
  %v1257 = vmul.f32 %v1220, %v1220
  %v1258 = vmul.f32 %v1039, %v1039
  %v1259 = vmul.f32 %v1041, %v1041
  %v1260 = vmul.f32 %v1100, %v1100
  %v1261 = vmul.f32 %v1102, %v1102
  %v1262 = vmul.f32 %v1161, %v1161
  %v1263 = vmul.f32 %v1163, %v1163
  %v1264 = vmul.f32 %v1222, %v1222
  %v1265 = vmul.f32 %v1224, %v1224
  %v1266 = vmul.f32 %v1045, %v1045
  %v1267 = vmul.f32 %v1047, %v1047
  %v1268 = vmul.f32 %v1106, %v1106
  %v1269 = vmul.f32 %v1108, %v1108
  %v1270 = vmul.f32 %v1167, %v1167
  %v1271 = vmul.f32 %v1169, %v1169
  %v1272 = vmul.f32 %v1228, %v1228
  %v1273 = vmul.f32 %v1230, %v1230
  %v1274 = vmul.f32 %v1025, %v1234
  %v1275 = vmul.f32 %v1027, %v1235
  %v1276 = vmul.f32 %v1086, %v1236
  %v1277 = vmul.f32 %v1088, %v1237
  %v1278 = vmul.f32 %v1147, %v1238
  %v1279 = vmul.f32 %v1149, %v1239
  %v1280 = vmul.f32 %v1208, %v1240
  %v1281 = vmul.f32 %v1210, %v1241
  %v1282 = vmul.f32 %v1029, %v1242
  %v1283 = vmul.f32 %v1031, %v1243
  %v1284 = vmul.f32 %v1090, %v1244
  %v1285 = vmul.f32 %v1092, %v1245
  %v1286 = vmul.f32 %v1151, %v1246
  %v1287 = vmul.f32 %v1153, %v1247
  %v1288 = vmul.f32 %v1212, %v1248
  %v1289 = vmul.f32 %v1214, %v1249
  %v1290 = vmul.f32 %v1035, %v1250
  %v1291 = vmul.f32 %v1037, %v1251
  %v1292 = vmul.f32 %v1096, %v1252
  %v1293 = vmul.f32 %v1098, %v1253
  %v1294 = vmul.f32 %v1157, %v1254
  %v1295 = vmul.f32 %v1159, %v1255
  %v1296 = vmul.f32 %v1218, %v1256
  %v1297 = vmul.f32 %v1220, %v1257
  %v1298 = vmul.f32 %v1039, %v1258
  %v1299 = vmul.f32 %v1041, %v1259
  %v1300 = vmul.f32 %v1100, %v1260
  %v1301 = vmul.f32 %v1102, %v1261
  %v1302 = vmul.f32 %v1161, %v1262
  %v1303 = vmul.f32 %v1163, %v1263
  %v1304 = vmul.f32 %v1222, %v1264
  %v1305 = vmul.f32 %v1224, %v1265
  %v1306 = vmul.f32 %v1045, %v1266
  %v1307 = vmul.f32 %v1047, %v1267
  %v1308 = vmul.f32 %v1106, %v1268
  %v1309 = vmul.f32 %v1108, %v1269
  %v1310 = vmul.f32 %v1167, %v1270
  %v1311 = vmul.f32 %v1169, %v1271
  %v1312 = vmul.f32 %v1228, %v1272
  %v1313 = vmul.f32 %v1230, %v1273
  %v1314 = vmul.f32 %v1274, 0.044715
  %v1315 = vmul.f32 %v1275, 0.044715
  %v1316 = vmul.f32 %v1276, 0.044715
  %v1317 = vmul.f32 %v1277, 0.044715
  %v1318 = vmul.f32 %v1278, 0.044715
  %v1319 = vmul.f32 %v1279, 0.044715
  %v1320 = vmul.f32 %v1280, 0.044715
  %v1321 = vmul.f32 %v1281, 0.044715
  %v1322 = vmul.f32 %v1282, 0.044715
  %v1323 = vmul.f32 %v1283, 0.044715
  %v1324 = vmul.f32 %v1284, 0.044715
  %v1325 = vmul.f32 %v1285, 0.044715
  %v1326 = vmul.f32 %v1286, 0.044715
  %v1327 = vmul.f32 %v1287, 0.044715
  %v1328 = vmul.f32 %v1288, 0.044715
  %v1329 = vmul.f32 %v1289, 0.044715
  %v1330 = vmul.f32 %v1290, 0.044715
  %v1331 = vmul.f32 %v1291, 0.044715
  %v1332 = vmul.f32 %v1292, 0.044715
  %v1333 = vmul.f32 %v1293, 0.044715
  %v1334 = vmul.f32 %v1294, 0.044715
  %v1335 = vmul.f32 %v1295, 0.044715
  %v1336 = vmul.f32 %v1296, 0.044715
  %v1337 = vmul.f32 %v1297, 0.044715
  %v1338 = vmul.f32 %v1298, 0.044715
  %v1339 = vmul.f32 %v1299, 0.044715
  %v1340 = vmul.f32 %v1300, 0.044715
  %v1341 = vmul.f32 %v1301, 0.044715
  %v1342 = vmul.f32 %v1302, 0.044715
  %v1343 = vmul.f32 %v1303, 0.044715
  %v1344 = vmul.f32 %v1304, 0.044715
  %v1345 = vmul.f32 %v1305, 0.044715
  %v1346 = vmul.f32 %v1306, 0.044715
  %v1347 = vmul.f32 %v1307, 0.044715
  %v1348 = vmul.f32 %v1308, 0.044715
  %v1349 = vmul.f32 %v1309, 0.044715
  %v1350 = vmul.f32 %v1310, 0.044715
  %v1351 = vmul.f32 %v1311, 0.044715
  %v1352 = vmul.f32 %v1312, 0.044715
  %v1353 = vmul.f32 %v1313, 0.044715
  %v1354 = vadd.f32 %v1025, %v1314
  %v1355 = vadd.f32 %v1027, %v1315
  %v1356 = vadd.f32 %v1086, %v1316
  %v1357 = vadd.f32 %v1088, %v1317
  %v1358 = vadd.f32 %v1147, %v1318
  %v1359 = vadd.f32 %v1149, %v1319
  %v1360 = vadd.f32 %v1208, %v1320
  %v1361 = vadd.f32 %v1210, %v1321
  %v1362 = vadd.f32 %v1029, %v1322
  %v1363 = vadd.f32 %v1031, %v1323
  %v1364 = vadd.f32 %v1090, %v1324
  %v1365 = vadd.f32 %v1092, %v1325
  %v1366 = vadd.f32 %v1151, %v1326
  %v1367 = vadd.f32 %v1153, %v1327
  %v1368 = vadd.f32 %v1212, %v1328
  %v1369 = vadd.f32 %v1214, %v1329
  %v1370 = vadd.f32 %v1035, %v1330
  %v1371 = vadd.f32 %v1037, %v1331
  %v1372 = vadd.f32 %v1096, %v1332
  %v1373 = vadd.f32 %v1098, %v1333
  %v1374 = vadd.f32 %v1157, %v1334
  %v1375 = vadd.f32 %v1159, %v1335
  %v1376 = vadd.f32 %v1218, %v1336
  %v1377 = vadd.f32 %v1220, %v1337
  %v1378 = vadd.f32 %v1039, %v1338
  %v1379 = vadd.f32 %v1041, %v1339
  %v1380 = vadd.f32 %v1100, %v1340
  %v1381 = vadd.f32 %v1102, %v1341
  %v1382 = vadd.f32 %v1161, %v1342
  %v1383 = vadd.f32 %v1163, %v1343
  %v1384 = vadd.f32 %v1222, %v1344
  %v1385 = vadd.f32 %v1224, %v1345
  %v1386 = vadd.f32 %v1045, %v1346
  %v1387 = vadd.f32 %v1047, %v1347
  %v1388 = vadd.f32 %v1106, %v1348
  %v1389 = vadd.f32 %v1108, %v1349
  %v1390 = vadd.f32 %v1167, %v1350
  %v1391 = vadd.f32 %v1169, %v1351
  %v1392 = vadd.f32 %v1228, %v1352
  %v1393 = vadd.f32 %v1230, %v1353
  %v1394 = vmul.f32 %v1354, 0.7978846
  %v1395 = vmul.f32 %v1355, 0.7978846
  %v1396 = vmul.f32 %v1356, 0.7978846
  %v1397 = vmul.f32 %v1357, 0.7978846
  %v1398 = vmul.f32 %v1358, 0.7978846
  %v1399 = vmul.f32 %v1359, 0.7978846
  %v1400 = vmul.f32 %v1360, 0.7978846
  %v1401 = vmul.f32 %v1361, 0.7978846
  %v1402 = vmul.f32 %v1362, 0.7978846
  %v1403 = vmul.f32 %v1363, 0.7978846
  %v1404 = vmul.f32 %v1364, 0.7978846
  %v1405 = vmul.f32 %v1365, 0.7978846
  %v1406 = vmul.f32 %v1366, 0.7978846
  %v1407 = vmul.f32 %v1367, 0.7978846
  %v1408 = vmul.f32 %v1368, 0.7978846
  %v1409 = vmul.f32 %v1369, 0.7978846
  %v1410 = vmul.f32 %v1370, 0.7978846
  %v1411 = vmul.f32 %v1371, 0.7978846
  %v1412 = vmul.f32 %v1372, 0.7978846
  %v1413 = vmul.f32 %v1373, 0.7978846
  %v1414 = vmul.f32 %v1374, 0.7978846
  %v1415 = vmul.f32 %v1375, 0.7978846
  %v1416 = vmul.f32 %v1376, 0.7978846
  %v1417 = vmul.f32 %v1377, 0.7978846
  %v1418 = vmul.f32 %v1378, 0.7978846
  %v1419 = vmul.f32 %v1379, 0.7978846
  %v1420 = vmul.f32 %v1380, 0.7978846
  %v1421 = vmul.f32 %v1381, 0.7978846
  %v1422 = vmul.f32 %v1382, 0.7978846
  %v1423 = vmul.f32 %v1383, 0.7978846
  %v1424 = vmul.f32 %v1384, 0.7978846
  %v1425 = vmul.f32 %v1385, 0.7978846
  %v1426 = vmul.f32 %v1386, 0.7978846
  %v1427 = vmul.f32 %v1387, 0.7978846
  %v1428 = vmul.f32 %v1388, 0.7978846
  %v1429 = vmul.f32 %v1389, 0.7978846
  %v1430 = vmul.f32 %v1390, 0.7978846
  %v1431 = vmul.f32 %v1391, 0.7978846
  %v1432 = vmul.f32 %v1392, 0.7978846
  %v1433 = vmul.f32 %v1393, 0.7978846
  %v1434 = vtanh.pop %v1394
  %v1435 = vtanh.pop %v1395
  %v1436 = vtanh.pop %v1396
  %v1437 = vtanh.pop %v1397
  %v1438 = vtanh.pop %v1398
  %v1439 = vtanh.pop %v1399
  %v1440 = vtanh.pop %v1400
  %v1441 = vtanh.pop %v1401
  %v1442 = vtanh.pop %v1402
  %v1443 = vtanh.pop %v1403
  %v1444 = vtanh.pop %v1404
  %v1445 = vtanh.pop %v1405
  %v1446 = vtanh.pop %v1406
  %v1447 = vtanh.pop %v1407
  %v1448 = vtanh.pop %v1408
  %v1449 = vtanh.pop %v1409
  %v1450 = vtanh.pop %v1410
  %v1451 = vtanh.pop %v1411
  %v1452 = vtanh.pop %v1412
  %v1453 = vtanh.pop %v1413
  %v1454 = vtanh.pop %v1414
  %v1455 = vtanh.pop %v1415
  %v1456 = vtanh.pop %v1416
  %v1457 = vtanh.pop %v1417
  %v1458 = vtanh.pop %v1418
  %v1459 = vtanh.pop %v1419
  %v1460 = vtanh.pop %v1420
  %v1461 = vtanh.pop %v1421
  %v1462 = vtanh.pop %v1422
  %v1463 = vtanh.pop %v1423
  %v1464 = vtanh.pop %v1424
  %v1465 = vtanh.pop %v1425
  %v1466 = vtanh.pop %v1426
  %v1467 = vtanh.pop %v1427
  %v1468 = vtanh.pop %v1428
  %v1469 = vtanh.pop %v1429
  %v1470 = vtanh.pop %v1430
  %v1471 = vtanh.pop %v1431
  %v1472 = vtanh.pop %v1432
  %v1473 = vtanh.pop %v1433
  %v1474 = vadd.f32 %v1434, 1.0
  %v1475 = vadd.f32 %v1435, 1.0
  %v1476 = vadd.f32 %v1436, 1.0
  %v1477 = vadd.f32 %v1437, 1.0
  %v1478 = vadd.f32 %v1438, 1.0
  %v1479 = vadd.f32 %v1439, 1.0
  %v1480 = vadd.f32 %v1440, 1.0
  %v1481 = vadd.f32 %v1441, 1.0
  %v1482 = vadd.f32 %v1442, 1.0
  %v1483 = vadd.f32 %v1443, 1.0
  %v1484 = vadd.f32 %v1444, 1.0
  %v1485 = vadd.f32 %v1445, 1.0
  %v1486 = vadd.f32 %v1446, 1.0
  %v1487 = vadd.f32 %v1447, 1.0
  %v1488 = vadd.f32 %v1448, 1.0
  %v1489 = vadd.f32 %v1449, 1.0
  %v1490 = vadd.f32 %v1450, 1.0
  %v1491 = vadd.f32 %v1451, 1.0
  %v1492 = vadd.f32 %v1452, 1.0
  %v1493 = vadd.f32 %v1453, 1.0
  %v1494 = vadd.f32 %v1454, 1.0
  %v1495 = vadd.f32 %v1455, 1.0
  %v1496 = vadd.f32 %v1456, 1.0
  %v1497 = vadd.f32 %v1457, 1.0
  %v1498 = vadd.f32 %v1458, 1.0
  %v1499 = vadd.f32 %v1459, 1.0
  %v1500 = vadd.f32 %v1460, 1.0
  %v1501 = vadd.f32 %v1461, 1.0
  %v1502 = vadd.f32 %v1462, 1.0
  %v1503 = vadd.f32 %v1463, 1.0
  %v1504 = vadd.f32 %v1464, 1.0
  %v1505 = vadd.f32 %v1465, 1.0
  %v1506 = vadd.f32 %v1466, 1.0
  %v1507 = vadd.f32 %v1467, 1.0
  %v1508 = vadd.f32 %v1468, 1.0
  %v1509 = vadd.f32 %v1469, 1.0
  %v1510 = vadd.f32 %v1470, 1.0
  %v1511 = vadd.f32 %v1471, 1.0
  %v1512 = vadd.f32 %v1472, 1.0
  %v1513 = vadd.f32 %v1473, 1.0
  %v1514 = vmul.f32 %v1474, 0.5
  %v1515 = vmul.f32 %v1475, 0.5
  %v1516 = vmul.f32 %v1476, 0.5
  %v1517 = vmul.f32 %v1477, 0.5
  %v1518 = vmul.f32 %v1478, 0.5
  %v1519 = vmul.f32 %v1479, 0.5
  %v1520 = vmul.f32 %v1480, 0.5
  %v1521 = vmul.f32 %v1481, 0.5
  %v1522 = vmul.f32 %v1482, 0.5
  %v1523 = vmul.f32 %v1483, 0.5
  %v1524 = vmul.f32 %v1484, 0.5
  %v1525 = vmul.f32 %v1485, 0.5
  %v1526 = vmul.f32 %v1486, 0.5
  %v1527 = vmul.f32 %v1487, 0.5
  %v1528 = vmul.f32 %v1488, 0.5
  %v1529 = vmul.f32 %v1489, 0.5
  %v1530 = vmul.f32 %v1490, 0.5
  %v1531 = vmul.f32 %v1491, 0.5
  %v1532 = vmul.f32 %v1492, 0.5
  %v1533 = vmul.f32 %v1493, 0.5
  %v1534 = vmul.f32 %v1494, 0.5
  %v1535 = vmul.f32 %v1495, 0.5
  %v1536 = vmul.f32 %v1496, 0.5
  %v1537 = vmul.f32 %v1497, 0.5
  %v1538 = vmul.f32 %v1498, 0.5
  %v1539 = vmul.f32 %v1499, 0.5
  %v1540 = vmul.f32 %v1500, 0.5
  %v1541 = vmul.f32 %v1501, 0.5
  %v1542 = vmul.f32 %v1502, 0.5
  %v1543 = vmul.f32 %v1503, 0.5
  %v1544 = vmul.f32 %v1504, 0.5
  %v1545 = vmul.f32 %v1505, 0.5
  %v1546 = vmul.f32 %v1506, 0.5
  %v1547 = vmul.f32 %v1507, 0.5
  %v1548 = vmul.f32 %v1508, 0.5
  %v1549 = vmul.f32 %v1509, 0.5
  %v1550 = vmul.f32 %v1510, 0.5
  %v1551 = vmul.f32 %v1511, 0.5
  %v1552 = vmul.f32 %v1512, 0.5
  %v1553 = vmul.f32 %v1513, 0.5
  %v1554 = vmul.f32 %v1025, %v1514
  %v1555 = vmul.f32 %v1027, %v1515
  %v1556 = vmul.f32 %v1086, %v1516
  %v1557 = vmul.f32 %v1088, %v1517
  %v1558 = vmul.f32 %v1147, %v1518
  %v1559 = vmul.f32 %v1149, %v1519
  %v1560 = vmul.f32 %v1208, %v1520
  %v1561 = vmul.f32 %v1210, %v1521
  %v1562 = vmul.f32 %v1029, %v1522
  %v1563 = vmul.f32 %v1031, %v1523
  %v1564 = vmul.f32 %v1090, %v1524
  %v1565 = vmul.f32 %v1092, %v1525
  %v1566 = vmul.f32 %v1151, %v1526
  %v1567 = vmul.f32 %v1153, %v1527
  %v1568 = vmul.f32 %v1212, %v1528
  %v1569 = vmul.f32 %v1214, %v1529
  %v1570 = vmul.f32 %v1035, %v1530
  %v1571 = vmul.f32 %v1037, %v1531
  %v1572 = vmul.f32 %v1096, %v1532
  %v1573 = vmul.f32 %v1098, %v1533
  %v1574 = vmul.f32 %v1157, %v1534
  %v1575 = vmul.f32 %v1159, %v1535
  %v1576 = vmul.f32 %v1218, %v1536
  %v1577 = vmul.f32 %v1220, %v1537
  %v1578 = vmul.f32 %v1039, %v1538
  %v1579 = vmul.f32 %v1041, %v1539
  %v1580 = vmul.f32 %v1100, %v1540
  %v1581 = vmul.f32 %v1102, %v1541
  %v1582 = vmul.f32 %v1161, %v1542
  %v1583 = vmul.f32 %v1163, %v1543
  %v1584 = vmul.f32 %v1222, %v1544
  %v1585 = vmul.f32 %v1224, %v1545
  %v1586 = vmul.f32 %v1045, %v1546
  %v1587 = vmul.f32 %v1047, %v1547
  %v1588 = vmul.f32 %v1106, %v1548
  %v1589 = vmul.f32 %v1108, %v1549
  %v1590 = vmul.f32 %v1167, %v1550
  %v1591 = vmul.f32 %v1169, %v1551
  %v1592 = vmul.f32 %v1228, %v1552
  %v1593 = vmul.f32 %v1230, %v1553
  %v1594 = vpack.c.bf16 %v1562, %v1554
  %v1595 = vpack.c.bf16 %v1563, %v1555
  %v1596 = vpack.c.bf16 %v1564, %v1556
  %v1597 = vpack.c.bf16 %v1565, %v1557
  %v1598 = vpack.c.bf16 %v1566, %v1558
  %v1599 = vpack.c.bf16 %v1567, %v1559
  %v1600 = vpack.c.bf16 %v1568, %v1560
  %v1601 = vpack.c.bf16 %v1569, %v1561
  %v1602 = vpack.c.bf16 %v1578, %v1570
  %v1603 = vpack.c.bf16 %v1579, %v1571
  %v1604 = vpack.c.bf16 %v1580, %v1572
  %v1605 = vpack.c.bf16 %v1581, %v1573
  %v1606 = vpack.c.bf16 %v1582, %v1574
  %v1607 = vpack.c.bf16 %v1583, %v1575
  %v1608 = vpack.c.bf16 %v1584, %v1576
  %v1609 = vpack.c.bf16 %v1585, %v1577
  %v1610 = vpack.c.bf16 %v1586, %v1586
  %v1611 = vpack.c.bf16 %v1587, %v1587
  %v1612 = vpack.c.bf16 %v1588, %v1588
  %v1613 = vpack.c.bf16 %v1589, %v1589
  %v1614 = vpack.c.bf16 %v1590, %v1590
  %v1615 = vpack.c.bf16 %v1591, %v1591
  %v1616 = vpack.c.bf16 %v1592, %v1592
  %v1617 = vpack.c.bf16 %v1593, %v1593
  %v1618 = vld [vmem:[%s5] sm:$0xff]
  %v1619 = vld [vmem:[%s5 + $0x8] sm:$0xff]
  %v1620 = vld [vmem:[%s5 + $0x10] sm:$0xff]
  %v1621 = vld [vmem:[%s5 + $0x18] sm:$0xff]
  %v1622 = vld [vmem:[%s5 + $0x20] sm:$0xff]
  %v1623 = vld [vmem:[%s5 + $0x28] sm:$0xff]
  %v1624 = vld [vmem:[%s5 + $0x30] sm:$0xff]
  %v1625 = vld [vmem:[%s5 + $0x38] sm:$0xff]
  %v1626 = vld [vmem:[%s5 + $0x40] sm:$0xff]
  %v1627 = vld [vmem:[%s5 + $0x48] sm:$0xff]
  %v1628 = vld [vmem:[%s5 + $0x50] sm:$0xff]
  %v1629 = vld [vmem:[%s5 + $0x58] sm:$0xff]
  %v1630 = vld [vmem:[%s5 + $0x60] sm:$0xff]
  %v1631 = vld [vmem:[%s5 + $0x68] sm:$0xff]
  %v1632 = vld [vmem:[%s5 + $0x70] sm:$0xff]
  %v1633 = vld [vmem:[%s5 + $0x78] sm:$0xff]
  %v1634 = vld [vmem:[%s5 + $0x80] sm:$0xff]
  %v1635 = vld [vmem:[%s5 + $0x88] sm:$0xff]
  %v1636 = vld [vmem:[%s5 + $0x90] sm:$0xff]
  %v1637 = vld [vmem:[%s5 + $0x98] sm:$0xff]
  %v1638 = vld [vmem:[%s5 + $0xa0] sm:$0xff]
  %v1639 = vld [vmem:[%s5 + $0xa8] sm:$0xff]
  %v1640 = vld [vmem:[%s5 + $0xb0] sm:$0xff]
  %v1641 = vld [vmem:[%s5 + $0xb8] sm:$0xff]
  %v1642 = vld [vmem:[%s5 + $0xc0] sm:$0xff]
  %v1643 = vld [vmem:[%s5 + $0xc8] sm:$0xff]
  %v1644 = vld [vmem:[%s5 + $0xd0] sm:$0xff]
  %v1645 = vld [vmem:[%s5 + $0xd8] sm:$0xff]
  %v1646 = vld [vmem:[%s5 + $0xe0] sm:$0xff]
  %v1647 = vld [vmem:[%s5 + $0xe8] sm:$0xff]
  %v1648 = vld [vmem:[%s5 + $0xf0] sm:$0xff]
  %v1649 = vld [vmem:[%s5 + $0xf8] sm:$0xff]
  %v1650 = vld [vmem:[%s5 + $0x100] sm:$0xff]
  %v1651 = vld [vmem:[%s5 + $0x108] sm:$0xff]
  %v1652 = vld [vmem:[%s5 + $0x110] sm:$0xff]
  %v1653 = vld [vmem:[%s5 + $0x118] sm:$0xff]
  %v1654 = vld [vmem:[%s5 + $0x120] sm:$0xff]
  %v1655 = vld [vmem:[%s5 + $0x128] sm:$0xff]
  %v1656 = vld [vmem:[%s5 + $0x130] sm:$0xff]
  %v1657 = vld [vmem:[%s5 + $0x138] sm:$0xff]
  %v1658 = vld [vmem:[%s5 + $0x140] sm:$0xff]
  %v1659 = vld [vmem:[%s5 + $0x148] sm:$0xff]
  %v1660 = vld [vmem:[%s5 + $0x150] sm:$0xff]
  %v1661 = vld [vmem:[%s5 + $0x158] sm:$0xff]
  %v1662 = vld [vmem:[%s5 + $0x160] sm:$0xff]
  %v1663 = vld [vmem:[%s5 + $0x168] sm:$0xff]
  %v1664 = vld [vmem:[%s5 + $0x170] sm:$0xff]
  %v1665 = vld [vmem:[%s5 + $0x178] sm:$0xff]
  %v1666 = vld [vmem:[%s5 + $0x180] sm:$0xff]
  %v1667 = vld [vmem:[%s5 + $0x188] sm:$0xff]
  %v1668 = vld [vmem:[%s5 + $0x190] sm:$0xff]
  %v1669 = vld [vmem:[%s5 + $0x198] sm:$0xff]
  %v1670 = vld [vmem:[%s5 + $0x1a0] sm:$0xff]
  %v1671 = vld [vmem:[%s5 + $0x1a8] sm:$0xff]
  %v1672 = vld [vmem:[%s5 + $0x1b0] sm:$0xff]
  %v1673 = vld [vmem:[%s5 + $0x1b8] sm:$0xff]
  %v1674 = vld [vmem:[%s5 + $0x1c0] sm:$0xff]
  %v1675 = vld [vmem:[%s5 + $0x1c8] sm:$0xff]
  %v1676 = vld [vmem:[%s5 + $0x1d0] sm:$0xff]
  %v1677 = vld [vmem:[%s5 + $0x1d8] sm:$0xff]
  %v1678 = vld [vmem:[%s5 + $0x1e0] sm:$0xff]
  %v1679 = vld [vmem:[%s5 + $0x1e8] sm:$0xff]
  %v1680 = vld [vmem:[%s5 + $0x1f0] sm:$0xff]
  %v1681 = vld [vmem:[%s5 + $0x1f8] sm:$0xff]
  %v1682 = vld [vmem:[%s5 + $0x200] sm:$0xff]
  %v1683 = vld [vmem:[%s5 + $0x208] sm:$0xff]
  %v1684 = vld [vmem:[%s5 + $0x210] sm:$0xff]
  %v1685 = vld [vmem:[%s5 + $0x218] sm:$0xff]
  %v1686 = vld [vmem:[%s5 + $0x220] sm:$0xff]
  %v1687 = vld [vmem:[%s5 + $0x228] sm:$0xff]
  %v1688 = vld [vmem:[%s5 + $0x230] sm:$0xff]
  %v1689 = vld [vmem:[%s5 + $0x238] sm:$0xff]
  %v1690 = vld [vmem:[%s5 + $0x240] sm:$0xff]
  %v1691 = vld [vmem:[%s5 + $0x248] sm:$0xff]
  %v1692 = vld [vmem:[%s5 + $0x250] sm:$0xff]
  %v1693 = vld [vmem:[%s5 + $0x258] sm:$0xff]
  %v1694 = vld [vmem:[%s5 + $0x260] sm:$0xff]
  %v1695 = vld [vmem:[%s5 + $0x268] sm:$0xff]
  %v1696 = vld [vmem:[%s5 + $0x270] sm:$0xff]
  %v1697 = vld [vmem:[%s5 + $0x278] sm:$0xff]
  %v1698 = vld [vmem:[%s5 + $0x280] sm:$0xff]
  %v1699 = vld [vmem:[%s5 + $0x288] sm:$0xff]
  %v1700 = vld [vmem:[%s5 + $0x290] sm:$0xff]
  %v1701 = vld [vmem:[%s5 + $0x298] sm:$0xff]
  %v1702 = vld [vmem:[%s5 + $0x2a0] sm:$0xff]
  %v1703 = vld [vmem:[%s5 + $0x2a8] sm:$0xff]
  %v1704 = vld [vmem:[%s5 + $0x2b0] sm:$0xff]
  %v1705 = vld [vmem:[%s5 + $0x2b8] sm:$0xff]
  %v1706 = vld [vmem:[%s5 + $0x2c0] sm:$0xff]
  %v1707 = vld [vmem:[%s5 + $0x2c8] sm:$0xff]
  %v1708 = vld [vmem:[%s5 + $0x2d0] sm:$0xff]
  %v1709 = vld [vmem:[%s5 + $0x2d8] sm:$0xff]
  %v1710 = vld [vmem:[%s5 + $0x2e0] sm:$0xff]
  %v1711 = vld [vmem:[%s5 + $0x2e8] sm:$0xff]
  %v1712 = vld [vmem:[%s5 + $0x2f0] sm:$0xff]
  %v1713 = vld [vmem:[%s5 + $0x2f8] sm:$0xff]
  %v1714 = vld [vmem:[%s5 + $0x300] sm:$0xff]
  %v1715 = vld [vmem:[%s5 + $0x308] sm:$0xff]
  %v1716 = vld [vmem:[%s5 + $0x310] sm:$0xff]
  %v1717 = vld [vmem:[%s5 + $0x318] sm:$0xff]
  %v1718 = vld [vmem:[%s5 + $0x320] sm:$0xff]
  %v1719 = vld [vmem:[%s5 + $0x328] sm:$0xff]
  %v1720 = vld [vmem:[%s5 + $0x330] sm:$0xff]
  %v1721 = vld [vmem:[%s5 + $0x338] sm:$0xff]
  %v1722 = vld [vmem:[%s5 + $0x340] sm:$0xff]
  %v1723 = vld [vmem:[%s5 + $0x348] sm:$0xff]
  %v1724 = vld [vmem:[%s5 + $0x350] sm:$0xff]
  %v1725 = vld [vmem:[%s5 + $0x358] sm:$0xff]
  %v1726 = vld [vmem:[%s5 + $0x360] sm:$0xff]
  %v1727 = vld [vmem:[%s5 + $0x368] sm:$0xff]
  %v1728 = vld [vmem:[%s5 + $0x370] sm:$0xff]
  %v1729 = vld [vmem:[%s5 + $0x378] sm:$0xff]
  %v1730 = vld [vmem:[%s5 + $0x380] sm:$0xff]
  %v1731 = vld [vmem:[%s5 + $0x388] sm:$0xff]
  %v1732 = vld [vmem:[%s5 + $0x390] sm:$0xff]
  %v1733 = vld [vmem:[%s5 + $0x398] sm:$0xff]
  %v1734 = vld [vmem:[%s5 + $0x3a0] sm:$0xff]
  %v1735 = vld [vmem:[%s5 + $0x3a8] sm:$0xff]
  %v1736 = vld [vmem:[%s5 + $0x3b0] sm:$0xff]
  %v1737 = vld [vmem:[%s5 + $0x3b8] sm:$0xff]
  %v1738 = vld [vmem:[%s5 + $0x3c0] sm:$0xff]
  %v1739 = vld [vmem:[%s5 + $0x3c8] sm:$0xff]
  %v1740 = vld [vmem:[%s5 + $0x3d0] sm:$0xff]
  %v1741 = vld [vmem:[%s5 + $0x3d8] sm:$0xff]
  %v1742 = vld [vmem:[%s5 + $0x3e0] sm:$0xff]
  %v1743 = vld [vmem:[%s5 + $0x3e8] sm:$0xff]
  %v1744 = vld [vmem:[%s5 + $0x3f0] sm:$0xff]
  %v1745 = vld [vmem:[%s5 + $0x3f8] sm:$0xff]
  %v1746 = vld [vmem:[%s6] sm:$0x3]
  %v1748 = vlaneseq
  %v1749 = vshrl.u32 %v1748, 7
  %v1750 = vsub.s32 0, %v1749
  %v1751 = vrot.slane %v1746, %v1750
  %v1752 = vlaneseq
  %v1753 = vshrl.u32 %v1752, 7
  %v1754 = vsub.s32 1, %v1753
  %v1755 = vrot.slane %v1746, %v1754
  %v1886 = vunpack.c.l.b16 %v1618
  %v1887 = vunpack.c.h.b16 %v1618
  %v1888 = vunpack.c.l.b16 %v1619
  %v1889 = vunpack.c.h.b16 %v1619
  %v1890 = vunpack.c.l.b16 %v1620
  %v1891 = vunpack.c.h.b16 %v1620
  %v1892 = vunpack.c.l.b16 %v1621
  %v1893 = vunpack.c.h.b16 %v1621
  %v1894 = vunpack.c.l.b16 %v1622
  %v1895 = vunpack.c.h.b16 %v1622
  %v1896 = vunpack.c.l.b16 %v1623
  %v1897 = vunpack.c.h.b16 %v1623
  %v1898 = vunpack.c.l.b16 %v1624
  %v1899 = vunpack.c.h.b16 %v1624
  %v1900 = vunpack.c.l.b16 %v1625
  %v1901 = vunpack.c.h.b16 %v1625
  %v1902 = vunpack.c.l.b16 %v1626
  %v1903 = vunpack.c.h.b16 %v1626
  %v1904 = vunpack.c.l.b16 %v1627
  %v1905 = vunpack.c.h.b16 %v1627
  %v1906 = vunpack.c.l.b16 %v1628
  %v1907 = vunpack.c.h.b16 %v1628
  %v1908 = vunpack.c.l.b16 %v1629
  %v1909 = vunpack.c.h.b16 %v1629
  %v1910 = vunpack.c.l.b16 %v1630
  %v1911 = vunpack.c.h.b16 %v1630
  %v1912 = vunpack.c.l.b16 %v1631
  %v1913 = vunpack.c.h.b16 %v1631
  %v1914 = vunpack.c.l.b16 %v1632
  %v1915 = vunpack.c.h.b16 %v1632
  %v1916 = vunpack.c.l.b16 %v1633
  %v1917 = vunpack.c.h.b16 %v1633
  %v1918 = vunpack.c.l.b16 %v1634
  %v1919 = vunpack.c.h.b16 %v1634
  %v1920 = vunpack.c.l.b16 %v1635
  %v1921 = vunpack.c.h.b16 %v1635
  %v1922 = vunpack.c.l.b16 %v1636
  %v1923 = vunpack.c.h.b16 %v1636
  %v1924 = vunpack.c.l.b16 %v1637
  %v1925 = vunpack.c.h.b16 %v1637
  %v1926 = vunpack.c.l.b16 %v1638
  %v1927 = vunpack.c.h.b16 %v1638
  %v1928 = vunpack.c.l.b16 %v1639
  %v1929 = vunpack.c.h.b16 %v1639
  %v1930 = vunpack.c.l.b16 %v1640
  %v1931 = vunpack.c.h.b16 %v1640
  %v1932 = vunpack.c.l.b16 %v1641
  %v1933 = vunpack.c.h.b16 %v1641
  %v1934 = vunpack.c.l.b16 %v1642
  %v1935 = vunpack.c.h.b16 %v1642
  %v1936 = vunpack.c.l.b16 %v1643
  %v1937 = vunpack.c.h.b16 %v1643
  %v1938 = vunpack.c.l.b16 %v1644
  %v1939 = vunpack.c.h.b16 %v1644
  %v1940 = vunpack.c.l.b16 %v1645
  %v1941 = vunpack.c.h.b16 %v1645
  %v1942 = vunpack.c.l.b16 %v1646
  %v1943 = vunpack.c.h.b16 %v1646
  %v1944 = vunpack.c.l.b16 %v1647
  %v1945 = vunpack.c.h.b16 %v1647
  %v1946 = vunpack.c.l.b16 %v1648
  %v1947 = vunpack.c.h.b16 %v1648
  %v1948 = vunpack.c.l.b16 %v1649
  %v1949 = vunpack.c.h.b16 %v1649
  %v1950 = vunpack.c.l.b16 %v1650
  %v1951 = vunpack.c.h.b16 %v1650
  %v1952 = vunpack.c.l.b16 %v1651
  %v1953 = vunpack.c.h.b16 %v1651
  %v1954 = vunpack.c.l.b16 %v1652
  %v1955 = vunpack.c.h.b16 %v1652
  %v1956 = vunpack.c.l.b16 %v1653
  %v1957 = vunpack.c.h.b16 %v1653
  %v1958 = vunpack.c.l.b16 %v1654
  %v1959 = vunpack.c.h.b16 %v1654
  %v1960 = vunpack.c.l.b16 %v1655
  %v1961 = vunpack.c.h.b16 %v1655
  %v1962 = vunpack.c.l.b16 %v1656
  %v1963 = vunpack.c.h.b16 %v1656
  %v1964 = vunpack.c.l.b16 %v1657
  %v1965 = vunpack.c.h.b16 %v1657
  %v1966 = vunpack.c.l.b16 %v1658
  %v1967 = vunpack.c.h.b16 %v1658
  %v1968 = vunpack.c.l.b16 %v1659
  %v1969 = vunpack.c.h.b16 %v1659
  %v1970 = vunpack.c.l.b16 %v1660
  %v1971 = vunpack.c.h.b16 %v1660
  %v1972 = vunpack.c.l.b16 %v1661
  %v1973 = vunpack.c.h.b16 %v1661
  %v1974 = vunpack.c.l.b16 %v1662
  %v1975 = vunpack.c.h.b16 %v1662
  %v1976 = vunpack.c.l.b16 %v1663
  %v1977 = vunpack.c.h.b16 %v1663
  %v1978 = vunpack.c.l.b16 %v1664
  %v1979 = vunpack.c.h.b16 %v1664
  %v1980 = vunpack.c.l.b16 %v1665
  %v1981 = vunpack.c.h.b16 %v1665
  %v1982 = vunpack.c.l.b16 %v1666
  %v1983 = vunpack.c.h.b16 %v1666
  %v1984 = vunpack.c.l.b16 %v1667
  %v1985 = vunpack.c.h.b16 %v1667
  %v1986 = vunpack.c.l.b16 %v1668
  %v1987 = vunpack.c.h.b16 %v1668
  %v1988 = vunpack.c.l.b16 %v1669
  %v1989 = vunpack.c.h.b16 %v1669
  %v1990 = vunpack.c.l.b16 %v1670
  %v1991 = vunpack.c.h.b16 %v1670
  %v1992 = vunpack.c.l.b16 %v1671
  %v1993 = vunpack.c.h.b16 %v1671
  %v1994 = vunpack.c.l.b16 %v1672
  %v1995 = vunpack.c.h.b16 %v1672
  %v1996 = vunpack.c.l.b16 %v1673
  %v1997 = vunpack.c.h.b16 %v1673
  %v1998 = vunpack.c.l.b16 %v1674
  %v1999 = vunpack.c.h.b16 %v1674
  %v2000 = vunpack.c.l.b16 %v1675
  %v2001 = vunpack.c.h.b16 %v1675
  %v2002 = vunpack.c.l.b16 %v1676
  %v2003 = vunpack.c.h.b16 %v1676
  %v2004 = vunpack.c.l.b16 %v1677
  %v2005 = vunpack.c.h.b16 %v1677
  %v2006 = vunpack.c.l.b16 %v1678
  %v2007 = vunpack.c.h.b16 %v1678
  %v2008 = vunpack.c.l.b16 %v1679
  %v2009 = vunpack.c.h.b16 %v1679
  %v2010 = vunpack.c.l.b16 %v1680
  %v2011 = vunpack.c.h.b16 %v1680
  %v2012 = vunpack.c.l.b16 %v1681
  %v2013 = vunpack.c.h.b16 %v1681
  %v2014 = vunpack.c.l.b16 %v1682
  %v2015 = vunpack.c.h.b16 %v1682
  %v2016 = vunpack.c.l.b16 %v1683
  %v2017 = vunpack.c.h.b16 %v1683
  %v2018 = vunpack.c.l.b16 %v1684
  %v2019 = vunpack.c.h.b16 %v1684
  %v2020 = vunpack.c.l.b16 %v1685
  %v2021 = vunpack.c.h.b16 %v1685
  %v2022 = vunpack.c.l.b16 %v1686
  %v2023 = vunpack.c.h.b16 %v1686
  %v2024 = vunpack.c.l.b16 %v1687
  %v2025 = vunpack.c.h.b16 %v1687
  %v2026 = vunpack.c.l.b16 %v1688
  %v2027 = vunpack.c.h.b16 %v1688
  %v2028 = vunpack.c.l.b16 %v1689
  %v2029 = vunpack.c.h.b16 %v1689
  %v2030 = vunpack.c.l.b16 %v1690
  %v2031 = vunpack.c.h.b16 %v1690
  %v2032 = vunpack.c.l.b16 %v1691
  %v2033 = vunpack.c.h.b16 %v1691
  %v2034 = vunpack.c.l.b16 %v1692
  %v2035 = vunpack.c.h.b16 %v1692
  %v2036 = vunpack.c.l.b16 %v1693
  %v2037 = vunpack.c.h.b16 %v1693
  %v2038 = vunpack.c.l.b16 %v1694
  %v2039 = vunpack.c.h.b16 %v1694
  %v2040 = vunpack.c.l.b16 %v1695
  %v2041 = vunpack.c.h.b16 %v1695
  %v2042 = vunpack.c.l.b16 %v1696
  %v2043 = vunpack.c.h.b16 %v1696
  %v2044 = vunpack.c.l.b16 %v1697
  %v2045 = vunpack.c.h.b16 %v1697
  %v2046 = vunpack.c.l.b16 %v1698
  %v2047 = vunpack.c.h.b16 %v1698
  %v2048 = vunpack.c.l.b16 %v1699
  %v2049 = vunpack.c.h.b16 %v1699
  %v2050 = vunpack.c.l.b16 %v1700
  %v2051 = vunpack.c.h.b16 %v1700
  %v2052 = vunpack.c.l.b16 %v1701
  %v2053 = vunpack.c.h.b16 %v1701
  %v2054 = vunpack.c.l.b16 %v1702
  %v2055 = vunpack.c.h.b16 %v1702
  %v2056 = vunpack.c.l.b16 %v1703
  %v2057 = vunpack.c.h.b16 %v1703
  %v2058 = vunpack.c.l.b16 %v1704
  %v2059 = vunpack.c.h.b16 %v1704
  %v2060 = vunpack.c.l.b16 %v1705
  %v2061 = vunpack.c.h.b16 %v1705
  %v2062 = vunpack.c.l.b16 %v1706
  %v2063 = vunpack.c.h.b16 %v1706
  %v2064 = vunpack.c.l.b16 %v1707
  %v2065 = vunpack.c.h.b16 %v1707
  %v2066 = vunpack.c.l.b16 %v1708
  %v2067 = vunpack.c.h.b16 %v1708
  %v2068 = vunpack.c.l.b16 %v1709
  %v2069 = vunpack.c.h.b16 %v1709
  %v2070 = vunpack.c.l.b16 %v1710
  %v2071 = vunpack.c.h.b16 %v1710
  %v2072 = vunpack.c.l.b16 %v1711
  %v2073 = vunpack.c.h.b16 %v1711
  %v2074 = vunpack.c.l.b16 %v1712
  %v2075 = vunpack.c.h.b16 %v1712
  %v2076 = vunpack.c.l.b16 %v1713
  %v2077 = vunpack.c.h.b16 %v1713
  %v2078 = vunpack.c.l.b16 %v1714
  %v2079 = vunpack.c.h.b16 %v1714
  %v2080 = vunpack.c.l.b16 %v1715
  %v2081 = vunpack.c.h.b16 %v1715
  %v2082 = vunpack.c.l.b16 %v1716
  %v2083 = vunpack.c.h.b16 %v1716
  %v2084 = vunpack.c.l.b16 %v1717
  %v2085 = vunpack.c.h.b16 %v1717
  %v2086 = vunpack.c.l.b16 %v1718
  %v2087 = vunpack.c.h.b16 %v1718
  %v2088 = vunpack.c.l.b16 %v1719
  %v2089 = vunpack.c.h.b16 %v1719
  %v2090 = vunpack.c.l.b16 %v1720
  %v2091 = vunpack.c.h.b16 %v1720
  %v2092 = vunpack.c.l.b16 %v1721
  %v2093 = vunpack.c.h.b16 %v1721
  %v2094 = vunpack.c.l.b16 %v1722
  %v2095 = vunpack.c.h.b16 %v1722
  %v2096 = vunpack.c.l.b16 %v1723
  %v2097 = vunpack.c.h.b16 %v1723
  %v2098 = vunpack.c.l.b16 %v1724
  %v2099 = vunpack.c.h.b16 %v1724
  %v2100 = vunpack.c.l.b16 %v1725
  %v2101 = vunpack.c.h.b16 %v1725
  %v2102 = vunpack.c.l.b16 %v1726
  %v2103 = vunpack.c.h.b16 %v1726
  %v2104 = vunpack.c.l.b16 %v1727
  %v2105 = vunpack.c.h.b16 %v1727
  %v2106 = vunpack.c.l.b16 %v1728
  %v2107 = vunpack.c.h.b16 %v1728
  %v2108 = vunpack.c.l.b16 %v1729
  %v2109 = vunpack.c.h.b16 %v1729
  %v2110 = vunpack.c.l.b16 %v1730
  %v2111 = vunpack.c.h.b16 %v1730
  %v2112 = vunpack.c.l.b16 %v1731
  %v2113 = vunpack.c.h.b16 %v1731
  %v2114 = vunpack.c.l.b16 %v1732
  %v2115 = vunpack.c.h.b16 %v1732
  %v2116 = vunpack.c.l.b16 %v1733
  %v2117 = vunpack.c.h.b16 %v1733
  %v2118 = vunpack.c.l.b16 %v1734
  %v2119 = vunpack.c.h.b16 %v1734
  %v2120 = vunpack.c.l.b16 %v1735
  %v2121 = vunpack.c.h.b16 %v1735
  %v2122 = vunpack.c.l.b16 %v1736
  %v2123 = vunpack.c.h.b16 %v1736
  %v2124 = vunpack.c.l.b16 %v1737
  %v2125 = vunpack.c.h.b16 %v1737
  %v2126 = vunpack.c.l.b16 %v1738
  %v2127 = vunpack.c.h.b16 %v1738
  %v2128 = vunpack.c.l.b16 %v1739
  %v2129 = vunpack.c.h.b16 %v1739
  %v2130 = vunpack.c.l.b16 %v1740
  %v2131 = vunpack.c.h.b16 %v1740
  %v2132 = vunpack.c.l.b16 %v1741
  %v2133 = vunpack.c.h.b16 %v1741
  %v2134 = vunpack.c.l.b16 %v1742
  %v2135 = vunpack.c.h.b16 %v1742
  %v2136 = vunpack.c.l.b16 %v1743
  %v2137 = vunpack.c.h.b16 %v1743
  %v2138 = vunpack.c.l.b16 %v1744
  %v2139 = vunpack.c.h.b16 %v1744
  %v2140 = vunpack.c.l.b16 %v1745
  %v2141 = vunpack.c.h.b16 %v1745
  %v2142 = vpack.c.b16 %v1888, %v1886
  %v2143 = vpack.c.b16 %v1889, %v1887
  %v2144 = vpack.c.b16 %v1892, %v1890
  %v2145 = vpack.c.b16 %v1893, %v1891
  %v2146 = vpack.c.b16 %v1896, %v1894
  %v2147 = vpack.c.b16 %v1897, %v1895
  %v2148 = vpack.c.b16 %v1900, %v1898
  %v2149 = vpack.c.b16 %v1901, %v1899
  %v2150 = vpack.c.b16 %v1904, %v1902
  %v2151 = vpack.c.b16 %v1905, %v1903
  %v2152 = vpack.c.b16 %v1908, %v1906
  %v2153 = vpack.c.b16 %v1909, %v1907
  %v2154 = vpack.c.b16 %v1912, %v1910
  %v2155 = vpack.c.b16 %v1913, %v1911
  %v2156 = vpack.c.b16 %v1916, %v1914
  %v2157 = vpack.c.b16 %v1917, %v1915
  %v2158 = vpack.c.b16 %v1920, %v1918
  %v2159 = vpack.c.b16 %v1921, %v1919
  %v2160 = vpack.c.b16 %v1924, %v1922
  %v2161 = vpack.c.b16 %v1925, %v1923
  %v2162 = vpack.c.b16 %v1928, %v1926
  %v2163 = vpack.c.b16 %v1929, %v1927
  %v2164 = vpack.c.b16 %v1932, %v1930
  %v2165 = vpack.c.b16 %v1933, %v1931
  %v2166 = vpack.c.b16 %v1936, %v1934
  %v2167 = vpack.c.b16 %v1937, %v1935
  %v2168 = vpack.c.b16 %v1940, %v1938
  %v2169 = vpack.c.b16 %v1941, %v1939
  %v2170 = vpack.c.b16 %v1944, %v1942
  %v2171 = vpack.c.b16 %v1945, %v1943
  %v2172 = vpack.c.b16 %v1948, %v1946
  %v2173 = vpack.c.b16 %v1949, %v1947
  %v2174 = vpack.c.b16 %v1952, %v1950
  %v2175 = vpack.c.b16 %v1953, %v1951
  %v2176 = vpack.c.b16 %v1956, %v1954
  %v2177 = vpack.c.b16 %v1957, %v1955
  %v2178 = vpack.c.b16 %v1960, %v1958
  %v2179 = vpack.c.b16 %v1961, %v1959
  %v2180 = vpack.c.b16 %v1964, %v1962
  %v2181 = vpack.c.b16 %v1965, %v1963
  %v2182 = vpack.c.b16 %v1968, %v1966
  %v2183 = vpack.c.b16 %v1969, %v1967
  %v2184 = vpack.c.b16 %v1972, %v1970
  %v2185 = vpack.c.b16 %v1973, %v1971
  %v2186 = vpack.c.b16 %v1976, %v1974
  %v2187 = vpack.c.b16 %v1977, %v1975
  %v2188 = vpack.c.b16 %v1980, %v1978
  %v2189 = vpack.c.b16 %v1981, %v1979
  %v2190 = vpack.c.b16 %v1984, %v1982
  %v2191 = vpack.c.b16 %v1985, %v1983
  %v2192 = vpack.c.b16 %v1988, %v1986
  %v2193 = vpack.c.b16 %v1989, %v1987
  %v2194 = vpack.c.b16 %v1992, %v1990
  %v2195 = vpack.c.b16 %v1993, %v1991
  %v2196 = vpack.c.b16 %v1996, %v1994
  %v2197 = vpack.c.b16 %v1997, %v1995
  %v2198 = vpack.c.b16 %v2000, %v1998
  %v2199 = vpack.c.b16 %v2001, %v1999
  %v2200 = vpack.c.b16 %v2004, %v2002
  %v2201 = vpack.c.b16 %v2005, %v2003
  %v2202 = vpack.c.b16 %v2008, %v2006
  %v2203 = vpack.c.b16 %v2009, %v2007
  %v2204 = vpack.c.b16 %v2012, %v2010
  %v2205 = vpack.c.b16 %v2013, %v2011
  %v2206 = vpack.c.b16 %v2016, %v2014
  %v2207 = vpack.c.b16 %v2017, %v2015
  %v2208 = vpack.c.b16 %v2020, %v2018
  %v2209 = vpack.c.b16 %v2021, %v2019
  %v2210 = vpack.c.b16 %v2024, %v2022
  %v2211 = vpack.c.b16 %v2025, %v2023
  %v2212 = vpack.c.b16 %v2028, %v2026
  %v2213 = vpack.c.b16 %v2029, %v2027
  %v2214 = vpack.c.b16 %v2032, %v2030
  %v2215 = vpack.c.b16 %v2033, %v2031
  %v2216 = vpack.c.b16 %v2036, %v2034
  %v2217 = vpack.c.b16 %v2037, %v2035
  %v2218 = vpack.c.b16 %v2040, %v2038
  %v2219 = vpack.c.b16 %v2041, %v2039
  %v2220 = vpack.c.b16 %v2044, %v2042
  %v2221 = vpack.c.b16 %v2045, %v2043
  %v2222 = vpack.c.b16 %v2048, %v2046
  %v2223 = vpack.c.b16 %v2049, %v2047
  %v2224 = vpack.c.b16 %v2052, %v2050
  %v2225 = vpack.c.b16 %v2053, %v2051
  %v2226 = vpack.c.b16 %v2056, %v2054
  %v2227 = vpack.c.b16 %v2057, %v2055
  %v2228 = vpack.c.b16 %v2060, %v2058
  %v2229 = vpack.c.b16 %v2061, %v2059
  %v2230 = vpack.c.b16 %v2064, %v2062
  %v2231 = vpack.c.b16 %v2065, %v2063
  %v2232 = vpack.c.b16 %v2068, %v2066
  %v2233 = vpack.c.b16 %v2069, %v2067
  %v2234 = vpack.c.b16 %v2072, %v2070
  %v2235 = vpack.c.b16 %v2073, %v2071
  %v2236 = vpack.c.b16 %v2076, %v2074
  %v2237 = vpack.c.b16 %v2077, %v2075
  %v2238 = vpack.c.b16 %v2080, %v2078
  %v2239 = vpack.c.b16 %v2081, %v2079
  %v2240 = vpack.c.b16 %v2084, %v2082
  %v2241 = vpack.c.b16 %v2085, %v2083
  %v2242 = vpack.c.b16 %v2088, %v2086
  %v2243 = vpack.c.b16 %v2089, %v2087
  %v2244 = vpack.c.b16 %v2092, %v2090
  %v2245 = vpack.c.b16 %v2093, %v2091
  %v2246 = vpack.c.b16 %v2096, %v2094
  %v2247 = vpack.c.b16 %v2097, %v2095
  %v2248 = vpack.c.b16 %v2100, %v2098
  %v2249 = vpack.c.b16 %v2101, %v2099
  %v2250 = vpack.c.b16 %v2104, %v2102
  %v2251 = vpack.c.b16 %v2105, %v2103
  %v2252 = vpack.c.b16 %v2108, %v2106
  %v2253 = vpack.c.b16 %v2109, %v2107
  %v2254 = vpack.c.b16 %v2112, %v2110
  %v2255 = vpack.c.b16 %v2113, %v2111
  %v2256 = vpack.c.b16 %v2116, %v2114
  %v2257 = vpack.c.b16 %v2117, %v2115
  %v2258 = vpack.c.b16 %v2120, %v2118
  %v2259 = vpack.c.b16 %v2121, %v2119
  %v2260 = vpack.c.b16 %v2124, %v2122
  %v2261 = vpack.c.b16 %v2125, %v2123
  %v2262 = vpack.c.b16 %v2128, %v2126
  %v2263 = vpack.c.b16 %v2129, %v2127
  %v2264 = vpack.c.b16 %v2132, %v2130
  %v2265 = vpack.c.b16 %v2133, %v2131
  %v2266 = vpack.c.b16 %v2136, %v2134
  %v2267 = vpack.c.b16 %v2137, %v2135
  %v2268 = vpack.c.b16 %v2140, %v2138
  %v2269 = vpack.c.b16 %v2141, %v2139
  %2398 = vmatprep.subr.bf16.mxu0 %v2143
  %2399 = vmatpush1.bf16.msra.mxu0 %v2142
  %2400 = vmatprep.subr.bf16.mxu0 %v2145
  %2401 = vmatpush1.bf16.msra.mxu0 %v2144
  %2402 = vmatprep.subr.bf16.mxu0 %v2147
  %2403 = vmatpush1.bf16.msra.mxu0 %v2146
  %2404 = vmatprep.subr.bf16.mxu0 %v2149
  %2405 = vmatpush1.bf16.msra.mxu0 %v2148
  %2406 = vmatprep.subr.bf16.mxu0 %v2151
  %2407 = vmatpush1.bf16.msra.mxu0 %v2150
  %2408 = vmatprep.subr.bf16.mxu0 %v2153
  %2409 = vmatpush1.bf16.msra.mxu0 %v2152
  %2410 = vmatprep.subr.bf16.mxu0 %v2155
  %2411 = vmatpush1.bf16.msra.mxu0 %v2154
  %2412 = vmatprep.subr.bf16.mxu0 %v2157
  %2413 = vmatpush1.bf16.msra.mxu0 %v2156
  %2414 = vmatprep.subr.bf16.mxu0 %v2159
  %2415 = vmatpush1.bf16.msra.mxu0 %v2158
  %2416 = vmatprep.subr.bf16.mxu0 %v2161
  %2417 = vmatpush1.bf16.msra.mxu0 %v2160
  %2418 = vmatprep.subr.bf16.mxu0 %v2163
  %2419 = vmatpush1.bf16.msra.mxu0 %v2162
  %2420 = vmatprep.subr.bf16.mxu0 %v2165
  %2421 = vmatpush1.bf16.msra.mxu0 %v2164
  %2422 = vmatprep.subr.bf16.mxu0 %v2167
  %2423 = vmatpush1.bf16.msra.mxu0 %v2166
  %2424 = vmatprep.subr.bf16.mxu0 %v2169
  %2425 = vmatpush1.bf16.msra.mxu0 %v2168
  %2426 = vmatprep.subr.bf16.mxu0 %v2171
  %2427 = vmatpush1.bf16.msra.mxu0 %v2170
  %2428 = vmatprep.subr.bf16.mxu0 %v2173
  %2429 = vmatpush1.bf16.msra.mxu0 %v2172
  %2430 = vmatprep.mubr.bf16.mxu0 %v1595
  %2431 = vmatmul.mubr.bf16.gmra.mrb[0].mxu0 %v1594
  %v2432 = vpop.f32.mrb[0].mxu0
  %v2433 = vadd.f32 %v1751, %v2432
  %v2434 = vpop.f32.mrb[0].mxu0
  %v2435 = vadd.f32 %v1755, %v2434
  %v2436 = vpop.f32.mrb[0].mxu0
  %v2437 = vadd.f32 %v1751, %v2436
  %v2438 = vpop.f32.mrb[0].mxu0
  %v2439 = vadd.f32 %v1755, %v2438
  %2440 = vmatprep.mubr.bf16.mxu0 %v1603
  %2441 = vmatmul.mubr.bf16.gmra.mrb[0].mxu0 %v1602
  %v2442 = vpop.f32.mrb[0].mxu0
  %v2443 = vadd.f32 %v1751, %v2442
  %v2444 = vpop.f32.mrb[0].mxu0
  %v2445 = vadd.f32 %v1755, %v2444
  %v2446 = vpop.f32.mrb[0].mxu0
  %v2447 = vadd.f32 %v1751, %v2446
  %v2448 = vpop.f32.mrb[0].mxu0
  %v2449 = vadd.f32 %v1755, %v2448
  %2450 = vmatprep.mubr.bf16.mxu0 %v1611
  %2451 = vmatmul.mubr.bf16.gmra.mrb[0].mxu0 %v1610
  %v2452 = vpop.f32.mrb[0].mxu0
  %v2453 = vadd.f32 %v1751, %v2452
  %v2454 = vpop.f32.mrb[0].mxu0
  %v2455 = vadd.f32 %v1755, %v2454
  %v2456 = vpop.f32.mrb[0].mxu0
  %v2457 = vpop.f32.mrb[0].mxu0
  %2458 = vdwg.mxu0
  %2459 = vmatprep.subr.bf16.mxu0 %v2175
  %2460 = vmatpush1.bf16.msra.mxu0 %v2174
  %2461 = vmatprep.subr.bf16.mxu0 %v2177
  %2462 = vmatpush1.bf16.msra.mxu0 %v2176
  %2463 = vmatprep.subr.bf16.mxu0 %v2179
  %2464 = vmatpush1.bf16.msra.mxu0 %v2178
  %2465 = vmatprep.subr.bf16.mxu0 %v2181
  %2466 = vmatpush1.bf16.msra.mxu0 %v2180
  %2467 = vmatprep.subr.bf16.mxu0 %v2183
  %2468 = vmatpush1.bf16.msra.mxu0 %v2182
  %2469 = vmatprep.subr.bf16.mxu0 %v2185
  %2470 = vmatpush1.bf16.msra.mxu0 %v2184
  %2471 = vmatprep.subr.bf16.mxu0 %v2187
  %2472 = vmatpush1.bf16.msra.mxu0 %v2186
  %2473 = vmatprep.subr.bf16.mxu0 %v2189
  %2474 = vmatpush1.bf16.msra.mxu0 %v2188
  %2475 = vmatprep.subr.bf16.mxu0 %v2191
  %2476 = vmatpush1.bf16.msra.mxu0 %v2190
  %2477 = vmatprep.subr.bf16.mxu0 %v2193
  %2478 = vmatpush1.bf16.msra.mxu0 %v2192
  %2479 = vmatprep.subr.bf16.mxu0 %v2195
  %2480 = vmatpush1.bf16.msra.mxu0 %v2194
  %2481 = vmatprep.subr.bf16.mxu0 %v2197
  %2482 = vmatpush1.bf16.msra.mxu0 %v2196
  %2483 = vmatprep.subr.bf16.mxu0 %v2199
  %2484 = vmatpush1.bf16.msra.mxu0 %v2198
  %2485 = vmatprep.subr.bf16.mxu0 %v2201
  %2486 = vmatpush1.bf16.msra.mxu0 %v2200
  %2487 = vmatprep.subr.bf16.mxu0 %v2203
  %2488 = vmatpush1.bf16.msra.mxu0 %v2202
  %2489 = vmatprep.subr.bf16.mxu0 %v2205
  %2490 = vmatpush1.bf16.msra.mxu0 %v2204
  %2491 = vmatprep.mubr.bf16.mxu0 %v1597
  %2492 = vmatmul.mubr.bf16.gmra.mrb[0].mxu0 %v1596
  %v2493 = vpop.f32.mrb[0].mxu0
  %v2494 = vadd.f32 %v2433, %v2493
  %v2495 = vpop.f32.mrb[0].mxu0
  %v2496 = vadd.f32 %v2435, %v2495
  %v2497 = vpop.f32.mrb[0].mxu0
  %v2498 = vadd.f32 %v2437, %v2497
  %v2499 = vpop.f32.mrb[0].mxu0
  %v2500 = vadd.f32 %v2439, %v2499
  %2501 = vmatprep.mubr.bf16.mxu0 %v1605
  %2502 = vmatmul.mubr.bf16.gmra.mrb[0].mxu0 %v1604
  %v2503 = vpop.f32.mrb[0].mxu0
  %v2504 = vadd.f32 %v2443, %v2503
  %v2505 = vpop.f32.mrb[0].mxu0
  %v2506 = vadd.f32 %v2445, %v2505
  %v2507 = vpop.f32.mrb[0].mxu0
  %v2508 = vadd.f32 %v2447, %v2507
  %v2509 = vpop.f32.mrb[0].mxu0
  %v2510 = vadd.f32 %v2449, %v2509
  %2511 = vmatprep.mubr.bf16.mxu0 %v1613
  %2512 = vmatmul.mubr.bf16.gmra.mrb[0].mxu0 %v1612
  %v2513 = vpop.f32.mrb[0].mxu0
  %v2514 = vadd.f32 %v2453, %v2513
  %v2515 = vpop.f32.mrb[0].mxu0
  %v2516 = vadd.f32 %v2455, %v2515
  %v2517 = vpop.f32.mrb[0].mxu0
  %v2518 = vpop.f32.mrb[0].mxu0
  %2519 = vdwg.mxu0
  %2520 = vmatprep.subr.bf16.mxu0 %v2207
  %2521 = vmatpush1.bf16.msra.mxu0 %v2206
  %2522 = vmatprep.subr.bf16.mxu0 %v2209
  %2523 = vmatpush1.bf16.msra.mxu0 %v2208
  %2524 = vmatprep.subr.bf16.mxu0 %v2211
  %2525 = vmatpush1.bf16.msra.mxu0 %v2210
  %2526 = vmatprep.subr.bf16.mxu0 %v2213
  %2527 = vmatpush1.bf16.msra.mxu0 %v2212
  %2528 = vmatprep.subr.bf16.mxu0 %v2215
  %2529 = vmatpush1.bf16.msra.mxu0 %v2214
  %2530 = vmatprep.subr.bf16.mxu0 %v2217
  %2531 = vmatpush1.bf16.msra.mxu0 %v2216
  %2532 = vmatprep.subr.bf16.mxu0 %v2219
  %2533 = vmatpush1.bf16.msra.mxu0 %v2218
  %2534 = vmatprep.subr.bf16.mxu0 %v2221
  %2535 = vmatpush1.bf16.msra.mxu0 %v2220
  %2536 = vmatprep.subr.bf16.mxu0 %v2223
  %2537 = vmatpush1.bf16.msra.mxu0 %v2222
  %2538 = vmatprep.subr.bf16.mxu0 %v2225
  %2539 = vmatpush1.bf16.msra.mxu0 %v2224
  %2540 = vmatprep.subr.bf16.mxu0 %v2227
  %2541 = vmatpush1.bf16.msra.mxu0 %v2226
  %2542 = vmatprep.subr.bf16.mxu0 %v2229
  %2543 = vmatpush1.bf16.msra.mxu0 %v2228
  %2544 = vmatprep.subr.bf16.mxu0 %v2231
  %2545 = vmatpush1.bf16.msra.mxu0 %v2230
  %2546 = vmatprep.subr.bf16.mxu0 %v2233
  %2547 = vmatpush1.bf16.msra.mxu0 %v2232
  %2548 = vmatprep.subr.bf16.mxu0 %v2235
  %2549 = vmatpush1.bf16.msra.mxu0 %v2234
  %2550 = vmatprep.subr.bf16.mxu0 %v2237
  %2551 = vmatpush1.bf16.msra.mxu0 %v2236
  %2552 = vmatprep.mubr.bf16.mxu0 %v1599
  %2553 = vmatmul.mubr.bf16.gmra.mrb[0].mxu0 %v1598
  %v2554 = vpop.f32.mrb[0].mxu0
  %v2555 = vadd.f32 %v2494, %v2554
  %v2556 = vpop.f32.mrb[0].mxu0
  %v2557 = vadd.f32 %v2496, %v2556
  %v2558 = vpop.f32.mrb[0].mxu0
  %v2559 = vadd.f32 %v2498, %v2558
  %v2560 = vpop.f32.mrb[0].mxu0
  %v2561 = vadd.f32 %v2500, %v2560
  %2562 = vmatprep.mubr.bf16.mxu0 %v1607
  %2563 = vmatmul.mubr.bf16.gmra.mrb[0].mxu0 %v1606
  %v2564 = vpop.f32.mrb[0].mxu0
  %v2565 = vadd.f32 %v2504, %v2564
  %v2566 = vpop.f32.mrb[0].mxu0
  %v2567 = vadd.f32 %v2506, %v2566
  %v2568 = vpop.f32.mrb[0].mxu0
  %v2569 = vadd.f32 %v2508, %v2568
  %v2570 = vpop.f32.mrb[0].mxu0
  %v2571 = vadd.f32 %v2510, %v2570
  %2572 = vmatprep.mubr.bf16.mxu0 %v1615
  %2573 = vmatmul.mubr.bf16.gmra.mrb[0].mxu0 %v1614
  %v2574 = vpop.f32.mrb[0].mxu0
  %v2575 = vadd.f32 %v2514, %v2574
  %v2576 = vpop.f32.mrb[0].mxu0
  %v2577 = vadd.f32 %v2516, %v2576
  %v2578 = vpop.f32.mrb[0].mxu0
  %v2579 = vpop.f32.mrb[0].mxu0
  %2580 = vdwg.mxu0
  %2581 = vmatprep.subr.bf16.mxu0 %v2239
  %2582 = vmatpush1.bf16.msra.mxu0 %v2238
  %2583 = vmatprep.subr.bf16.mxu0 %v2241
  %2584 = vmatpush1.bf16.msra.mxu0 %v2240
  %2585 = vmatprep.subr.bf16.mxu0 %v2243
  %2586 = vmatpush1.bf16.msra.mxu0 %v2242
  %2587 = vmatprep.subr.bf16.mxu0 %v2245
  %2588 = vmatpush1.bf16.msra.mxu0 %v2244
  %2589 = vmatprep.subr.bf16.mxu0 %v2247
  %2590 = vmatpush1.bf16.msra.mxu0 %v2246
  %2591 = vmatprep.subr.bf16.mxu0 %v2249
  %2592 = vmatpush1.bf16.msra.mxu0 %v2248
  %2593 = vmatprep.subr.bf16.mxu0 %v2251
  %2594 = vmatpush1.bf16.msra.mxu0 %v2250
  %2595 = vmatprep.subr.bf16.mxu0 %v2253
  %2596 = vmatpush1.bf16.msra.mxu0 %v2252
  %2597 = vmatprep.subr.bf16.mxu0 %v2255
  %2598 = vmatpush1.bf16.msra.mxu0 %v2254
  %2599 = vmatprep.subr.bf16.mxu0 %v2257
  %2600 = vmatpush1.bf16.msra.mxu0 %v2256
  %2601 = vmatprep.subr.bf16.mxu0 %v2259
  %2602 = vmatpush1.bf16.msra.mxu0 %v2258
  %2603 = vmatprep.subr.bf16.mxu0 %v2261
  %2604 = vmatpush1.bf16.msra.mxu0 %v2260
  %2605 = vmatprep.subr.bf16.mxu0 %v2263
  %2606 = vmatpush1.bf16.msra.mxu0 %v2262
  %2607 = vmatprep.subr.bf16.mxu0 %v2265
  %2608 = vmatpush1.bf16.msra.mxu0 %v2264
  %2609 = vmatprep.subr.bf16.mxu0 %v2267
  %2610 = vmatpush1.bf16.msra.mxu0 %v2266
  %2611 = vmatprep.subr.bf16.mxu0 %v2269
  %2612 = vmatpush1.bf16.msra.mxu0 %v2268
  %2613 = vmatprep.mubr.bf16.mxu0 %v1601
  %2614 = vmatmul.mubr.bf16.gmra.mrb[0].mxu0 %v1600
  %v2615 = vpop.f32.mrb[0].mxu0
  %v2616 = vadd.f32 %v2555, %v2615
  %v2617 = vpop.f32.mrb[0].mxu0
  %v2618 = vadd.f32 %v2557, %v2617
  %v2619 = vpop.f32.mrb[0].mxu0
  %v2620 = vadd.f32 %v2559, %v2619
  %v2621 = vpop.f32.mrb[0].mxu0
  %v2622 = vadd.f32 %v2561, %v2621
  %2623 = vmatprep.mubr.bf16.mxu0 %v1609
  %2624 = vmatmul.mubr.bf16.gmra.mrb[0].mxu0 %v1608
  %v2625 = vpop.f32.mrb[0].mxu0
  %v2626 = vadd.f32 %v2565, %v2625
  %v2627 = vpop.f32.mrb[0].mxu0
  %v2628 = vadd.f32 %v2567, %v2627
  %v2629 = vpop.f32.mrb[0].mxu0
  %v2630 = vadd.f32 %v2569, %v2629
  %v2631 = vpop.f32.mrb[0].mxu0
  %v2632 = vadd.f32 %v2571, %v2631
  %2633 = vmatprep.mubr.bf16.mxu0 %v1617
  %2634 = vmatmul.mubr.bf16.gmra.mrb[0].mxu0 %v1616
  %v2635 = vpop.f32.mrb[0].mxu0
  %v2636 = vadd.f32 %v2575, %v2635
  %v2637 = vpop.f32.mrb[0].mxu0
  %v2638 = vadd.f32 %v2577, %v2637
  %v2639 = vpop.f32.mrb[0].mxu0
  %v2640 = vpop.f32.mrb[0].mxu0
  %2641 = vdwg.mxu0
  %v2642 = vadd.f32 %v2616, %v34
  %v2643 = vadd.f32 %v2618, %v35
  %v2644 = vadd.f32 %v2620, %v36
  %v2645 = vadd.f32 %v2622, %v37
  %v2646 = vadd.f32 %v2626, %v38
  %v2647 = vadd.f32 %v2628, %v39
  %v2648 = vadd.f32 %v2630, %v40
  %v2649 = vadd.f32 %v2632, %v41
  %v2650 = vadd.f32 %v2636, %v42
  %v2651 = vadd.f32 %v2638, %v43
  %2652 = vst [vmem:[%s9] sm:$0xff] %v2642
  %2653 = vst [vmem:[%s9 + $0x8] sm:$0xff] %v2643
  %2654 = vst [vmem:[%s9 + $0x10] sm:$0xff] %v2644
  %2655 = vst [vmem:[%s9 + $0x18] sm:$0xff] %v2645
  %2656 = vst [vmem:[%s9 + $0x20] sm:$0xff] %v2646
  %2657 = vst [vmem:[%s9 + $0x28] sm:$0xff] %v2647
  %2658 = vst [vmem:[%s9 + $0x30] sm:$0xff] %v2648
  %2659 = vst [vmem:[%s9 + $0x38] sm:$0xff] %v2649
  %2660 = vst [vmem:[%s9 + $0x40] sm:$0x3] %v2650
  %2661 = vst [vmem:[%s9 + $0x48] sm:$0x3] %v2651
  %v2662 = vld [vmem:[%s7] sm:$0x3]
  %v2663 = vld [vmem:[%s8] sm:$0x3]
  %v2664 = vadd.f32 %v2642, %v2643
  %2665 = vadd.xlane.f32.xlu0 %v2664
  %v2666 = vpop.xlane.xlu0 %2665
  %v2667 = vadd.f32 %v2644, %v2645
  %2668 = vadd.xlane.f32.xlu0 %v2667
  %v2669 = vpop.xlane.xlu0 %2668
  %v2670 = vadd.f32 %v2646, %v2647
  %2671 = vadd.xlane.f32.xlu0 %v2670
  %v2672 = vpop.xlane.xlu0 %2671
  %v2673 = vadd.f32 %v2648, %v2649
  %2674 = vadd.xlane.f32.xlu0 %v2673
  %v2675 = vpop.xlane.xlu0 %2674
  %v2676 = vsel %vm58, %v2650, 0.0
  %v2677 = vsel %vm58, %v2651, 0.0
  %v2678 = vadd.f32 %v2676, %v2677
  %2679 = vadd.xlane.f32.xlu0 %v2678
  %v2680 = vpop.xlane.xlu0 %2679
  %v2681 = vmul.f32 %v2666, %v64
  %v2682 = vmul.f32 %v2669, %v64
  %v2683 = vmul.f32 %v2672, %v64
  %v2684 = vmul.f32 %v2675, %v64
  %v2685 = vmul.f32 %v2680, %v64
  %v2686 = vsub.f32 %v2642, %v2681
  %v2687 = vsub.f32 %v2643, %v2681
  %v2688 = vsub.f32 %v2644, %v2682
  %v2689 = vsub.f32 %v2645, %v2682
  %v2690 = vsub.f32 %v2646, %v2683
  %v2691 = vsub.f32 %v2647, %v2683
  %v2692 = vsub.f32 %v2648, %v2684
  %v2693 = vsub.f32 %v2649, %v2684
  %v2694 = vsub.f32 %v2650, %v2685
  %v2695 = vsub.f32 %v2651, %v2685
  %v2696 = vmul.f32 %v2686, %v2686
  %v2697 = vmul.f32 %v2687, %v2687
  %v2698 = vmul.f32 %v2688, %v2688
  %v2699 = vmul.f32 %v2689, %v2689
  %v2700 = vmul.f32 %v2690, %v2690
  %v2701 = vmul.f32 %v2691, %v2691
  %v2702 = vmul.f32 %v2692, %v2692
  %v2703 = vmul.f32 %v2693, %v2693
  %v2704 = vmul.f32 %v2694, %v2694
  %v2705 = vmul.f32 %v2695, %v2695
  %v2706 = vadd.f32 %v2696, %v2697
  %2707 = vadd.xlane.f32.xlu0 %v2706
  %v2708 = vpop.xlane.xlu0 %2707
  %v2709 = vadd.f32 %v2698, %v2699
  %2710 = vadd.xlane.f32.xlu0 %v2709
  %v2711 = vpop.xlane.xlu0 %2710
  %v2712 = vadd.f32 %v2700, %v2701
  %2713 = vadd.xlane.f32.xlu0 %v2712
  %v2714 = vpop.xlane.xlu0 %2713
  %v2715 = vadd.f32 %v2702, %v2703
  %2716 = vadd.xlane.f32.xlu0 %v2715
  %v2717 = vpop.xlane.xlu0 %2716
  %v2718 = vsel %vm58, %v2704, 0.0
  %v2719 = vsel %vm58, %v2705, 0.0
  %v2720 = vadd.f32 %v2718, %v2719
  %2721 = vadd.xlane.f32.xlu0 %v2720
  %v2722 = vpop.xlane.xlu0 %2721
  %v2723 = vmul.f32 %v2708, %v64
  %v2724 = vmul.f32 %v2711, %v64
  %v2725 = vmul.f32 %v2714, %v64
  %v2726 = vmul.f32 %v2717, %v64
  %v2727 = vmul.f32 %v2722, %v64
  %v2728 = vadd.f32 %v2723, 1e-06
  %v2729 = vadd.f32 %v2724, 1e-06
  %v2730 = vadd.f32 %v2725, 1e-06
  %v2731 = vadd.f32 %v2726, 1e-06
  %v2732 = vadd.f32 %v2727, 1e-06
  %v2733 = vrsqrt.pop %v2728
  %v2734 = vrsqrt.pop %v2729
  %v2735 = vrsqrt.pop %v2730
  %v2736 = vrsqrt.pop %v2731
  %v2737 = vrsqrt.pop %v2732
  %v2738 = vmul.f32 %v2686, %v2733
  %v2739 = vmul.f32 %v2687, %v2733
  %v2740 = vmul.f32 %v2688, %v2734
  %v2741 = vmul.f32 %v2689, %v2734
  %v2742 = vmul.f32 %v2690, %v2735
  %v2743 = vmul.f32 %v2691, %v2735
  %v2744 = vmul.f32 %v2692, %v2736
  %v2745 = vmul.f32 %v2693, %v2736
  %v2746 = vmul.f32 %v2694, %v2737
  %v2747 = vmul.f32 %v2695, %v2737
  %v2749 = vlaneseq
  %v2750 = vshrl.u32 %v2749, 7
  %v2751 = vsub.s32 0, %v2750
  %v2752 = vrot.slane %v2662, %v2751
  %v2753 = vlaneseq
  %v2754 = vshrl.u32 %v2753, 7
  %v2755 = vsub.s32 1, %v2754
  %v2756 = vrot.slane %v2662, %v2755
  %v2759 = vmul.f32 %v2738, %v2752
  %v2760 = vmul.f32 %v2739, %v2756
  %v2761 = vmul.f32 %v2740, %v2752
  %v2762 = vmul.f32 %v2741, %v2756
  %v2763 = vmul.f32 %v2742, %v2752
  %v2764 = vmul.f32 %v2743, %v2756
  %v2765 = vmul.f32 %v2744, %v2752
  %v2766 = vmul.f32 %v2745, %v2756
  %v2767 = vmul.f32 %v2746, %v2752
  %v2768 = vmul.f32 %v2747, %v2756
  %v2770 = vlaneseq
  %v2771 = vshrl.u32 %v2770, 7
  %v2772 = vsub.s32 0, %v2771
  %v2773 = vrot.slane %v2663, %v2772
  %v2774 = vlaneseq
  %v2775 = vshrl.u32 %v2774, 7
  %v2776 = vsub.s32 1, %v2775
  %v2777 = vrot.slane %v2663, %v2776
  %v2780 = vadd.f32 %v2759, %v2773
  %v2781 = vadd.f32 %v2760, %v2777
  %v2782 = vadd.f32 %v2761, %v2773
  %v2783 = vadd.f32 %v2762, %v2777
  %v2784 = vadd.f32 %v2763, %v2773
  %v2785 = vadd.f32 %v2764, %v2777
  %v2786 = vadd.f32 %v2765, %v2773
  %v2787 = vadd.f32 %v2766, %v2777
  %v2788 = vadd.f32 %v2767, %v2773
  %v2789 = vadd.f32 %v2768, %v2777
  %2790 = vst [vmem:[%s10] sm:$0xff] %v2780
  %2791 = vst [vmem:[%s10 + $0x8] sm:$0xff] %v2781
  %2792 = vst [vmem:[%s10 + $0x10] sm:$0xff] %v2782
  %2793 = vst [vmem:[%s10 + $0x18] sm:$0xff] %v2783
  %2794 = vst [vmem:[%s10 + $0x20] sm:$0xff] %v2784
  %2795 = vst [vmem:[%s10 + $0x28] sm:$0xff] %v2785
  %2796 = vst [vmem:[%s10 + $0x30] sm:$0xff] %v2786
  %2797 = vst [vmem:[%s10 + $0x38] sm:$0xff] %v2787
  %2798 = vst [vmem:[%s10 + $0x40] sm:$0x3] %v2788
  %2799 = vst [vmem:[%s10 + $0x48] sm:$0x3] %v2789
  // Predicated region
  $region38: #{encoder_forward.21} parent=0 // pred_check
    _
  $region39: #{encoder_forward.21} parent=0 // pred_check_branch
    %2801 = sbr.rel (0) target = $region41
  $region40: #{encoder_forward.21} parent=0 // pred_region
    _
  $region41: #{encoder_forward.21} parent=0 // pred_fallthru
    _
  // Predicated region
  $region42: #{encoder_forward.21} parent=0 // pred_check
    _
  $region43: #{encoder_forward.21} parent=0 // pred_check_branch
    %2803 = sbr.rel (0) target = $region45
  $region44: #{encoder_forward.21} parent=0 // pred_region
    _
  $region45: #{encoder_forward.21} parent=0 // pred_fallthru
    _
  // Predicated region
  $region46: #{encoder_forward.21} parent=0 // pred_check
    _
  $region47: #{encoder_forward.21} parent=0 // pred_check_branch
    %2805 = sbr.rel (0) target = $region49
  $region48: #{encoder_forward.21} parent=0 // pred_region
    _
  $region49: #{encoder_forward.21} parent=0 // pred_fallthru
    _
  // Predicated region
  $region50: #{encoder_forward.21} parent=0 // pred_check
    _
  $region51: #{encoder_forward.21} parent=0 // pred_check_branch
    %2807 = sbr.rel (0) target = $region53
  $region52: #{encoder_forward.21} parent=0 // pred_region
    _
  $region53: #{encoder_forward.21} parent=0 // pred_fallthru
    _

</llo_original>
